<compile_context>
chip_gen: v6e
topology: v6e:2x2x1
jax: 0.10.0
libtpu: 0.0.40
codegen_flags: <defaults>
</compile_context>

<pallas_src>
import functools

import jax
import jax.numpy as jnp
from jax.experimental import pallas as pl
from jax.experimental.pallas import tpu as pltpu

EPS = 1e-5  # nn.LayerNorm default


def make_decoder_layer_kernel(hid_dim: int, n_heads: int, compute_dtype):
    head_dim = hid_dim // n_heads
    inv_scale = 1.0 / (float(head_dim) ** 0.5)

    def cdot(x, w):
        # MXU matmul: operands (optionally) bf16, accumulation always f32.
        return jnp.dot(x.astype(compute_dtype), w,
                       preferred_element_type=jnp.float32)

    def layer_norm(x, g, b):
        mu = jnp.mean(x, axis=-1, keepdims=True)
        xc = x - mu
        var = jnp.mean(xc * xc, axis=-1, keepdims=True)
        return xc * jax.lax.rsqrt(var + EPS) * g + b

    def split_heads(x):
        # (Tx, H) -> (n_heads, Tx, head_dim): static lane slices stacked on a
        # NEW leading axis (no lane-dim reshape of a computed value).
        return jnp.stack(
            [x[:, h * head_dim:(h + 1) * head_dim] for h in range(n_heads)],
            axis=0)

    def merge_heads(x):
        # (n_heads, Tq, head_dim) -> (Tq, H); head-major column order matches
        # the PyTorch permute(0,2,1,3).view(B,-1,H).
        return jnp.concatenate([x[h] for h in range(n_heads)], axis=-1)

    def kernel(src_ref, tgt_kv_ref, tgt_q_ref,
               wq_ref, bq_ref, wkv_ref, bkv_ref, wo_ref,
               wf1_ref, bf1_ref, wf2_ref, vecs_ref,
               out_ref, attn_ref):
        s = src_ref[0]          # (S, H)
        t_kv = tgt_kv_ref[0]    # (T, H)  keys/values for self-attention
        t = tgt_q_ref[0]        # (tq, H) query rows handled by this grid step
        vecs = vecs_ref[...]    # (5, H): bo1, bo2, bf2, gamma, beta
        bo1, bo2, bf2 = vecs[0:1], vecs[1:2], vecs[2:3]
        gamma, beta = vecs[3:4], vecs[4:5]

        def mha(q_in, kv_in, a, bo):
            # Full-width projections (MXU N = H / 2H).
            q = cdot(q_in, wq_ref[a]) + bq_ref[a]          # (Tq, H)
            kv = cdot(kv_in, wkv_ref[a]) + bkv_ref[a]      # (Tk, 2H)
            qh = split_heads(q).astype(compute_dtype)
            kh = split_heads(kv[:, :hid_dim]).astype(compute_dtype)
            vh = split_heads(kv[:, hid_dim:]).astype(compute_dtype)
            # Leading-batch einsums: one MXU stream over all heads.
            e = jnp.einsum('hqe,hke->hqk', qh, kh,
                           preferred_element_type=jnp.float32) * inv_scale
            e = e - jnp.max(e, axis=-1, keepdims=True)
            p = jnp.exp(e)
            attn = p * pl.reciprocal(jnp.sum(p, axis=-1, keepdims=True))
            ctx = jnp.einsum('hqk,hke->hqe', attn.astype(compute_dtype), vh,
                             preferred_element_type=jnp.float32)
            # Single K=H output projection (no per-head matmul + VPU sum).
            out = cdot(merge_heads(ctx), wo_ref[a]) + bo
            return out, attn

        # --- self attention (dropout == identity in eval mode) ---
        _t, _ = mha(t, t_kv, 0, bo1)
        t = layer_norm(t + _t, gamma, beta)

        # --- encoder (cross) attention ---
        _t, attn = mha(t, s, 1, bo2)
        t = layer_norm(t + _t, gamma, beta)

        # --- positionwise feedforward: relu(x W1 + b1) W2 + b2 ---
        h = jnp.maximum(cdot(t, wf1_ref[...]) + bf1_ref[...], 0.0)
        _t = cdot(h, wf2_ref[...]) + bf2
        t = layer_norm(t + _t, gamma, beta)

        out_ref[0] = t.astype(out_ref.dtype)
        attn_ref[0] = attn.astype(attn_ref.dtype)

    return kernel


def _pack_params(params, compute_dtype):
    """Fuse K/V weights to (H,2H), stack attn-1/attn-2, pack tiny vectors."""
    cd = compute_dtype
    wq = jnp.stack([params['wq1'], params['wq2']]).astype(cd)          # (2,H,H)
    bq = jnp.stack([params['bq1'], params['bq2']])                     # (2,1,H)
    wkv = jnp.stack(
        [jnp.concatenate([params['wk1'], params['wv1']], axis=1),
         jnp.concatenate([params['wk2'], params['wv2']], axis=1)]).astype(cd)
    bkv = jnp.stack(
        [jnp.concatenate([params['bk1'], params['bv1']], axis=1),
         jnp.concatenate([params['bk2'], params['bv2']], axis=1)])     # (2,1,2H)
    wo = jnp.stack([params['wo1'], params['wo2']]).astype(cd)          # (2,H,H)
    vecs = jnp.concatenate([params['bo1'], params['bo2'], params['bf2'],
                            params['gamma'], params['beta']], axis=0)  # (5,H)
    return (wq, bq, wkv, bkv, wo,
            params['wf1'].astype(cd), params['bf1'],
            params['wf2'].astype(cd), vecs)


def _padded_bytes(shape, itemsize):
    dims = list(shape)
    if len(dims) >= 2:
        dims[-1] = -(-dims[-1] // 128) * 128
        dims[-2] = -(-dims[-2] // 8) * 8
    elif len(dims) == 1:
        dims[0] = -(-dims[0] // 128) * 128
    n = itemsize
    for d in dims:
        n *= d
    return n


def _vmem_capacity_bytes():
    # Generation-aware VMEM (128 MiB on v5e/v6e, 64 MiB per TC on v7x).
    try:
        cap = getattr(pltpu.get_tpu_info(), 'vmem_capacity_bytes', None)
        if cap:
            return int(cap)
    except Exception:
        pass
    return 64 << 20  # conservative fallback, valid on every generation


def _pick_query_tile(T, S, n_heads, vmem_cap):
    """Largest query tile whose attention-sized live tensors fit ~1/3 of VMEM."""
    budget = vmem_cap // 3
    per_row = 4 * n_heads * max(max(S, T), 128) * 6  # scores/exp/attn + out blk
    max_rows = max(8, budget // per_row)
    if T <= max_rows:
        return T
    for cand in (1024, 512, 256, 128, 64, 32, 16, 8):
        if cand <= max_rows and T % cand == 0:
            return cand
    return T  # full-T block is always a legal BlockSpec


@functools.partial(jax.jit,
                   static_argnames=('n_heads', 'compute_dtype', 'attn_dtype'))
def decoder_layer(source, target, params, *, n_heads,
                  compute_dtype=jnp.float32, attn_dtype=jnp.float32):
    B, S, H = source.shape
    _, T, _ = target.shape
    PF = params['wf1'].shape[1]

    kernel = make_decoder_layer_kernel(H, n_heads, compute_dtype)
    packed = _pack_params(params, compute_dtype)

    vmem_cap = _vmem_capacity_bytes()
    tq = _pick_query_tile(T, S, n_heads, vmem_cap)
    if T % tq != 0:
        tq = T
    nt = T // tq

    def resident(x):  # grid-resident weight block (constant index map)
        nd = x.ndim
        return pl.BlockSpec(x.shape, lambda b, t, _n=nd: (0,) * _n)

    in_specs = ([pl.BlockSpec((1, S, H), lambda b, t: (b, 0, 0)),      # source
                 pl.BlockSpec((1, T, H), lambda b, t: (b, 0, 0)),      # tgt K/V
                 pl.BlockSpec((1, tq, H), lambda b, t: (b, t, 0))]     # tgt Q
                + [resident(x) for x in packed])
    out_specs = [pl.BlockSpec((1, tq, H), lambda b, t: (b, t, 0)),
                 pl.BlockSpec((1, n_heads, tq, S), lambda b, t: (b, 0, t, 0))]

    # VMEM budget: pipeline blocks (x2 buffers) + in-kernel intermediates.
    wb = jnp.dtype(compute_dtype).itemsize
    ab = jnp.dtype(attn_dtype).itemsize
    hd = H // n_heads
    blocks = (2 * sum(_padded_bytes(s, 4) for s in
                      [(1, S, H), (1, T, H), (1, tq, H), (1, tq, H)])
              + 2 * _padded_bytes((1, n_heads, tq, S), ab)
              + 2 * sum(_padded_bytes(s, wb) for s in
                        [(2, H, H), (2, H, 2 * H), (2, H, H), (H, PF), (PF, H)])
              + 2 * sum(_padded_bytes(s, 4) for s in
                        [(2, 1, H), (2, 1, 2 * H), (1, PF), (5, H)]))
    inter = (3 * _padded_bytes((n_heads, tq, max(S, T)), 4)   # e / p / attn
             + _padded_bytes((max(S, T), 2 * H), 4)           # fused KV
             + 3 * _padded_bytes((n_heads, tq, hd), 4)        # qh / ctx
             + 2 * _padded_bytes((n_heads, max(S, T), hd), 4) # kh / vh
             + _padded_bytes((tq, PF), 4)                     # FFN hidden
             + 4 * _padded_bytes((tq, H), 4))                 # q / residuals
    vmem_limit = int(min(int(0.85 * vmem_cap),
                         max(32 << 20, 2 * (blocks + inter))))

    out, attn = pl.pallas_call(
        kernel,
        out_shape=(jax.ShapeDtypeStruct((B, T, H), jnp.float32),
                   jax.ShapeDtypeStruct((B, n_heads, T, S), attn_dtype)),
        grid_spec=pltpu.PrefetchScalarGridSpec(
            num_scalar_prefetch=0,
            grid=(B, nt),
            in_specs=in_specs,
            out_specs=out_specs),
        compiler_params=pltpu.CompilerParams(
            dimension_semantics=("parallel", "parallel"),
            vmem_limit_bytes=vmem_limit),
    )(source, target, target, *packed)
    return out, attn


# ---------------- pure-JAX reference (for correctness check) ----------------
def ref_decoder_layer(source, target, params, n_heads):
    H = target.shape[-1]
    hd = H // n_heads
    scale = float(hd) ** 0.5

    def ln(x):
        mu = x.mean(-1, keepdims=True)
        var = ((x - mu) ** 2).mean(-1, keepdims=True)
        return (x - mu) / jnp.sqrt(var + EPS) * params['gamma'][0] + params['beta'][0]

    def mha(qi, kvi, tag):
        Q = qi @ params['wq' + tag] + params['bq' + tag][0]
        K = kvi @ params['wk' + tag] + params['bk' + tag][0]
        V = kvi @ params['wv' + tag] + params['bv' + tag][0]
        Qh = Q.reshape(Q.shape[0], n_heads, hd).transpose(1, 0, 2)
        Kh = K.reshape(K.shape[0], n_heads, hd).transpose(1, 0, 2)
        Vh = V.reshape(V.shape[0], n_heads, hd).transpose(1, 0, 2)
        e = jnp.einsum('hqd,hkd->hqk', Qh, Kh) / scale
        a = jax.nn.softmax(e, axis=-1)
        x = jnp.einsum('hqk,hkd->hqd', a, Vh)
        x = x.transpose(1, 0, 2).reshape(Q.shape[0], H)
        return x @ params['wo' + tag] + params['bo' + tag][0], a

    def one(src, tgt):
        _t, _ = mha(tgt, tgt, '1')
        t = ln(tgt + _t)
        _t, attn = mha(t, src, '2')
        t = ln(t + _t)
        h = jax.nn.relu(t @ params['wf1'] + params['bf1'][0])
        _t = h @ params['wf2'] + params['bf2'][0]
        t = ln(t + _t)
        return t, attn

    return jax.vmap(one)(source, target)


if __name__ == "__main__":
    B, S, T = 2, 8, 8
    HID, N_HEADS, PF = 32, 4, 64

    key = jax.random.PRNGKey(0)
    keys = jax.random.split(key, 32)
    ki = iter(keys)

    def init(shape, scale=0.1):
        return (scale * jax.random.normal(next(ki), shape)).astype(jnp.float32)

    # Linear weights stored in (in_features, out_features) math layout:
    # y = x @ W + b  (equivalent to PyTorch's x @ W_pt.T + b).
    params = {}
    for tag in ('1', '2'):  # self-attn, encoder-attn
        for name in ('q', 'k', 'v', 'o'):
            params['w' + name + tag] = init((HID, HID))
            params['b' + name + tag] = init((1, HID))
    params['wf1'] = init((HID, PF))
    params['bf1'] = init((1, PF))
    params['wf2'] = init((PF, HID))
    params['bf2'] = init((1, HID))
    # LayerNorm affine params (shared across the three norms, as in the module).
    params['gamma'] = (jnp.ones((1, HID)) + init((1, HID), 0.05)).astype(jnp.float32)
    params['beta'] = init((1, HID), 0.05)

    source = init((B, S, HID), 1.0)
    target = init((B, T, HID), 1.0)

    with jax.default_matmul_precision("float32"):
        ref_out, ref_attn = ref_decoder_layer(source, target, params, N_HEADS)

    # f32-operand path (reference numerics).
    out, attn = decoder_layer(source, target, params, n_heads=N_HEADS)
    out = jax.block_until_ready(out)
    attn = jax.block_until_ready(attn)
    assert out.shape == (B, T, HID) and attn.shape == (B, N_HEADS, T, S)
    assert jnp.allclose(out, ref_out, rtol=2e-3, atol=2e-3), "f32 output mismatch"
    assert jnp.allclose(attn, ref_attn, rtol=2e-3, atol=2e-3), "f32 attention mismatch"

    # bf16-operand fast path (v6e / v7x MXU native); accumulation stays f32.
    out_bf, attn_bf = decoder_layer(source, target, params, n_heads=N_HEADS,
                                    compute_dtype=jnp.bfloat16)
    out_bf = jax.block_until_ready(out_bf)
    attn_bf = jax.block_until_ready(attn_bf)
    assert jnp.allclose(out_bf, ref_out, rtol=5e-2, atol=5e-2), "bf16 output mismatch"
    assert jnp.allclose(attn_bf, ref_attn, rtol=5e-2, atol=5e-2), "bf16 attention mismatch"

    print("KERNEL_OK")
</pallas_src>

<mosaic_0001>
module attributes {stable_mosaic.version = 11 : i64} {
  func.func @kernel(%arg0: i32, %arg1: i32, %arg2: memref<1x8x32xf32, #tpu.memory_space<vmem>>, %arg3: memref<1x8x32xf32, #tpu.memory_space<vmem>>, %arg4: memref<1x8x32xf32, #tpu.memory_space<vmem>>, %arg5: memref<2x32x32xf32, #tpu.memory_space<vmem>>, %arg6: memref<2x1x32xf32, #tpu.memory_space<vmem>>, %arg7: memref<2x32x64xf32, #tpu.memory_space<vmem>>, %arg8: memref<2x1x64xf32, #tpu.memory_space<vmem>>, %arg9: memref<2x32x32xf32, #tpu.memory_space<vmem>>, %arg10: memref<32x64xf32, #tpu.memory_space<vmem>>, %arg11: memref<1x64xf32, #tpu.memory_space<vmem>>, %arg12: memref<64x32xf32, #tpu.memory_space<vmem>>, %arg13: memref<5x32xf32, #tpu.memory_space<vmem>>, %arg14: memref<1x8x32xf32, #tpu.memory_space<vmem>>, %arg15: memref<1x4x8x8xf32, #tpu.memory_space<vmem>>) attributes {dimension_semantics = [#tpu.dimension_semantics<parallel>, #tpu.dimension_semantics<parallel>], iteration_bounds = array<i64: 2, 1>, scalar_prefetch = 0 : i64, scratch_operands = 0 : i64, tpu.core_type = #tpu.core_type<tc>, window_params = [{transform_indices = @transform_0, window_bounds = array<i64: 1, 8, 32>}, {transform_indices = @transform_1, window_bounds = array<i64: 1, 8, 32>}, {transform_indices = @transform_2, window_bounds = array<i64: 1, 8, 32>}, {pipeline_mode = #tpu.pipeline_mode<synchronous>, transform_indices = @transform_3, window_bounds = array<i64: 2, 32, 32>}, {pipeline_mode = #tpu.pipeline_mode<synchronous>, transform_indices = @transform_4, window_bounds = array<i64: 2, 1, 32>}, {pipeline_mode = #tpu.pipeline_mode<synchronous>, transform_indices = @transform_5, window_bounds = array<i64: 2, 32, 64>}, {pipeline_mode = #tpu.pipeline_mode<synchronous>, transform_indices = @transform_6, window_bounds = array<i64: 2, 1, 64>}, {pipeline_mode = #tpu.pipeline_mode<synchronous>, transform_indices = @transform_7, window_bounds = array<i64: 2, 32, 32>}, {pipeline_mode = #tpu.pipeline_mode<synchronous>, transform_indices = @transform_8, window_bounds = array<i64: 32, 64>}, {pipeline_mode = #tpu.pipeline_mode<synchronous>, transform_indices = @transform_9, window_bounds = array<i64: 1, 64>}, {pipeline_mode = #tpu.pipeline_mode<synchronous>, transform_indices = @transform_10, window_bounds = array<i64: 64, 32>}, {pipeline_mode = #tpu.pipeline_mode<synchronous>, transform_indices = @transform_11, window_bounds = array<i64: 5, 32>}, {transform_indices = @transform_12, window_bounds = array<i64: 1, 8, 32>}, {transform_indices = @transform_13, window_bounds = array<i64: 1, 4, 8, 8>}]} {
    %c0 = arith.constant 0 : index
    %c0_0 = arith.constant 0 : index
    %c0_1 = arith.constant 0 : index
    %0 = vector.load %arg2[%c0, %c0_0, %c0_1] : memref<1x8x32xf32, #tpu.memory_space<vmem>>, vector<1x8x32xf32>
    %1 = vector.shape_cast %0 : vector<1x8x32xf32> to vector<8x32xf32>
    %c0_2 = arith.constant 0 : index
    %c0_3 = arith.constant 0 : index
    %c0_4 = arith.constant 0 : index
    %2 = vector.load %arg3[%c0_2, %c0_3, %c0_4] : memref<1x8x32xf32, #tpu.memory_space<vmem>>, vector<1x8x32xf32>
    %3 = vector.shape_cast %2 : vector<1x8x32xf32> to vector<8x32xf32>
    %c0_5 = arith.constant 0 : index
    %c0_6 = arith.constant 0 : index
    %c0_7 = arith.constant 0 : index
    %4 = vector.load %arg4[%c0_5, %c0_6, %c0_7] : memref<1x8x32xf32, #tpu.memory_space<vmem>>, vector<1x8x32xf32>
    %5 = vector.shape_cast %4 : vector<1x8x32xf32> to vector<8x32xf32>
    %c0_8 = arith.constant 0 : index
    %c0_9 = arith.constant 0 : index
    %6 = vector.load %arg13[%c0_8, %c0_9] : memref<5x32xf32, #tpu.memory_space<vmem>>, vector<5x32xf32>
    %7 = vector.extract_strided_slice %6 {offsets = [0, 0], sizes = [1, 32], strides = [1, 1]} : vector<5x32xf32> to vector<1x32xf32>
    %8 = vector.extract_strided_slice %6 {offsets = [1, 0], sizes = [1, 32], strides = [1, 1]} : vector<5x32xf32> to vector<1x32xf32>
    %9 = vector.extract_strided_slice %6 {offsets = [2, 0], sizes = [1, 32], strides = [1, 1]} : vector<5x32xf32> to vector<1x32xf32>
    %10 = vector.extract_strided_slice %6 {offsets = [3, 0], sizes = [1, 32], strides = [1, 1]} : vector<5x32xf32> to vector<1x32xf32>
    %11 = vector.extract_strided_slice %6 {offsets = [4, 0], sizes = [1, 32], strides = [1, 1]} : vector<5x32xf32> to vector<1x32xf32>
    %c0_10 = arith.constant 0 : index
    %c0_11 = arith.constant 0 : index
    %c0_12 = arith.constant 0 : index
    %12 = vector.load %arg5[%c0_10, %c0_11, %c0_12] : memref<2x32x32xf32, #tpu.memory_space<vmem>>, vector<1x32x32xf32>
    %13 = vector.shape_cast %12 : vector<1x32x32xf32> to vector<32x32xf32>
    %cst = arith.constant dense<0.000000e+00> : vector<8x32xf32>
    %14 = tpu.matmul %5, %13, %cst {dimension_numbers = #tpu.dot_dimension_numbers<[1], [0], [0], [1], [0, 0, 1, 1], [], []>} : vector<8x32xf32>, vector<32x32xf32>, vector<8x32xf32> -> vector<8x32xf32>
    %c0_13 = arith.constant 0 : index
    %c0_14 = arith.constant 0 : index
    %c0_15 = arith.constant 0 : index
    %15 = vector.load %arg6[%c0_13, %c0_14, %c0_15] : memref<2x1x32xf32, #tpu.memory_space<vmem>>, vector<1x1x32xf32>
    %16 = vector.shape_cast %15 : vector<1x1x32xf32> to vector<1x32xf32>
    %17 = vector.broadcast %16 : vector<1x32xf32> to vector<8x32xf32>
    %18 = arith.addf %14, %17 : vector<8x32xf32>
    %c0_16 = arith.constant 0 : index
    %c0_17 = arith.constant 0 : index
    %c0_18 = arith.constant 0 : index
    %19 = vector.load %arg7[%c0_16, %c0_17, %c0_18] : memref<2x32x64xf32, #tpu.memory_space<vmem>>, vector<1x32x64xf32>
    %20 = vector.shape_cast %19 : vector<1x32x64xf32> to vector<32x64xf32>
    %cst_19 = arith.constant dense<0.000000e+00> : vector<8x64xf32>
    %21 = tpu.matmul %3, %20, %cst_19 {dimension_numbers = #tpu.dot_dimension_numbers<[1], [0], [0], [1], [0, 0, 1, 1], [], []>} : vector<8x32xf32>, vector<32x64xf32>, vector<8x64xf32> -> vector<8x64xf32>
    %c0_20 = arith.constant 0 : index
    %c0_21 = arith.constant 0 : index
    %c0_22 = arith.constant 0 : index
    %22 = vector.load %arg8[%c0_20, %c0_21, %c0_22] : memref<2x1x64xf32, #tpu.memory_space<vmem>>, vector<1x1x64xf32>
    %23 = vector.shape_cast %22 : vector<1x1x64xf32> to vector<1x64xf32>
    %24 = vector.broadcast %23 : vector<1x64xf32> to vector<8x64xf32>
    %25 = arith.addf %21, %24 : vector<8x64xf32>
    %26 = vector.extract_strided_slice %18 {offsets = [0, 0], sizes = [8, 8], strides = [1, 1]} : vector<8x32xf32> to vector<8x8xf32>
    %27 = vector.extract_strided_slice %18 {offsets = [0, 8], sizes = [8, 8], strides = [1, 1]} : vector<8x32xf32> to vector<8x8xf32>
    %28 = vector.extract_strided_slice %18 {offsets = [0, 16], sizes = [8, 8], strides = [1, 1]} : vector<8x32xf32> to vector<8x8xf32>
    %29 = vector.extract_strided_slice %18 {offsets = [0, 24], sizes = [8, 8], strides = [1, 1]} : vector<8x32xf32> to vector<8x8xf32>
    %30 = vector.shape_cast %26 : vector<8x8xf32> to vector<1x8x8xf32>
    %31 = vector.shape_cast %27 : vector<8x8xf32> to vector<1x8x8xf32>
    %32 = vector.shape_cast %28 : vector<8x8xf32> to vector<1x8x8xf32>
    %33 = vector.shape_cast %29 : vector<8x8xf32> to vector<1x8x8xf32>
    %34 = tpu.concatenate %30, %31, %32, %33 in 0 : vector<1x8x8xf32>, vector<1x8x8xf32>, vector<1x8x8xf32>, vector<1x8x8xf32> -> vector<4x8x8xf32>
    %35 = vector.extract_strided_slice %25 {offsets = [0, 0], sizes = [8, 32], strides = [1, 1]} : vector<8x64xf32> to vector<8x32xf32>
    %36 = vector.extract_strided_slice %35 {offsets = [0, 0], sizes = [8, 8], strides = [1, 1]} : vector<8x32xf32> to vector<8x8xf32>
    %37 = vector.extract_strided_slice %35 {offsets = [0, 8], sizes = [8, 8], strides = [1, 1]} : vector<8x32xf32> to vector<8x8xf32>
    %38 = vector.extract_strided_slice %35 {offsets = [0, 16], sizes = [8, 8], strides = [1, 1]} : vector<8x32xf32> to vector<8x8xf32>
    %39 = vector.extract_strided_slice %35 {offsets = [0, 24], sizes = [8, 8], strides = [1, 1]} : vector<8x32xf32> to vector<8x8xf32>
    %40 = vector.shape_cast %36 : vector<8x8xf32> to vector<1x8x8xf32>
    %41 = vector.shape_cast %37 : vector<8x8xf32> to vector<1x8x8xf32>
    %42 = vector.shape_cast %38 : vector<8x8xf32> to vector<1x8x8xf32>
    %43 = vector.shape_cast %39 : vector<8x8xf32> to vector<1x8x8xf32>
    %44 = tpu.concatenate %40, %41, %42, %43 in 0 : vector<1x8x8xf32>, vector<1x8x8xf32>, vector<1x8x8xf32>, vector<1x8x8xf32> -> vector<4x8x8xf32>
    %45 = vector.extract_strided_slice %25 {offsets = [0, 32], sizes = [8, 32], strides = [1, 1]} : vector<8x64xf32> to vector<8x32xf32>
    %46 = vector.extract_strided_slice %45 {offsets = [0, 0], sizes = [8, 8], strides = [1, 1]} : vector<8x32xf32> to vector<8x8xf32>
    %47 = vector.extract_strided_slice %45 {offsets = [0, 8], sizes = [8, 8], strides = [1, 1]} : vector<8x32xf32> to vector<8x8xf32>
    %48 = vector.extract_strided_slice %45 {offsets = [0, 16], sizes = [8, 8], strides = [1, 1]} : vector<8x32xf32> to vector<8x8xf32>
    %49 = vector.extract_strided_slice %45 {offsets = [0, 24], sizes = [8, 8], strides = [1, 1]} : vector<8x32xf32> to vector<8x8xf32>
    %50 = vector.shape_cast %46 : vector<8x8xf32> to vector<1x8x8xf32>
    %51 = vector.shape_cast %47 : vector<8x8xf32> to vector<1x8x8xf32>
    %52 = vector.shape_cast %48 : vector<8x8xf32> to vector<1x8x8xf32>
    %53 = vector.shape_cast %49 : vector<8x8xf32> to vector<1x8x8xf32>
    %54 = tpu.concatenate %50, %51, %52, %53 in 0 : vector<1x8x8xf32>, vector<1x8x8xf32>, vector<1x8x8xf32>, vector<1x8x8xf32> -> vector<4x8x8xf32>
    "tpu.trace_start"() <{level = 10 : i32, message = "hqe,hke->hqk"}> : () -> ()
    %cst_23 = arith.constant dense<0.000000e+00> : vector<4x8x8xf32>
    %55 = tpu.matmul %34, %44, %cst_23 {dimension_numbers = #tpu.dot_dimension_numbers<[2], [2], [1], [1], [0, 0, 0, 1, 1, 1], [0], [0]>} : vector<4x8x8xf32>, vector<4x8x8xf32>, vector<4x8x8xf32> -> vector<4x8x8xf32>
    "tpu.trace_stop"() : () -> ()
    %cst_24 = arith.constant 0.353553385 : f32
    %56 = vector.broadcast %cst_24 : f32 to vector<4x8x8xf32>
    %57 = arith.mulf %55, %56 : vector<4x8x8xf32>
    %cst_25 = arith.constant dense<0xFF800000> : vector<4x8xf32>
    %58 = vector.multi_reduction <maximumf>, %57, %cst_25 [2] : vector<4x8x8xf32> to vector<4x8xf32>
    %59 = vector.shape_cast %58 : vector<4x8xf32> to vector<4x8x1xf32>
    %60 = vector.broadcast %59 : vector<4x8x1xf32> to vector<4x8x8xf32>
    %61 = arith.subf %57, %60 : vector<4x8x8xf32>
    %62 = math.exp %61 : vector<4x8x8xf32>
    %cst_26 = arith.constant dense<0.000000e+00> : vector<4x8xf32>
    %63 = vector.multi_reduction <add>, %62, %cst_26 [2] : vector<4x8x8xf32> to vector<4x8xf32>
    %64 = vector.shape_cast %63 : vector<4x8xf32> to vector<4x8x1xf32>
    %65 = tpu.reciprocal %64 : vector<4x8x1xf32> -> vector<4x8x1xf32>
    %66 = vector.broadcast %65 : vector<4x8x1xf32> to vector<4x8x8xf32>
    %67 = arith.mulf %62, %66 : vector<4x8x8xf32>
    "tpu.trace_start"() <{level = 10 : i32, message = "hqk,hke->hqe"}> : () -> ()
    %cst_27 = arith.constant dense<0.000000e+00> : vector<4x8x8xf32>
    %68 = tpu.matmul %67, %54, %cst_27 {dimension_numbers = #tpu.dot_dimension_numbers<[2], [1], [1], [2], [0, 0, 0, 1, 1, 2], [0], [0]>} : vector<4x8x8xf32>, vector<4x8x8xf32>, vector<4x8x8xf32> -> vector<4x8x8xf32>
    "tpu.trace_stop"() : () -> ()
    %69 = vector.extract_strided_slice %68 {offsets = [0, 0, 0], sizes = [1, 8, 8], strides = [1, 1, 1]} : vector<4x8x8xf32> to vector<1x8x8xf32>
    %70 = vector.shape_cast %69 : vector<1x8x8xf32> to vector<8x8xf32>
    %71 = vector.extract_strided_slice %68 {offsets = [1, 0, 0], sizes = [1, 8, 8], strides = [1, 1, 1]} : vector<4x8x8xf32> to vector<1x8x8xf32>
    %72 = vector.shape_cast %71 : vector<1x8x8xf32> to vector<8x8xf32>
    %73 = vector.extract_strided_slice %68 {offsets = [2, 0, 0], sizes = [1, 8, 8], strides = [1, 1, 1]} : vector<4x8x8xf32> to vector<1x8x8xf32>
    %74 = vector.shape_cast %73 : vector<1x8x8xf32> to vector<8x8xf32>
    %75 = vector.extract_strided_slice %68 {offsets = [3, 0, 0], sizes = [1, 8, 8], strides = [1, 1, 1]} : vector<4x8x8xf32> to vector<1x8x8xf32>
    %76 = vector.shape_cast %75 : vector<1x8x8xf32> to vector<8x8xf32>
    %77 = tpu.concatenate %70, %72, %74, %76 in 1 : vector<8x8xf32>, vector<8x8xf32>, vector<8x8xf32>, vector<8x8xf32> -> vector<8x32xf32>
    %c0_28 = arith.constant 0 : index
    %c0_29 = arith.constant 0 : index
    %c0_30 = arith.constant 0 : index
    %78 = vector.load %arg9[%c0_28, %c0_29, %c0_30] : memref<2x32x32xf32, #tpu.memory_space<vmem>>, vector<1x32x32xf32>
    %79 = vector.shape_cast %78 : vector<1x32x32xf32> to vector<32x32xf32>
    %cst_31 = arith.constant dense<0.000000e+00> : vector<8x32xf32>
    %80 = tpu.matmul %77, %79, %cst_31 {dimension_numbers = #tpu.dot_dimension_numbers<[1], [0], [0], [1], [0, 0, 1, 1], [], []>} : vector<8x32xf32>, vector<32x32xf32>, vector<8x32xf32> -> vector<8x32xf32>
    %81 = vector.broadcast %7 : vector<1x32xf32> to vector<8x32xf32>
    %82 = arith.addf %80, %81 : vector<8x32xf32>
    %83 = arith.addf %5, %82 : vector<8x32xf32>
    %cst_32 = arith.constant dense<0.000000e+00> : vector<8xf32>
    %84 = vector.multi_reduction <add>, %83, %cst_32 [1] : vector<8x32xf32> to vector<8xf32>
    %85 = vector.shape_cast %84 : vector<8xf32> to vector<8x1xf32>
    %cst_33 = arith.constant 3.200000e+01 : f32
    %86 = vector.broadcast %cst_33 : f32 to vector<8x1xf32>
    %87 = arith.divf %85, %86 : vector<8x1xf32>
    %88 = vector.broadcast %87 : vector<8x1xf32> to vector<8x32xf32>
    %89 = arith.subf %83, %88 : vector<8x32xf32>
    %90 = arith.mulf %89, %89 : vector<8x32xf32>
    %cst_34 = arith.constant dense<0.000000e+00> : vector<8xf32>
    %91 = vector.multi_reduction <add>, %90, %cst_34 [1] : vector<8x32xf32> to vector<8xf32>
    %92 = vector.shape_cast %91 : vector<8xf32> to vector<8x1xf32>
    %cst_35 = arith.constant 3.200000e+01 : f32
    %93 = vector.broadcast %cst_35 : f32 to vector<8x1xf32>
    %94 = arith.divf %92, %93 : vector<8x1xf32>
    %cst_36 = arith.constant 9.99999974E-6 : f32
    %95 = vector.broadcast %cst_36 : f32 to vector<8x1xf32>
    %96 = arith.addf %94, %95 : vector<8x1xf32>
    %97 = math.rsqrt %96 : vector<8x1xf32>
    %98 = vector.broadcast %97 : vector<8x1xf32> to vector<8x32xf32>
    %99 = arith.mulf %89, %98 : vector<8x32xf32>
    %100 = vector.broadcast %10 : vector<1x32xf32> to vector<8x32xf32>
    %101 = arith.mulf %99, %100 : vector<8x32xf32>
    %102 = vector.broadcast %11 : vector<1x32xf32> to vector<8x32xf32>
    %103 = arith.addf %101, %102 : vector<8x32xf32>
    %c1 = arith.constant 1 : index
    %c0_37 = arith.constant 0 : index
    %c0_38 = arith.constant 0 : index
    %104 = vector.load %arg5[%c1, %c0_37, %c0_38] : memref<2x32x32xf32, #tpu.memory_space<vmem>>, vector<1x32x32xf32>
    %105 = vector.shape_cast %104 : vector<1x32x32xf32> to vector<32x32xf32>
    %cst_39 = arith.constant dense<0.000000e+00> : vector<8x32xf32>
    %106 = tpu.matmul %103, %105, %cst_39 {dimension_numbers = #tpu.dot_dimension_numbers<[1], [0], [0], [1], [0, 0, 1, 1], [], []>} : vector<8x32xf32>, vector<32x32xf32>, vector<8x32xf32> -> vector<8x32xf32>
    %c1_40 = arith.constant 1 : index
    %c0_41 = arith.constant 0 : index
    %c0_42 = arith.constant 0 : index
    %107 = vector.load %arg6[%c1_40, %c0_41, %c0_42] : memref<2x1x32xf32, #tpu.memory_space<vmem>>, vector<1x1x32xf32>
    %108 = vector.shape_cast %107 : vector<1x1x32xf32> to vector<1x32xf32>
    %109 = vector.broadcast %108 : vector<1x32xf32> to vector<8x32xf32>
    %110 = arith.addf %106, %109 : vector<8x32xf32>
    %c1_43 = arith.constant 1 : index
    %c0_44 = arith.constant 0 : index
    %c0_45 = arith.constant 0 : index
    %111 = vector.load %arg7[%c1_43, %c0_44, %c0_45] : memref<2x32x64xf32, #tpu.memory_space<vmem>>, vector<1x32x64xf32>
    %112 = vector.shape_cast %111 : vector<1x32x64xf32> to vector<32x64xf32>
    %cst_46 = arith.constant dense<0.000000e+00> : vector<8x64xf32>
    %113 = tpu.matmul %1, %112, %cst_46 {dimension_numbers = #tpu.dot_dimension_numbers<[1], [0], [0], [1], [0, 0, 1, 1], [], []>} : vector<8x32xf32>, vector<32x64xf32>, vector<8x64xf32> -> vector<8x64xf32>
    %c1_47 = arith.constant 1 : index
    %c0_48 = arith.constant 0 : index
    %c0_49 = arith.constant 0 : index
    %114 = vector.load %arg8[%c1_47, %c0_48, %c0_49] : memref<2x1x64xf32, #tpu.memory_space<vmem>>, vector<1x1x64xf32>
    %115 = vector.shape_cast %114 : vector<1x1x64xf32> to vector<1x64xf32>
    %116 = vector.broadcast %115 : vector<1x64xf32> to vector<8x64xf32>
    %117 = arith.addf %113, %116 : vector<8x64xf32>
    %118 = vector.extract_strided_slice %110 {offsets = [0, 0], sizes = [8, 8], strides = [1, 1]} : vector<8x32xf32> to vector<8x8xf32>
    %119 = vector.extract_strided_slice %110 {offsets = [0, 8], sizes = [8, 8], strides = [1, 1]} : vector<8x32xf32> to vector<8x8xf32>
    %120 = vector.extract_strided_slice %110 {offsets = [0, 16], sizes = [8, 8], strides = [1, 1]} : vector<8x32xf32> to vector<8x8xf32>
    %121 = vector.extract_strided_slice %110 {offsets = [0, 24], sizes = [8, 8], strides = [1, 1]} : vector<8x32xf32> to vector<8x8xf32>
    %122 = vector.shape_cast %118 : vector<8x8xf32> to vector<1x8x8xf32>
    %123 = vector.shape_cast %119 : vector<8x8xf32> to vector<1x8x8xf32>
    %124 = vector.shape_cast %120 : vector<8x8xf32> to vector<1x8x8xf32>
    %125 = vector.shape_cast %121 : vector<8x8xf32> to vector<1x8x8xf32>
    %126 = tpu.concatenate %122, %123, %124, %125 in 0 : vector<1x8x8xf32>, vector<1x8x8xf32>, vector<1x8x8xf32>, vector<1x8x8xf32> -> vector<4x8x8xf32>
    %127 = vector.extract_strided_slice %117 {offsets = [0, 0], sizes = [8, 32], strides = [1, 1]} : vector<8x64xf32> to vector<8x32xf32>
    %128 = vector.extract_strided_slice %127 {offsets = [0, 0], sizes = [8, 8], strides = [1, 1]} : vector<8x32xf32> to vector<8x8xf32>
    %129 = vector.extract_strided_slice %127 {offsets = [0, 8], sizes = [8, 8], strides = [1, 1]} : vector<8x32xf32> to vector<8x8xf32>
    %130 = vector.extract_strided_slice %127 {offsets = [0, 16], sizes = [8, 8], strides = [1, 1]} : vector<8x32xf32> to vector<8x8xf32>
    %131 = vector.extract_strided_slice %127 {offsets = [0, 24], sizes = [8, 8], strides = [1, 1]} : vector<8x32xf32> to vector<8x8xf32>
    %132 = vector.shape_cast %128 : vector<8x8xf32> to vector<1x8x8xf32>
    %133 = vector.shape_cast %129 : vector<8x8xf32> to vector<1x8x8xf32>
    %134 = vector.shape_cast %130 : vector<8x8xf32> to vector<1x8x8xf32>
    %135 = vector.shape_cast %131 : vector<8x8xf32> to vector<1x8x8xf32>
    %136 = tpu.concatenate %132, %133, %134, %135 in 0 : vector<1x8x8xf32>, vector<1x8x8xf32>, vector<1x8x8xf32>, vector<1x8x8xf32> -> vector<4x8x8xf32>
    %137 = vector.extract_strided_slice %117 {offsets = [0, 32], sizes = [8, 32], strides = [1, 1]} : vector<8x64xf32> to vector<8x32xf32>
    %138 = vector.extract_strided_slice %137 {offsets = [0, 0], sizes = [8, 8], strides = [1, 1]} : vector<8x32xf32> to vector<8x8xf32>
    %139 = vector.extract_strided_slice %137 {offsets = [0, 8], sizes = [8, 8], strides = [1, 1]} : vector<8x32xf32> to vector<8x8xf32>
    %140 = vector.extract_strided_slice %137 {offsets = [0, 16], sizes = [8, 8], strides = [1, 1]} : vector<8x32xf32> to vector<8x8xf32>
    %141 = vector.extract_strided_slice %137 {offsets = [0, 24], sizes = [8, 8], strides = [1, 1]} : vector<8x32xf32> to vector<8x8xf32>
    %142 = vector.shape_cast %138 : vector<8x8xf32> to vector<1x8x8xf32>
    %143 = vector.shape_cast %139 : vector<8x8xf32> to vector<1x8x8xf32>
    %144 = vector.shape_cast %140 : vector<8x8xf32> to vector<1x8x8xf32>
    %145 = vector.shape_cast %141 : vector<8x8xf32> to vector<1x8x8xf32>
    %146 = tpu.concatenate %142, %143, %144, %145 in 0 : vector<1x8x8xf32>, vector<1x8x8xf32>, vector<1x8x8xf32>, vector<1x8x8xf32> -> vector<4x8x8xf32>
    "tpu.trace_start"() <{level = 10 : i32, message = "hqe,hke->hqk"}> : () -> ()
    %cst_50 = arith.constant dense<0.000000e+00> : vector<4x8x8xf32>
    %147 = tpu.matmul %126, %136, %cst_50 {dimension_numbers = #tpu.dot_dimension_numbers<[2], [2], [1], [1], [0, 0, 0, 1, 1, 1], [0], [0]>} : vector<4x8x8xf32>, vector<4x8x8xf32>, vector<4x8x8xf32> -> vector<4x8x8xf32>
    "tpu.trace_stop"() : () -> ()
    %cst_51 = arith.constant 0.353553385 : f32
    %148 = vector.broadcast %cst_51 : f32 to vector<4x8x8xf32>
    %149 = arith.mulf %147, %148 : vector<4x8x8xf32>
    %cst_52 = arith.constant dense<0xFF800000> : vector<4x8xf32>
    %150 = vector.multi_reduction <maximumf>, %149, %cst_52 [2] : vector<4x8x8xf32> to vector<4x8xf32>
    %151 = vector.shape_cast %150 : vector<4x8xf32> to vector<4x8x1xf32>
    %152 = vector.broadcast %151 : vector<4x8x1xf32> to vector<4x8x8xf32>
    %153 = arith.subf %149, %152 : vector<4x8x8xf32>
    %154 = math.exp %153 : vector<4x8x8xf32>
    %cst_53 = arith.constant dense<0.000000e+00> : vector<4x8xf32>
    %155 = vector.multi_reduction <add>, %154, %cst_53 [2] : vector<4x8x8xf32> to vector<4x8xf32>
    %156 = vector.shape_cast %155 : vector<4x8xf32> to vector<4x8x1xf32>
    %157 = tpu.reciprocal %156 : vector<4x8x1xf32> -> vector<4x8x1xf32>
    %158 = vector.broadcast %157 : vector<4x8x1xf32> to vector<4x8x8xf32>
    %159 = arith.mulf %154, %158 : vector<4x8x8xf32>
    "tpu.trace_start"() <{level = 10 : i32, message = "hqk,hke->hqe"}> : () -> ()
    %cst_54 = arith.constant dense<0.000000e+00> : vector<4x8x8xf32>
    %160 = tpu.matmul %159, %146, %cst_54 {dimension_numbers = #tpu.dot_dimension_numbers<[2], [1], [1], [2], [0, 0, 0, 1, 1, 2], [0], [0]>} : vector<4x8x8xf32>, vector<4x8x8xf32>, vector<4x8x8xf32> -> vector<4x8x8xf32>
    "tpu.trace_stop"() : () -> ()
    %161 = vector.extract_strided_slice %160 {offsets = [0, 0, 0], sizes = [1, 8, 8], strides = [1, 1, 1]} : vector<4x8x8xf32> to vector<1x8x8xf32>
    %162 = vector.shape_cast %161 : vector<1x8x8xf32> to vector<8x8xf32>
    %163 = vector.extract_strided_slice %160 {offsets = [1, 0, 0], sizes = [1, 8, 8], strides = [1, 1, 1]} : vector<4x8x8xf32> to vector<1x8x8xf32>
    %164 = vector.shape_cast %163 : vector<1x8x8xf32> to vector<8x8xf32>
    %165 = vector.extract_strided_slice %160 {offsets = [2, 0, 0], sizes = [1, 8, 8], strides = [1, 1, 1]} : vector<4x8x8xf32> to vector<1x8x8xf32>
    %166 = vector.shape_cast %165 : vector<1x8x8xf32> to vector<8x8xf32>
    %167 = vector.extract_strided_slice %160 {offsets = [3, 0, 0], sizes = [1, 8, 8], strides = [1, 1, 1]} : vector<4x8x8xf32> to vector<1x8x8xf32>
    %168 = vector.shape_cast %167 : vector<1x8x8xf32> to vector<8x8xf32>
    %169 = tpu.concatenate %162, %164, %166, %168 in 1 : vector<8x8xf32>, vector<8x8xf32>, vector<8x8xf32>, vector<8x8xf32> -> vector<8x32xf32>
    %c1_55 = arith.constant 1 : index
    %c0_56 = arith.constant 0 : index
    %c0_57 = arith.constant 0 : index
    %170 = vector.load %arg9[%c1_55, %c0_56, %c0_57] : memref<2x32x32xf32, #tpu.memory_space<vmem>>, vector<1x32x32xf32>
    %171 = vector.shape_cast %170 : vector<1x32x32xf32> to vector<32x32xf32>
    %cst_58 = arith.constant dense<0.000000e+00> : vector<8x32xf32>
    %172 = tpu.matmul %169, %171, %cst_58 {dimension_numbers = #tpu.dot_dimension_numbers<[1], [0], [0], [1], [0, 0, 1, 1], [], []>} : vector<8x32xf32>, vector<32x32xf32>, vector<8x32xf32> -> vector<8x32xf32>
    %173 = vector.broadcast %8 : vector<1x32xf32> to vector<8x32xf32>
    %174 = arith.addf %172, %173 : vector<8x32xf32>
    %175 = arith.addf %103, %174 : vector<8x32xf32>
    %cst_59 = arith.constant dense<0.000000e+00> : vector<8xf32>
    %176 = vector.multi_reduction <add>, %175, %cst_59 [1] : vector<8x32xf32> to vector<8xf32>
    %177 = vector.shape_cast %176 : vector<8xf32> to vector<8x1xf32>
    %cst_60 = arith.constant 3.200000e+01 : f32
    %178 = vector.broadcast %cst_60 : f32 to vector<8x1xf32>
    %179 = arith.divf %177, %178 : vector<8x1xf32>
    %180 = vector.broadcast %179 : vector<8x1xf32> to vector<8x32xf32>
    %181 = arith.subf %175, %180 : vector<8x32xf32>
    %182 = arith.mulf %181, %181 : vector<8x32xf32>
    %cst_61 = arith.constant dense<0.000000e+00> : vector<8xf32>
    %183 = vector.multi_reduction <add>, %182, %cst_61 [1] : vector<8x32xf32> to vector<8xf32>
    %184 = vector.shape_cast %183 : vector<8xf32> to vector<8x1xf32>
    %cst_62 = arith.constant 3.200000e+01 : f32
    %185 = vector.broadcast %cst_62 : f32 to vector<8x1xf32>
    %186 = arith.divf %184, %185 : vector<8x1xf32>
    %cst_63 = arith.constant 9.99999974E-6 : f32
    %187 = vector.broadcast %cst_63 : f32 to vector<8x1xf32>
    %188 = arith.addf %186, %187 : vector<8x1xf32>
    %189 = math.rsqrt %188 : vector<8x1xf32>
    %190 = vector.broadcast %189 : vector<8x1xf32> to vector<8x32xf32>
    %191 = arith.mulf %181, %190 : vector<8x32xf32>
    %192 = vector.broadcast %10 : vector<1x32xf32> to vector<8x32xf32>
    %193 = arith.mulf %191, %192 : vector<8x32xf32>
    %194 = vector.broadcast %11 : vector<1x32xf32> to vector<8x32xf32>
    %195 = arith.addf %193, %194 : vector<8x32xf32>
    %c0_64 = arith.constant 0 : index
    %c0_65 = arith.constant 0 : index
    %196 = vector.load %arg10[%c0_64, %c0_65] : memref<32x64xf32, #tpu.memory_space<vmem>>, vector<32x64xf32>
    %cst_66 = arith.constant dense<0.000000e+00> : vector<8x64xf32>
    %197 = tpu.matmul %195, %196, %cst_66 {dimension_numbers = #tpu.dot_dimension_numbers<[1], [0], [0], [1], [0, 0, 1, 1], [], []>} : vector<8x32xf32>, vector<32x64xf32>, vector<8x64xf32> -> vector<8x64xf32>
    %c0_67 = arith.constant 0 : index
    %c0_68 = arith.constant 0 : index
    %198 = vector.load %arg11[%c0_67, %c0_68] : memref<1x64xf32, #tpu.memory_space<vmem>>, vector<1x64xf32>
    %199 = vector.broadcast %198 : vector<1x64xf32> to vector<8x64xf32>
    %200 = arith.addf %197, %199 : vector<8x64xf32>
    %cst_69 = arith.constant 0.000000e+00 : f32
    %201 = vector.broadcast %cst_69 : f32 to vector<8x64xf32>
    %202 = arith.maximumf %200, %201 : vector<8x64xf32>
    %c0_70 = arith.constant 0 : index
    %c0_71 = arith.constant 0 : index
    %203 = vector.load %arg12[%c0_70, %c0_71] : memref<64x32xf32, #tpu.memory_space<vmem>>, vector<64x32xf32>
    %cst_72 = arith.constant dense<0.000000e+00> : vector<8x32xf32>
    %204 = tpu.matmul %202, %203, %cst_72 {dimension_numbers = #tpu.dot_dimension_numbers<[1], [0], [0], [1], [0, 0, 1, 1], [], []>} : vector<8x64xf32>, vector<64x32xf32>, vector<8x32xf32> -> vector<8x32xf32>
    %205 = vector.broadcast %9 : vector<1x32xf32> to vector<8x32xf32>
    %206 = arith.addf %204, %205 : vector<8x32xf32>
    %207 = arith.addf %195, %206 : vector<8x32xf32>
    %cst_73 = arith.constant dense<0.000000e+00> : vector<8xf32>
    %208 = vector.multi_reduction <add>, %207, %cst_73 [1] : vector<8x32xf32> to vector<8xf32>
    %209 = vector.shape_cast %208 : vector<8xf32> to vector<8x1xf32>
    %cst_74 = arith.constant 3.200000e+01 : f32
    %210 = vector.broadcast %cst_74 : f32 to vector<8x1xf32>
    %211 = arith.divf %209, %210 : vector<8x1xf32>
    %212 = vector.broadcast %211 : vector<8x1xf32> to vector<8x32xf32>
    %213 = arith.subf %207, %212 : vector<8x32xf32>
    %214 = arith.mulf %213, %213 : vector<8x32xf32>
    %cst_75 = arith.constant dense<0.000000e+00> : vector<8xf32>
    %215 = vector.multi_reduction <add>, %214, %cst_75 [1] : vector<8x32xf32> to vector<8xf32>
    %216 = vector.shape_cast %215 : vector<8xf32> to vector<8x1xf32>
    %cst_76 = arith.constant 3.200000e+01 : f32
    %217 = vector.broadcast %cst_76 : f32 to vector<8x1xf32>
    %218 = arith.divf %216, %217 : vector<8x1xf32>
    %cst_77 = arith.constant 9.99999974E-6 : f32
    %219 = vector.broadcast %cst_77 : f32 to vector<8x1xf32>
    %220 = arith.addf %218, %219 : vector<8x1xf32>
    %221 = math.rsqrt %220 : vector<8x1xf32>
    %222 = vector.broadcast %221 : vector<8x1xf32> to vector<8x32xf32>
    %223 = arith.mulf %213, %222 : vector<8x32xf32>
    %224 = vector.broadcast %10 : vector<1x32xf32> to vector<8x32xf32>
    %225 = arith.mulf %223, %224 : vector<8x32xf32>
    %226 = vector.broadcast %11 : vector<1x32xf32> to vector<8x32xf32>
    %227 = arith.addf %225, %226 : vector<8x32xf32>
    %c0_78 = arith.constant 0 : index
    %c0_79 = arith.constant 0 : index
    %c0_80 = arith.constant 0 : index
    %228 = vector.load %arg14[%c0_78, %c0_79, %c0_80] : memref<1x8x32xf32, #tpu.memory_space<vmem>>, vector<1x8x32xf32>
    %229 = vector.shape_cast %228 : vector<1x8x32xf32> to vector<8x32xf32>
    %230 = vector.shape_cast %227 : vector<8x32xf32> to vector<1x8x32xf32>
    tpu.vector_store %arg14[%c0_78, %c0_79, %c0_80], %230 {strides = array<i32>} : memref<1x8x32xf32, #tpu.memory_space<vmem>>, vector<1x8x32xf32>,
    %c0_81 = arith.constant 0 : index
    %c0_82 = arith.constant 0 : index
    %c0_83 = arith.constant 0 : index
    %c0_84 = arith.constant 0 : index
    %231 = vector.load %arg15[%c0_81, %c0_82, %c0_83, %c0_84] : memref<1x4x8x8xf32, #tpu.memory_space<vmem>>, vector<1x4x8x8xf32>
    %232 = vector.shape_cast %231 : vector<1x4x8x8xf32> to vector<4x8x8xf32>
    %233 = vector.shape_cast %159 : vector<4x8x8xf32> to vector<1x4x8x8xf32>
    tpu.vector_store %arg15[%c0_81, %c0_82, %c0_83, %c0_84], %233 {strides = array<i32>} : memref<1x4x8x8xf32, #tpu.memory_space<vmem>>, vector<1x4x8x8xf32>,
    return
  }
  func.func @transform_0(%arg0: i32, %arg1: i32) -> (i32, i32, i32) {
    %c0_i32 = arith.constant 0 : i32
    %c0_i32_0 = arith.constant 0 : i32
    %c0_i32_1 = arith.constant 0 : i32
    return %arg0, %c0_i32, %c0_i32_0 : i32, i32, i32
  }
  func.func @transform_1(%arg0: i32, %arg1: i32) -> (i32, i32, i32) {
    %c0_i32 = arith.constant 0 : i32
    %c0_i32_0 = arith.constant 0 : i32
    %c0_i32_1 = arith.constant 0 : i32
    return %arg0, %c0_i32, %c0_i32_0 : i32, i32, i32
  }
  func.func @transform_2(%arg0: i32, %arg1: i32) -> (i32, i32, i32) {
    %c0_i32 = arith.constant 0 : i32
    %c0_i32_0 = arith.constant 0 : i32
    return %arg0, %arg1, %c0_i32 : i32, i32, i32
  }
  func.func @transform_3(%arg0: i32, %arg1: i32) -> (i32, i32, i32) {
    %c0_i32 = arith.constant 0 : i32
    %c0_i32_0 = arith.constant 0 : i32
    %c0_i32_1 = arith.constant 0 : i32
    %c0_i32_2 = arith.constant 0 : i32
    return %c0_i32, %c0_i32_0, %c0_i32_1 : i32, i32, i32
  }
  func.func @transform_4(%arg0: i32, %arg1: i32) -> (i32, i32, i32) {
    %c0_i32 = arith.constant 0 : i32
    %c0_i32_0 = arith.constant 0 : i32
    %c0_i32_1 = arith.constant 0 : i32
    %c0_i32_2 = arith.constant 0 : i32
    return %c0_i32, %c0_i32_0, %c0_i32_1 : i32, i32, i32
  }
  func.func @transform_5(%arg0: i32, %arg1: i32) -> (i32, i32, i32) {
    %c0_i32 = arith.constant 0 : i32
    %c0_i32_0 = arith.constant 0 : i32
    %c0_i32_1 = arith.constant 0 : i32
    %c0_i32_2 = arith.constant 0 : i32
    return %c0_i32, %c0_i32_0, %c0_i32_1 : i32, i32, i32
  }
  func.func @transform_6(%arg0: i32, %arg1: i32) -> (i32, i32, i32) {
    %c0_i32 = arith.constant 0 : i32
    %c0_i32_0 = arith.constant 0 : i32
    %c0_i32_1 = arith.constant 0 : i32
    %c0_i32_2 = arith.constant 0 : i32
    return %c0_i32, %c0_i32_0, %c0_i32_1 : i32, i32, i32
  }
  func.func @transform_7(%arg0: i32, %arg1: i32) -> (i32, i32, i32) {
    %c0_i32 = arith.constant 0 : i32
    %c0_i32_0 = arith.constant 0 : i32
    %c0_i32_1 = arith.constant 0 : i32
    %c0_i32_2 = arith.constant 0 : i32
    return %c0_i32, %c0_i32_0, %c0_i32_1 : i32, i32, i32
  }
  func.func @transform_8(%arg0: i32, %arg1: i32) -> (i32, i32) {
    %c0_i32 = arith.constant 0 : i32
    %c0_i32_0 = arith.constant 0 : i32
    %c0_i32_1 = arith.constant 0 : i32
    return %c0_i32, %c0_i32_0 : i32, i32
  }
  func.func @transform_9(%arg0: i32, %arg1: i32) -> (i32, i32) {
    %c0_i32 = arith.constant 0 : i32
    %c0_i32_0 = arith.constant 0 : i32
    %c0_i32_1 = arith.constant 0 : i32
    return %c0_i32, %c0_i32_0 : i32, i32
  }
  func.func @transform_10(%arg0: i32, %arg1: i32) -> (i32, i32) {
    %c0_i32 = arith.constant 0 : i32
    %c0_i32_0 = arith.constant 0 : i32
    %c0_i32_1 = arith.constant 0 : i32
    return %c0_i32, %c0_i32_0 : i32, i32
  }
  func.func @transform_11(%arg0: i32, %arg1: i32) -> (i32, i32) {
    %c0_i32 = arith.constant 0 : i32
    %c0_i32_0 = arith.constant 0 : i32
    %c0_i32_1 = arith.constant 0 : i32
    return %c0_i32, %c0_i32_0 : i32, i32
  }
  func.func @transform_12(%arg0: i32, %arg1: i32) -> (i32, i32, i32) {
    %c0_i32 = arith.constant 0 : i32
    %c0_i32_0 = arith.constant 0 : i32
    return %arg0, %arg1, %c0_i32 : i32, i32, i32
  }
  func.func @transform_13(%arg0: i32, %arg1: i32) -> (i32, i32, i32, i32) {
    %c0_i32 = arith.constant 0 : i32
    %c0_i32_0 = arith.constant 0 : i32
    %c0_i32_1 = arith.constant 0 : i32
    return %arg0, %c0_i32, %arg1, %c0_i32_0 : i32, i32, i32, i32
  }
}

</mosaic_0001>

<llo_original>
// kernel: decoder_layer.1
$region0: #{decoder_layer.1}
  #allocation0 [shape = 'u32[]', space=smem, size = 0x4, offset = 0x4, fixed_abs, tag = 'smem constant byte address 0x4 - core index']
  #allocation1 [shape = 'u32[144,128]{1,0:T(1,128)}', space=vmem, size = 0x12000, scoped, tag = 'internal scratch']
  %s0 = inlined_call_operand.vmem [shape: f32[2,8,32], index: 0, kind: input, shape index: {}]
  %s1 = inlined_call_operand.vmem [shape: f32[2,8,32], index: 1, kind: input, shape index: {}, may-alias: {1,2}]
  %s2 = inlined_call_operand.vmem [shape: f32[2,8,32], index: 2, kind: input, shape index: {}, may-alias: {1,2}]
  %s3 = inlined_call_operand.vmem [shape: f32[2,32,32], index: 3, kind: input, shape index: {}]
  %s4 = inlined_call_operand.vmem [shape: f32[2,1,32], index: 4, kind: input, shape index: {}]
  %s5 = inlined_call_operand.vmem [shape: f32[2,32,64], index: 5, kind: input, shape index: {}]
  %s6 = inlined_call_operand.vmem [shape: f32[2,1,64], index: 6, kind: input, shape index: {}]
  %s7 = inlined_call_operand.vmem [shape: f32[2,32,32], index: 7, kind: input, shape index: {}]
  %s8 = inlined_call_operand.vmem [shape: f32[32,64], index: 8, kind: input, shape index: {}]
  %s9 = inlined_call_operand.vmem [shape: f32[1,64], index: 9, kind: input, shape index: {}]
  %s10 = inlined_call_operand.vmem [shape: f32[64,32], index: 10, kind: input, shape index: {}]
  %s11 = inlined_call_operand.vmem [shape: f32[5,32], index: 11, kind: input, shape index: {}]
  %s12 = inlined_call_operand.hbm [shape: f32[2,8,32], index: 12, kind: output, shape index: {0}]
  %s13 = inlined_call_operand.hbm [shape: f32[2,4,8,8], index: 13, kind: output, shape index: {1}]
  %14 = xla_tuple %s12, %s13
  %s15 = sld [smem:[#allocation0]]
  $region89: #{decoder_layer.1} parent=0
    _
  %s17 = ssub.s32 1, %s15
  %s18 = scalar_select 0, %s17, %s15
  $region1: #{decoder_layer.1} parent=0
    #allocation2 [shape = 'u8[8192]{0}', space=vmem, size = 0x2000, scoped, tag = 'output window, operand 0']
    #allocation3 [shape = 's32[2]{0}', space=sflag, size = 0x8, scoped, tag = 'scoped memory for decoder_layer.1']
    #allocation4 [shape = 'u8[32768]{0}', space=vmem, size = 0x8000, scoped, tag = 'output window, operand 1']
    #allocation5 [shape = 's32[2]{0}', space=sflag, size = 0x8, scoped, tag = 'scoped memory for decoder_layer.1']
    %19 = vsyncpa [#allocation3], 0
    %s20 = scalar_lea.sflag [#allocation3], 1
    %21 = vsyncpa %s20, 0
    %22 = vsyncpa [#allocation5], 0
    %s23 = scalar_lea.sflag [#allocation5], 1
    %24 = vsyncpa %s23, 0
    loop: start=0, step=1, limit=4
    $region2: #{decoder_layer.1} parent=1 // loop_pre_header
      _
    $region3: #{decoder_layer.1} parent=1 // loop_header
      %s26 = sphi 0, %s30
      %p27 = scmp.ge.s32.totalorder %s26, 4
      %s33 = sphi 0, %s45
      %s34 = sphi 0, %s41
      %s35 = sphi 0, %s33
      %s36 = sphi 0, %s34
      %s37 = sphi 0, %s35
      %s38 = sphi 0, %s36
      %s48 = sphi 0, %s50
      %s51 = sphi 0, %s48
      %s52 = sphi 0, %s51
      %s68 = sphi 0, %s52
      %s74 = sphi 0, %s76
      %s77 = sphi 0, %s74
      %s78 = sphi 0, %s77
      %s94 = sphi 0, %s78
      %s102 = sphi 0, %s104
      %s105 = sphi 0, %s102
      %s106 = sphi 0, %s105
      %s122 = sphi 0, %s106
      %s126 = sphi 0, %s126
      %s128 = sphi 0, %s126
      %s129 = sphi 0, %s128
      %s143 = sphi 0, %s129
      %s147 = sphi 0, %s147
      %s149 = sphi 0, %s147
      %s150 = sphi 0, %s149
      %s164 = sphi 0, %s150
      %s168 = sphi 0, %s168
      %s170 = sphi 0, %s168
      %s171 = sphi 0, %s170
      %s185 = sphi 0, %s171
      %s189 = sphi 0, %s189
      %s191 = sphi 0, %s189
      %s192 = sphi 0, %s191
      %s206 = sphi 0, %s192
      %s210 = sphi 0, %s210
      %s212 = sphi 0, %s210
      %s213 = sphi 0, %s212
      %s227 = sphi 0, %s213
      %s231 = sphi 0, %s231
      %s233 = sphi 0, %s231
      %s234 = sphi 0, %s233
      %s248 = sphi 0, %s234
      %s252 = sphi 0, %s252
      %s254 = sphi 0, %s252
      %s255 = sphi 0, %s254
      %s269 = sphi 0, %s255
      %s273 = sphi 0, %s273
      %s275 = sphi 0, %s273
      %s276 = sphi 0, %s275
      %s290 = sphi 0, %s276
      %s294 = sphi 0, %s294
      %s296 = sphi 0, %s294
      %s297 = sphi 0, %s296
      %s311 = sphi 0, %s297
      %s319 = sphi 0, %s321
      %s322 = sphi 0, %s319
      %s323 = sphi 0, %s322
      %s339 = sphi 0, %s323
      %s347 = sphi 0, %s349
      %s350 = sphi 0, %s347
      %s351 = sphi 0, %s350
      %s367 = sphi 0, %s351
    $region4: #{decoder_layer.1} parent=1 // loop_header_branch
      %29 = sbr.rel (%p27) target = $region8
    $region5: #{decoder_layer.1} parent=1 // loop_body
      %s31 = ssub.s32 %s26, 1
      %s32 = ssub.s32 %s26, 2
      %s39 = sadd.s32 1, %s34
      %p40 = scmp.ge.s32.totalorder %s39, 1
      %s41 = scalar_select %p40, 0, %s39
      %s42 = sadd.s32 1, %s33
      %s43 = scalar_select %p40, %s42, %s33
      %p44 = scmp.ge.s32.totalorder %s43, 2
      %s45 = scalar_select %p44, 0, %s43
      %s46 = ssub.s32 %s33, %s45
      %p47 = scmp.eq.s32.totalorder %s46, 0
      %s49 = sadd.s32 %s48, 1
      %s50 = scalar_select %p47, %s48, %s49
      %p53 = pneg %p47
      %p54 = scmp.eq.s32.totalorder %s26, 1
      %p55 = por %p53, %p54
      %p56 = scmp.ne.s32.totalorder %s48, %s51
      %p57 = scmp.eq.s32.totalorder %s26, 0
      %p58 = por %p56, %p57
      %p59 = scmp.ne.s32.totalorder %s48, %s51
      %p60 = scmp.eq.s32.totalorder %s31, 1
      %p61 = por %p59, %p60
      %p62 = scmp.ne.s32.totalorder %s51, %s52
      %p63 = scmp.eq.s32.totalorder %s31, 0
      %p64 = por %p62, %p63
      %p65 = scmp.ne.s32.totalorder %s51, %s52
      %p66 = scmp.eq.s32.totalorder %s32, 1
      %p67 = por %p65, %p66
      %p69 = scmp.ne.s32.totalorder %s52, %s68
      %p70 = scmp.eq.s32.totalorder %s32, 0
      %p71 = por %p69, %p70
      %s72 = ssub.s32 %s33, %s45
      %p73 = scmp.eq.s32.totalorder %s72, 0
      %s75 = sadd.s32 %s74, 1
      %s76 = scalar_select %p73, %s74, %s75
      %p79 = pneg %p73
      %p80 = scmp.eq.s32.totalorder %s26, 1
      %p81 = por %p79, %p80
      %p82 = scmp.ne.s32.totalorder %s74, %s77
      %p83 = scmp.eq.s32.totalorder %s26, 0
      %p84 = por %p82, %p83
      %p85 = scmp.ne.s32.totalorder %s74, %s77
      %p86 = scmp.eq.s32.totalorder %s31, 1
      %p87 = por %p85, %p86
      %p88 = scmp.ne.s32.totalorder %s77, %s78
      %p89 = scmp.eq.s32.totalorder %s31, 0
      %p90 = por %p88, %p89
      %p91 = scmp.ne.s32.totalorder %s77, %s78
      %p92 = scmp.eq.s32.totalorder %s32, 1
      %p93 = por %p91, %p92
      %p95 = scmp.ne.s32.totalorder %s78, %s94
      %p96 = scmp.eq.s32.totalorder %s32, 0
      %p97 = por %p95, %p96
      %s98 = ssub.s32 %s33, %s45
      %s99 = ssub.s32 %s34, %s41
      %s100 = sor.u32 %s98, %s99
      %p101 = scmp.eq.s32.totalorder %s100, 0
      %s103 = sadd.s32 %s102, 1
      %s104 = scalar_select %p101, %s102, %s103
      %p107 = pneg %p101
      %p108 = scmp.eq.s32.totalorder %s26, 1
      %p109 = por %p107, %p108
      %p110 = scmp.ne.s32.totalorder %s102, %s105
      %p111 = scmp.eq.s32.totalorder %s26, 0
      %p112 = por %p110, %p111
      %p113 = scmp.ne.s32.totalorder %s102, %s105
      %p114 = scmp.eq.s32.totalorder %s31, 1
      %p115 = por %p113, %p114
      %p116 = scmp.ne.s32.totalorder %s105, %s106
      %p117 = scmp.eq.s32.totalorder %s31, 0
      %p118 = por %p116, %p117
      %p119 = scmp.ne.s32.totalorder %s105, %s106
      %p120 = scmp.eq.s32.totalorder %s32, 1
      %p121 = por %p119, %p120
      %p123 = scmp.ne.s32.totalorder %s106, %s122
      %p124 = scmp.eq.s32.totalorder %s32, 0
      %p125 = por %p123, %p124
      %s127 = sadd.s32 %s126, 1
      %p130 = scmp.eq.s32.totalorder %s26, 1
      %p131 = scmp.ne.s32.totalorder %s126, %s128
      %p132 = scmp.eq.s32.totalorder %s26, 0
      %p133 = por %p131, %p132
      %p134 = scmp.ne.s32.totalorder %s126, %s128
      %p135 = scmp.eq.s32.totalorder %s31, 1
      %p136 = por %p134, %p135
      %p137 = scmp.ne.s32.totalorder %s128, %s129
      %p138 = scmp.eq.s32.totalorder %s31, 0
      %p139 = por %p137, %p138
      %p140 = scmp.ne.s32.totalorder %s128, %s129
      %p141 = scmp.eq.s32.totalorder %s32, 1
      %p142 = por %p140, %p141
      %p144 = scmp.ne.s32.totalorder %s129, %s143
      %p145 = scmp.eq.s32.totalorder %s32, 0
      %p146 = por %p144, %p145
      %s148 = sadd.s32 %s147, 1
      %p151 = scmp.eq.s32.totalorder %s26, 1
      %p152 = scmp.ne.s32.totalorder %s147, %s149
      %p153 = scmp.eq.s32.totalorder %s26, 0
      %p154 = por %p152, %p153
      %p155 = scmp.ne.s32.totalorder %s147, %s149
      %p156 = scmp.eq.s32.totalorder %s31, 1
      %p157 = por %p155, %p156
      %p158 = scmp.ne.s32.totalorder %s149, %s150
      %p159 = scmp.eq.s32.totalorder %s31, 0
      %p160 = por %p158, %p159
      %p161 = scmp.ne.s32.totalorder %s149, %s150
      %p162 = scmp.eq.s32.totalorder %s32, 1
      %p163 = por %p161, %p162
      %p165 = scmp.ne.s32.totalorder %s150, %s164
      %p166 = scmp.eq.s32.totalorder %s32, 0
      %p167 = por %p165, %p166
      %s169 = sadd.s32 %s168, 1
      %p172 = scmp.eq.s32.totalorder %s26, 1
      %p173 = scmp.ne.s32.totalorder %s168, %s170
      %p174 = scmp.eq.s32.totalorder %s26, 0
      %p175 = por %p173, %p174
      %p176 = scmp.ne.s32.totalorder %s168, %s170
      %p177 = scmp.eq.s32.totalorder %s31, 1
      %p178 = por %p176, %p177
      %p179 = scmp.ne.s32.totalorder %s170, %s171
      %p180 = scmp.eq.s32.totalorder %s31, 0
      %p181 = por %p179, %p180
      %p182 = scmp.ne.s32.totalorder %s170, %s171
      %p183 = scmp.eq.s32.totalorder %s32, 1
      %p184 = por %p182, %p183
      %p186 = scmp.ne.s32.totalorder %s171, %s185
      %p187 = scmp.eq.s32.totalorder %s32, 0
      %p188 = por %p186, %p187
      %s190 = sadd.s32 %s189, 1
      %p193 = scmp.eq.s32.totalorder %s26, 1
      %p194 = scmp.ne.s32.totalorder %s189, %s191
      %p195 = scmp.eq.s32.totalorder %s26, 0
      %p196 = por %p194, %p195
      %p197 = scmp.ne.s32.totalorder %s189, %s191
      %p198 = scmp.eq.s32.totalorder %s31, 1
      %p199 = por %p197, %p198
      %p200 = scmp.ne.s32.totalorder %s191, %s192
      %p201 = scmp.eq.s32.totalorder %s31, 0
      %p202 = por %p200, %p201
      %p203 = scmp.ne.s32.totalorder %s191, %s192
      %p204 = scmp.eq.s32.totalorder %s32, 1
      %p205 = por %p203, %p204
      %p207 = scmp.ne.s32.totalorder %s192, %s206
      %p208 = scmp.eq.s32.totalorder %s32, 0
      %p209 = por %p207, %p208
      %s211 = sadd.s32 %s210, 1
      %p214 = scmp.eq.s32.totalorder %s26, 1
      %p215 = scmp.ne.s32.totalorder %s210, %s212
      %p216 = scmp.eq.s32.totalorder %s26, 0
      %p217 = por %p215, %p216
      %p218 = scmp.ne.s32.totalorder %s210, %s212
      %p219 = scmp.eq.s32.totalorder %s31, 1
      %p220 = por %p218, %p219
      %p221 = scmp.ne.s32.totalorder %s212, %s213
      %p222 = scmp.eq.s32.totalorder %s31, 0
      %p223 = por %p221, %p222
      %p224 = scmp.ne.s32.totalorder %s212, %s213
      %p225 = scmp.eq.s32.totalorder %s32, 1
      %p226 = por %p224, %p225
      %p228 = scmp.ne.s32.totalorder %s213, %s227
      %p229 = scmp.eq.s32.totalorder %s32, 0
      %p230 = por %p228, %p229
      %s232 = sadd.s32 %s231, 1
      %p235 = scmp.eq.s32.totalorder %s26, 1
      %p236 = scmp.ne.s32.totalorder %s231, %s233
      %p237 = scmp.eq.s32.totalorder %s26, 0
      %p238 = por %p236, %p237
      %p239 = scmp.ne.s32.totalorder %s231, %s233
      %p240 = scmp.eq.s32.totalorder %s31, 1
      %p241 = por %p239, %p240
      %p242 = scmp.ne.s32.totalorder %s233, %s234
      %p243 = scmp.eq.s32.totalorder %s31, 0
      %p244 = por %p242, %p243
      %p245 = scmp.ne.s32.totalorder %s233, %s234
      %p246 = scmp.eq.s32.totalorder %s32, 1
      %p247 = por %p245, %p246
      %p249 = scmp.ne.s32.totalorder %s234, %s248
      %p250 = scmp.eq.s32.totalorder %s32, 0
      %p251 = por %p249, %p250
      %s253 = sadd.s32 %s252, 1
      %p256 = scmp.eq.s32.totalorder %s26, 1
      %p257 = scmp.ne.s32.totalorder %s252, %s254
      %p258 = scmp.eq.s32.totalorder %s26, 0
      %p259 = por %p257, %p258
      %p260 = scmp.ne.s32.totalorder %s252, %s254
      %p261 = scmp.eq.s32.totalorder %s31, 1
      %p262 = por %p260, %p261
      %p263 = scmp.ne.s32.totalorder %s254, %s255
      %p264 = scmp.eq.s32.totalorder %s31, 0
      %p265 = por %p263, %p264
      %p266 = scmp.ne.s32.totalorder %s254, %s255
      %p267 = scmp.eq.s32.totalorder %s32, 1
      %p268 = por %p266, %p267
      %p270 = scmp.ne.s32.totalorder %s255, %s269
      %p271 = scmp.eq.s32.totalorder %s32, 0
      %p272 = por %p270, %p271
      %s274 = sadd.s32 %s273, 1
      %p277 = scmp.eq.s32.totalorder %s26, 1
      %p278 = scmp.ne.s32.totalorder %s273, %s275
      %p279 = scmp.eq.s32.totalorder %s26, 0
      %p280 = por %p278, %p279
      %p281 = scmp.ne.s32.totalorder %s273, %s275
      %p282 = scmp.eq.s32.totalorder %s31, 1
      %p283 = por %p281, %p282
      %p284 = scmp.ne.s32.totalorder %s275, %s276
      %p285 = scmp.eq.s32.totalorder %s31, 0
      %p286 = por %p284, %p285
      %p287 = scmp.ne.s32.totalorder %s275, %s276
      %p288 = scmp.eq.s32.totalorder %s32, 1
      %p289 = por %p287, %p288
      %p291 = scmp.ne.s32.totalorder %s276, %s290
      %p292 = scmp.eq.s32.totalorder %s32, 0
      %p293 = por %p291, %p292
      %s295 = sadd.s32 %s294, 1
      %p298 = scmp.eq.s32.totalorder %s26, 1
      %p299 = scmp.ne.s32.totalorder %s294, %s296
      %p300 = scmp.eq.s32.totalorder %s26, 0
      %p301 = por %p299, %p300
      %p302 = scmp.ne.s32.totalorder %s294, %s296
      %p303 = scmp.eq.s32.totalorder %s31, 1
      %p304 = por %p302, %p303
      %p305 = scmp.ne.s32.totalorder %s296, %s297
      %p306 = scmp.eq.s32.totalorder %s31, 0
      %p307 = por %p305, %p306
      %p308 = scmp.ne.s32.totalorder %s296, %s297
      %p309 = scmp.eq.s32.totalorder %s32, 1
      %p310 = por %p308, %p309
      %p312 = scmp.ne.s32.totalorder %s297, %s311
      %p313 = scmp.eq.s32.totalorder %s32, 0
      %p314 = por %p312, %p313
      %s315 = ssub.s32 %s33, %s45
      %s316 = ssub.s32 %s34, %s41
      %s317 = sor.u32 %s315, %s316
      %p318 = scmp.eq.s32.totalorder %s317, 0
      %s320 = sadd.s32 %s319, 1
      %s321 = scalar_select %p318, %s319, %s320
      %p324 = pneg %p318
      %p325 = scmp.eq.s32.totalorder %s26, 1
      %p326 = por %p324, %p325
      %p327 = scmp.ne.s32.totalorder %s319, %s322
      %p328 = scmp.eq.s32.totalorder %s26, 0
      %p329 = por %p327, %p328
      %p330 = scmp.ne.s32.totalorder %s319, %s322
      %p331 = scmp.eq.s32.totalorder %s31, 1
      %p332 = por %p330, %p331
      %p333 = scmp.ne.s32.totalorder %s322, %s323
      %p334 = scmp.eq.s32.totalorder %s31, 0
      %p335 = por %p333, %p334
      %p336 = scmp.ne.s32.totalorder %s322, %s323
      %p337 = scmp.eq.s32.totalorder %s32, 1
      %p338 = por %p336, %p337
      %p340 = scmp.ne.s32.totalorder %s323, %s339
      %p341 = scmp.eq.s32.totalorder %s32, 0
      %p342 = por %p340, %p341
      %s343 = ssub.s32 %s33, %s45
      %s344 = ssub.s32 %s34, %s41
      %s345 = sor.u32 %s343, %s344
      %p346 = scmp.eq.s32.totalorder %s345, 0
      %s348 = sadd.s32 %s347, 1
      %s349 = scalar_select %p346, %s347, %s348
      %p352 = pneg %p346
      %p353 = scmp.eq.s32.totalorder %s26, 1
      %p354 = por %p352, %p353
      %p355 = scmp.ne.s32.totalorder %s347, %s350
      %p356 = scmp.eq.s32.totalorder %s26, 0
      %p357 = por %p355, %p356
      %p358 = scmp.ne.s32.totalorder %s347, %s350
      %p359 = scmp.eq.s32.totalorder %s31, 1
      %p360 = por %p358, %p359
      %p361 = scmp.ne.s32.totalorder %s350, %s351
      %p362 = scmp.eq.s32.totalorder %s31, 0
      %p363 = por %p361, %p362
      %p364 = scmp.ne.s32.totalorder %s350, %s351
      %p365 = scmp.eq.s32.totalorder %s32, 1
      %p366 = por %p364, %p365
      %p368 = scmp.ne.s32.totalorder %s351, %s367
      %p369 = scmp.eq.s32.totalorder %s32, 0
      %p370 = por %p368, %p369
      %p371 = scmp.le.s32.totalorder 1, %s26
      %p372 = scmp.lt.s32.totalorder %s26, 3
      %p373 = pnand %p371, %p372
      %p374 = pneg %p373
      // Predicated region
      $region9: #{decoder_layer.1} parent=5 // pred_check
        _
      $region10: #{decoder_layer.1} parent=5 // pred_check_branch
        %376 = sbr.rel (%p373) target = $region12
      $region11: #{decoder_layer.1} parent=5 // pred_region
        %s377 = ssub.s32 %s26, 1
        // Predicated region
        $region13: #{decoder_layer.1} parent=11 // pred_check
          %p378 = pneg %p139
        $region14: #{decoder_layer.1} parent=11 // pred_check_branch
          %380 = sbr.rel (%p378) target = $region16
        $region15: #{decoder_layer.1} parent=11 // pred_region
          _
        $region16: #{decoder_layer.1} parent=11 // pred_fallthru
          _
        // Predicated region
        $region17: #{decoder_layer.1} parent=11 // pred_check
          %p381 = pneg %p160
        $region18: #{decoder_layer.1} parent=11 // pred_check_branch
          %383 = sbr.rel (%p381) target = $region20
        $region19: #{decoder_layer.1} parent=11 // pred_region
          _
        $region20: #{decoder_layer.1} parent=11 // pred_fallthru
          _
        // Predicated region
        $region21: #{decoder_layer.1} parent=11 // pred_check
          %p384 = pneg %p181
        $region22: #{decoder_layer.1} parent=11 // pred_check_branch
          %386 = sbr.rel (%p384) target = $region24
        $region23: #{decoder_layer.1} parent=11 // pred_region
          _
        $region24: #{decoder_layer.1} parent=11 // pred_fallthru
          _
        // Predicated region
        $region25: #{decoder_layer.1} parent=11 // pred_check
          %p387 = pneg %p202
        $region26: #{decoder_layer.1} parent=11 // pred_check_branch
          %389 = sbr.rel (%p387) target = $region28
        $region27: #{decoder_layer.1} parent=11 // pred_region
          _
        $region28: #{decoder_layer.1} parent=11 // pred_fallthru
          _
        // Predicated region
        $region29: #{decoder_layer.1} parent=11 // pred_check
          %p390 = pneg %p223
        $region30: #{decoder_layer.1} parent=11 // pred_check_branch
          %392 = sbr.rel (%p390) target = $region32
        $region31: #{decoder_layer.1} parent=11 // pred_region
          _
        $region32: #{decoder_layer.1} parent=11 // pred_fallthru
          _
        // Predicated region
        $region33: #{decoder_layer.1} parent=11 // pred_check
          %p393 = pneg %p244
        $region34: #{decoder_layer.1} parent=11 // pred_check_branch
          %395 = sbr.rel (%p393) target = $region36
        $region35: #{decoder_layer.1} parent=11 // pred_region
          _
        $region36: #{decoder_layer.1} parent=11 // pred_fallthru
          _
        // Predicated region
        $region37: #{decoder_layer.1} parent=11 // pred_check
          %p396 = pneg %p265
        $region38: #{decoder_layer.1} parent=11 // pred_check_branch
          %398 = sbr.rel (%p396) target = $region40
        $region39: #{decoder_layer.1} parent=11 // pred_region
          _
        $region40: #{decoder_layer.1} parent=11 // pred_fallthru
          _
        // Predicated region
        $region41: #{decoder_layer.1} parent=11 // pred_check
          %p399 = pneg %p286
        $region42: #{decoder_layer.1} parent=11 // pred_check_branch
          %401 = sbr.rel (%p399) target = $region44
        $region43: #{decoder_layer.1} parent=11 // pred_region
          _
        $region44: #{decoder_layer.1} parent=11 // pred_fallthru
          _
        // Predicated region
        $region45: #{decoder_layer.1} parent=11 // pred_check
          %p402 = pneg %p307
        $region46: #{decoder_layer.1} parent=11 // pred_check_branch
          %404 = sbr.rel (%p402) target = $region48
        $region47: #{decoder_layer.1} parent=11 // pred_region
          _
        $region48: #{decoder_layer.1} parent=11 // pred_fallthru
          _
      $region12: #{decoder_layer.1} parent=5 // pred_fallthru
        _
      %p405 = scmp.lt.s32.totalorder %s26, 2
      // Predicated region
      $region49: #{decoder_layer.1} parent=5 // pred_check
        %p406 = pneg %p405
      $region50: #{decoder_layer.1} parent=5 // pred_check_branch
        %408 = sbr.rel (%p406) target = $region52
      $region51: #{decoder_layer.1} parent=5 // pred_region
        // Predicated region
        $region53: #{decoder_layer.1} parent=51 // pred_check
          %p409 = pneg %p58
        $region54: #{decoder_layer.1} parent=51 // pred_check_branch
          %411 = sbr.rel (%p409) target = $region56
        $region55: #{decoder_layer.1} parent=51 // pred_region
          %p412 = scmp.lt.s32.totalorder %s33, 1
          %s413 = scalar_select %p412, %s33, 1
          %s414 = smul.addr %s413, 8
          %s415 = scalar_lea.vmem %s0, %s414
        $region56: #{decoder_layer.1} parent=51 // pred_fallthru
          _
        // Predicated region
        $region57: #{decoder_layer.1} parent=51 // pred_check
          %p416 = pneg %p84
        $region58: #{decoder_layer.1} parent=51 // pred_check_branch
          %418 = sbr.rel (%p416) target = $region60
        $region59: #{decoder_layer.1} parent=51 // pred_region
          %p419 = scmp.lt.s32.totalorder %s33, 1
          %s420 = scalar_select %p419, %s33, 1
          %s421 = smul.addr %s420, 8
          %s422 = scalar_lea.vmem %s1, %s421
        $region60: #{decoder_layer.1} parent=51 // pred_fallthru
          _
        // Predicated region
        $region61: #{decoder_layer.1} parent=51 // pred_check
          %p423 = pneg %p112
        $region62: #{decoder_layer.1} parent=51 // pred_check_branch
          %425 = sbr.rel (%p423) target = $region64
        $region63: #{decoder_layer.1} parent=51 // pred_region
          %p426 = scmp.lt.s32.totalorder %s33, 1
          %s427 = scalar_select %p426, %s33, 1
          %p428 = scmp.lt.s32.totalorder %s34, 0
          %s429 = scalar_select %p428, %s34, 0
          %s430 = sadd.s32 %s429, %s427
          %s431 = smul.addr %s430, 8
          %s432 = scalar_lea.vmem %s2, %s431
        $region64: #{decoder_layer.1} parent=51 // pred_fallthru
          _
      $region52: #{decoder_layer.1} parent=5 // pred_fallthru
        _
      %p433 = scmp.le.s32.totalorder 1, %s26
      %p434 = scmp.lt.s32.totalorder %s26, 3
      %p435 = pnand %p433, %p434
      %p436 = pneg %p435
      // Predicated region
      $region65: #{decoder_layer.1} parent=5 // pred_check
        _
      $region66: #{decoder_layer.1} parent=5 // pred_check_branch
        %438 = sbr.rel (%p435) target = $region68
      $region67: #{decoder_layer.1} parent=5 // pred_region
        %s439 = ssub.s32 %s26, 1
        %p440 = scmp.lt.s32.totalorder %s35, 1
        %s441 = scalar_select %p440, %s35, 1
        %s442 = smul.addr %s441, 8
        %s443 = scalar_lea.vmem %s0, %s442
        %p444 = pneg %p64
        %p445 = pneg %p61
        %p446 = scmp.lt.s32.totalorder %s35, 1
        %s447 = scalar_select %p446, %s35, 1
        %s448 = smul.addr %s447, 8
        %s449 = scalar_lea.vmem %s1, %s448
        %p450 = pneg %p90
        %p451 = pneg %p87
        %p452 = scmp.lt.s32.totalorder %s35, 1
        %s453 = scalar_select %p452, %s35, 1
        %p454 = scmp.lt.s32.totalorder %s36, 0
        %s455 = scalar_select %p454, %s36, 0
        %s456 = sadd.s32 %s455, %s453
        %s457 = smul.addr %s456, 8
        %s458 = scalar_lea.vmem %s2, %s457
        %p459 = pneg %p118
        %p460 = pneg %p115
        %p461 = pneg %p139
        %p462 = pneg %p136
        %p463 = pneg %p160
        %p464 = pneg %p157
        %p465 = pneg %p181
        %p466 = pneg %p178
        %p467 = pneg %p202
        %p468 = pneg %p199
        %p469 = pneg %p223
        %p470 = pneg %p220
        %p471 = pneg %p244
        %p472 = pneg %p241
        %p473 = pneg %p265
        %p474 = pneg %p262
        %p475 = pneg %p286
        %p476 = pneg %p283
        %p477 = pneg %p307
        %p478 = pneg %p304
        %p479 = pneg %p335
        %p480 = pneg %p332
        %s481 = sand.u32 %s322, 1
        %s482 = scalar_lea.sflag [#allocation3], %s481
        %s483 = sand.u32 %s322, 1
        %s484 = smul.addr %s483, 8
        %s485 = scalar_lea.vmem [#allocation2], %s484
        %p486 = pneg %p363
        %p487 = pneg %p360
        %s488 = sand.u32 %s350, 1
        %s489 = scalar_lea.sflag [#allocation5], %s488
        %s490 = sand.u32 %s350, 1
        %s491 = smul.addr %s490, 32
        %s492 = scalar_lea.vmem [#allocation4], %s491
        %p493 = scmp.lt.s32.totalorder %s35, 1
        %s494 = scalar_select %p493, %s35, 1
        %s495 = smul.addr %s494, 8
        %s496 = scalar_lea.vmem %s0, %s495
        %p497 = scmp.lt.s32.totalorder %s35, 1
        %s498 = scalar_select %p497, %s35, 1
        %s499 = smul.addr %s498, 8
        %s500 = scalar_lea.vmem %s1, %s499
        %p501 = scmp.lt.s32.totalorder %s35, 1
        %s502 = scalar_select %p501, %s35, 1
        %p503 = scmp.lt.s32.totalorder %s36, 0
        %s504 = scalar_select %p503, %s36, 0
        %s505 = sadd.s32 %s504, %s502
        %s506 = smul.addr %s505, 8
        %s507 = scalar_lea.vmem %s2, %s506
        %v508 = vld [vmem:[%s496] sm:$0xff]
        %v509 = vld [vmem:[%s500] sm:$0xff]
        %v510 = vld [vmem:[%s507] sm:$0xff]
        %v511 = vld [vmem:[%s11] sm:$0x1f]
        %v512 = vld [vmem:[%s3] sm:$0xff]
        %v513 = vld [vmem:[%s3 + $0x8] sm:$0xff]
        %v514 = vld [vmem:[%s3 + $0x10] sm:$0xff]
        %v515 = vld [vmem:[%s3 + $0x18] sm:$0xff]
        %v516 = vld [vmem:[%s4] sm:$0x1]
        %v518 = vlaneseq
        %v519 = vshrl.u32 %v518, 7
        %v520 = vsub.s32 0, %v519
        %v521 = vrot.slane %v516, %v520
        %vm523 = vcmask 261120
        %v525 = vsel %vm523, %v510, 0
        %527 = vmatprep.subr.mxu0 0.0
        %528 = vmatpush1.msra.mxu0 0.0
        %529 = vmatprep.subr.mxu0 0.0
        %530 = vmatpush1.msra.mxu0 0.0
        %531 = vmatprep.subr.mxu0 0.0
        %532 = vmatpush1.msra.mxu0 0.0
        %533 = vmatprep.subr.mxu0 0.0
        %534 = vmatpush1.msra.mxu0 0.0
        %535 = vmatprep.subr.mxu0 0.0
        %536 = vmatpush1.msra.mxu0 0.0
        %537 = vmatprep.subr.mxu0 0.0
        %538 = vmatpush1.msra.mxu0 0.0
        %539 = vmatprep.subr.mxu0 0.0
        %540 = vmatpush1.msra.mxu0 0.0
        %541 = vmatprep.subr.mxu0 0.0
        %542 = vmatpush1.msra.mxu0 0.0
        %543 = vmatprep.subr.mxu0 0.0
        %544 = vmatpush1.msra.mxu0 0.0
        %545 = vmatprep.subr.mxu0 0.0
        %546 = vmatpush1.msra.mxu0 0.0
        %547 = vmatprep.subr.mxu0 0.0
        %548 = vmatpush1.msra.mxu0 0.0
        %549 = vmatprep.subr.mxu0 0.0
        %550 = vmatpush1.msra.mxu0 0.0
        %551 = vmatprep.subr.mxu0 0.0
        %552 = vmatpush1.msra.mxu0 %v515
        %553 = vmatprep.subr.mxu0 0.0
        %554 = vmatpush1.msra.mxu0 %v514
        %555 = vmatprep.subr.mxu0 0.0
        %556 = vmatpush1.msra.mxu0 %v513
        %557 = vmatprep.subr.mxu0 0.0
        %558 = vmatpush1.msra.mxu0 %v512
        %559 = vmatprep.subr.mxu0 0.0
        %560 = vmatpush2.msra.mxu0 0.0
        %561 = vmatprep.subr.mxu0 0.0
        %562 = vmatpush2.msra.mxu0 0.0
        %563 = vmatprep.subr.mxu0 0.0
        %564 = vmatpush2.msra.mxu0 0.0
        %565 = vmatprep.subr.mxu0 0.0
        %566 = vmatpush2.msra.mxu0 0.0
        %567 = vmatprep.subr.mxu0 0.0
        %568 = vmatpush2.msra.mxu0 0.0
        %569 = vmatprep.subr.mxu0 0.0
        %570 = vmatpush2.msra.mxu0 0.0
        %571 = vmatprep.subr.mxu0 0.0
        %572 = vmatpush2.msra.mxu0 0.0
        %573 = vmatprep.subr.mxu0 0.0
        %574 = vmatpush2.msra.mxu0 0.0
        %575 = vmatprep.subr.mxu0 0.0
        %576 = vmatpush2.msra.mxu0 0.0
        %577 = vmatprep.subr.mxu0 0.0
        %578 = vmatpush2.msra.mxu0 0.0
        %579 = vmatprep.subr.mxu0 0.0
        %580 = vmatpush2.msra.mxu0 0.0
        %581 = vmatprep.subr.mxu0 0.0
        %582 = vmatpush2.msra.mxu0 0.0
        %583 = vmatprep.subr.mxu0 0.0
        %584 = vmatpush2.msra.mxu0 0.0
        %585 = vmatprep.subr.mxu0 0.0
        %586 = vmatpush2.msra.mxu0 0.0
        %587 = vmatprep.subr.mxu0 0.0
        %588 = vmatpush2.msra.mxu0 0.0
        %589 = vmatprep.subr.mxu0 0.0
        %590 = vmatpush2.msra.mxu0 0.0
        %591 = vmatprep.mubr.f32.mxu0 0.0
        %592 = vmatmul.mubr.f32.gmra.mxu0 %v525
        %v593 = vpop.f32.mrf.mxu0
        %v594 = vadd.f32 %v521, %v593
        %v595 = vpop.f32.mrf.mxu0
        %596 = vdwg.mxu0
        %v597 = vld [vmem:[%s5] sm:$0xff]
        %v598 = vld [vmem:[%s5 + $0x8] sm:$0xff]
        %v599 = vld [vmem:[%s5 + $0x10] sm:$0xff]
        %v600 = vld [vmem:[%s5 + $0x18] sm:$0xff]
        %v601 = vld [vmem:[%s6] sm:$0x1]
        %v603 = vlaneseq
        %v604 = vshrl.u32 %v603, 7
        %v605 = vsub.s32 0, %v604
        %v606 = vrot.slane %v601, %v605
        %v609 = vsel %vm523, %v509, 0
        %611 = vmatprep.subr.mxu0 0.0
        %612 = vmatpush1.msra.mxu0 0.0
        %613 = vmatprep.subr.mxu0 0.0
        %614 = vmatpush1.msra.mxu0 0.0
        %615 = vmatprep.subr.mxu0 0.0
        %616 = vmatpush1.msra.mxu0 0.0
        %617 = vmatprep.subr.mxu0 0.0
        %618 = vmatpush1.msra.mxu0 0.0
        %619 = vmatprep.subr.mxu0 0.0
        %620 = vmatpush1.msra.mxu0 0.0
        %621 = vmatprep.subr.mxu0 0.0
        %622 = vmatpush1.msra.mxu0 0.0
        %623 = vmatprep.subr.mxu0 0.0
        %624 = vmatpush1.msra.mxu0 0.0
        %625 = vmatprep.subr.mxu0 0.0
        %626 = vmatpush1.msra.mxu0 0.0
        %627 = vmatprep.subr.mxu0 0.0
        %628 = vmatpush1.msra.mxu0 0.0
        %629 = vmatprep.subr.mxu0 0.0
        %630 = vmatpush1.msra.mxu0 0.0
        %631 = vmatprep.subr.mxu0 0.0
        %632 = vmatpush1.msra.mxu0 0.0
        %633 = vmatprep.subr.mxu0 0.0
        %634 = vmatpush1.msra.mxu0 0.0
        %635 = vmatprep.subr.mxu0 0.0
        %636 = vmatpush1.msra.mxu0 %v600
        %637 = vmatprep.subr.mxu0 0.0
        %638 = vmatpush1.msra.mxu0 %v599
        %639 = vmatprep.subr.mxu0 0.0
        %640 = vmatpush1.msra.mxu0 %v598
        %641 = vmatprep.subr.mxu0 0.0
        %642 = vmatpush1.msra.mxu0 %v597
        %643 = vmatprep.subr.mxu0 0.0
        %644 = vmatpush2.msra.mxu0 0.0
        %645 = vmatprep.subr.mxu0 0.0
        %646 = vmatpush2.msra.mxu0 0.0
        %647 = vmatprep.subr.mxu0 0.0
        %648 = vmatpush2.msra.mxu0 0.0
        %649 = vmatprep.subr.mxu0 0.0
        %650 = vmatpush2.msra.mxu0 0.0
        %651 = vmatprep.subr.mxu0 0.0
        %652 = vmatpush2.msra.mxu0 0.0
        %653 = vmatprep.subr.mxu0 0.0
        %654 = vmatpush2.msra.mxu0 0.0
        %655 = vmatprep.subr.mxu0 0.0
        %656 = vmatpush2.msra.mxu0 0.0
        %657 = vmatprep.subr.mxu0 0.0
        %658 = vmatpush2.msra.mxu0 0.0
        %659 = vmatprep.subr.mxu0 0.0
        %660 = vmatpush2.msra.mxu0 0.0
        %661 = vmatprep.subr.mxu0 0.0
        %662 = vmatpush2.msra.mxu0 0.0
        %663 = vmatprep.subr.mxu0 0.0
        %664 = vmatpush2.msra.mxu0 0.0
        %665 = vmatprep.subr.mxu0 0.0
        %666 = vmatpush2.msra.mxu0 0.0
        %667 = vmatprep.subr.mxu0 0.0
        %668 = vmatpush2.msra.mxu0 0.0
        %669 = vmatprep.subr.mxu0 0.0
        %670 = vmatpush2.msra.mxu0 0.0
        %671 = vmatprep.subr.mxu0 0.0
        %672 = vmatpush2.msra.mxu0 0.0
        %673 = vmatprep.subr.mxu0 0.0
        %674 = vmatpush2.msra.mxu0 0.0
        %675 = vmatprep.mubr.f32.mxu0 0.0
        %676 = vmatmul.mubr.f32.gmra.mxu0 %v609
        %v677 = vpop.f32.mrf.mxu0
        %v678 = vadd.f32 %v606, %v677
        %v679 = vpop.f32.mrf.mxu0
        %680 = vdwg.mxu0
        %682 = vrot.lane.b32.xlu0 %v594, 120
        %v683 = vpop.permute.xlu0 %682
        %684 = vrot.lane.b32.xlu0 %v594, 112
        %v685 = vpop.permute.xlu0 %684
        %686 = vrot.lane.b32.xlu0 %v594, 104
        %v687 = vpop.permute.xlu0 %686
        %689 = vrot.lane.b32.xlu0 %v678, 120
        %v690 = vpop.permute.xlu0 %689
        %691 = vrot.lane.b32.xlu0 %v678, 112
        %v692 = vpop.permute.xlu0 %691
        %693 = vrot.lane.b32.xlu0 %v678, 104
        %v694 = vpop.permute.xlu0 %693
        %vm695 = vcmask 64512
        %v696 = vsel %vm695, %v594, 0
        %v698 = vsel %vm695, %v678, 0
        %700 = vmatprep.subr.mxu0 0.0
        %701 = vmatpush1.xpose.msra.mxu0 0.0
        %702 = vmatprep.subr.mxu0 0.0
        %703 = vmatpush1.xpose.msra.mxu0 0.0
        %704 = vmatprep.subr.mxu0 0.0
        %705 = vmatpush1.xpose.msra.mxu0 0.0
        %706 = vmatprep.subr.mxu0 0.0
        %707 = vmatpush1.xpose.msra.mxu0 0.0
        %708 = vmatprep.subr.mxu0 0.0
        %709 = vmatpush1.xpose.msra.mxu0 0.0
        %710 = vmatprep.subr.mxu0 0.0
        %711 = vmatpush1.xpose.msra.mxu0 0.0
        %712 = vmatprep.subr.mxu0 0.0
        %713 = vmatpush1.xpose.msra.mxu0 0.0
        %714 = vmatprep.subr.mxu0 0.0
        %715 = vmatpush1.xpose.msra.mxu0 0.0
        %716 = vmatprep.subr.mxu0 0.0
        %717 = vmatpush1.xpose.msra.mxu0 0.0
        %718 = vmatprep.subr.mxu0 0.0
        %719 = vmatpush1.xpose.msra.mxu0 0.0
        %720 = vmatprep.subr.mxu0 0.0
        %721 = vmatpush1.xpose.msra.mxu0 0.0
        %722 = vmatprep.subr.mxu0 0.0
        %723 = vmatpush1.xpose.msra.mxu0 0.0
        %724 = vmatprep.subr.mxu0 0.0
        %725 = vmatpush1.xpose.msra.mxu0 0.0
        %726 = vmatprep.subr.mxu0 0.0
        %727 = vmatpush1.xpose.msra.mxu0 0.0
        %728 = vmatprep.subr.mxu0 0.0
        %729 = vmatpush1.xpose.msra.mxu0 0.0
        %730 = vmatprep.subr.mxu0 0.0
        %731 = vmatpush1.xpose.msra.mxu0 %v698
        %732 = vmatprep.subr.mxu0 0.0
        %733 = vmatpush2.xpose.msra.mxu0 0.0
        %734 = vmatprep.subr.mxu0 0.0
        %735 = vmatpush2.xpose.msra.mxu0 0.0
        %736 = vmatprep.subr.mxu0 0.0
        %737 = vmatpush2.xpose.msra.mxu0 0.0
        %738 = vmatprep.subr.mxu0 0.0
        %739 = vmatpush2.xpose.msra.mxu0 0.0
        %740 = vmatprep.subr.mxu0 0.0
        %741 = vmatpush2.xpose.msra.mxu0 0.0
        %742 = vmatprep.subr.mxu0 0.0
        %743 = vmatpush2.xpose.msra.mxu0 0.0
        %744 = vmatprep.subr.mxu0 0.0
        %745 = vmatpush2.xpose.msra.mxu0 0.0
        %746 = vmatprep.subr.mxu0 0.0
        %747 = vmatpush2.xpose.msra.mxu0 0.0
        %748 = vmatprep.subr.mxu0 0.0
        %749 = vmatpush2.xpose.msra.mxu0 0.0
        %750 = vmatprep.subr.mxu0 0.0
        %751 = vmatpush2.xpose.msra.mxu0 0.0
        %752 = vmatprep.subr.mxu0 0.0
        %753 = vmatpush2.xpose.msra.mxu0 0.0
        %754 = vmatprep.subr.mxu0 0.0
        %755 = vmatpush2.xpose.msra.mxu0 0.0
        %756 = vmatprep.subr.mxu0 0.0
        %757 = vmatpush2.xpose.msra.mxu0 0.0
        %758 = vmatprep.subr.mxu0 0.0
        %759 = vmatpush2.xpose.msra.mxu0 0.0
        %760 = vmatprep.subr.mxu0 0.0
        %761 = vmatpush2.xpose.msra.mxu0 0.0
        %762 = vmatprep.subr.mxu0 0.0
        %763 = vmatpush2.xpose.msra.mxu0 0.0
        %764 = vmatprep.mubr.f32.mxu0 0.0
        %765 = vmatmul.mubr.f32.gmra.mxu0 %v696
        %v766 = vpop.f32.mrf.mxu0
        %v767 = vadd.f32 0.0, %v766
        %v768 = vpop.f32.mrf.mxu0
        %769 = vdwg.mxu0
        %v770 = vsel %vm695, %v683, 0
        %v772 = vsel %vm695, %v690, 0
        %774 = vmatprep.subr.mxu0 0.0
        %775 = vmatpush1.xpose.msra.mxu0 0.0
        %776 = vmatprep.subr.mxu0 0.0
        %777 = vmatpush1.xpose.msra.mxu0 0.0
        %778 = vmatprep.subr.mxu0 0.0
        %779 = vmatpush1.xpose.msra.mxu0 0.0
        %780 = vmatprep.subr.mxu0 0.0
        %781 = vmatpush1.xpose.msra.mxu0 0.0
        %782 = vmatprep.subr.mxu0 0.0
        %783 = vmatpush1.xpose.msra.mxu0 0.0
        %784 = vmatprep.subr.mxu0 0.0
        %785 = vmatpush1.xpose.msra.mxu0 0.0
        %786 = vmatprep.subr.mxu0 0.0
        %787 = vmatpush1.xpose.msra.mxu0 0.0
        %788 = vmatprep.subr.mxu0 0.0
        %789 = vmatpush1.xpose.msra.mxu0 0.0
        %790 = vmatprep.subr.mxu0 0.0
        %791 = vmatpush1.xpose.msra.mxu0 0.0
        %792 = vmatprep.subr.mxu0 0.0
        %793 = vmatpush1.xpose.msra.mxu0 0.0
        %794 = vmatprep.subr.mxu0 0.0
        %795 = vmatpush1.xpose.msra.mxu0 0.0
        %796 = vmatprep.subr.mxu0 0.0
        %797 = vmatpush1.xpose.msra.mxu0 0.0
        %798 = vmatprep.subr.mxu0 0.0
        %799 = vmatpush1.xpose.msra.mxu0 0.0
        %800 = vmatprep.subr.mxu0 0.0
        %801 = vmatpush1.xpose.msra.mxu0 0.0
        %802 = vmatprep.subr.mxu0 0.0
        %803 = vmatpush1.xpose.msra.mxu0 0.0
        %804 = vmatprep.subr.mxu0 0.0
        %805 = vmatpush1.xpose.msra.mxu0 %v772
        %806 = vmatprep.subr.mxu0 0.0
        %807 = vmatpush2.xpose.msra.mxu0 0.0
        %808 = vmatprep.subr.mxu0 0.0
        %809 = vmatpush2.xpose.msra.mxu0 0.0
        %810 = vmatprep.subr.mxu0 0.0
        %811 = vmatpush2.xpose.msra.mxu0 0.0
        %812 = vmatprep.subr.mxu0 0.0
        %813 = vmatpush2.xpose.msra.mxu0 0.0
        %814 = vmatprep.subr.mxu0 0.0
        %815 = vmatpush2.xpose.msra.mxu0 0.0
        %816 = vmatprep.subr.mxu0 0.0
        %817 = vmatpush2.xpose.msra.mxu0 0.0
        %818 = vmatprep.subr.mxu0 0.0
        %819 = vmatpush2.xpose.msra.mxu0 0.0
        %820 = vmatprep.subr.mxu0 0.0
        %821 = vmatpush2.xpose.msra.mxu0 0.0
        %822 = vmatprep.subr.mxu0 0.0
        %823 = vmatpush2.xpose.msra.mxu0 0.0
        %824 = vmatprep.subr.mxu0 0.0
        %825 = vmatpush2.xpose.msra.mxu0 0.0
        %826 = vmatprep.subr.mxu0 0.0
        %827 = vmatpush2.xpose.msra.mxu0 0.0
        %828 = vmatprep.subr.mxu0 0.0
        %829 = vmatpush2.xpose.msra.mxu0 0.0
        %830 = vmatprep.subr.mxu0 0.0
        %831 = vmatpush2.xpose.msra.mxu0 0.0
        %832 = vmatprep.subr.mxu0 0.0
        %833 = vmatpush2.xpose.msra.mxu0 0.0
        %834 = vmatprep.subr.mxu0 0.0
        %835 = vmatpush2.xpose.msra.mxu0 0.0
        %836 = vmatprep.subr.mxu0 0.0
        %837 = vmatpush2.xpose.msra.mxu0 0.0
        %838 = vmatprep.mubr.f32.mxu0 0.0
        %839 = vmatmul.mubr.f32.gmra.mxu0 %v770
        %v840 = vpop.f32.mrf.mxu0
        %v841 = vadd.f32 0.0, %v840
        %v842 = vpop.f32.mrf.mxu0
        %843 = vdwg.mxu0
        %v844 = vsel %vm695, %v685, 0
        %v846 = vsel %vm695, %v692, 0
        %848 = vmatprep.subr.mxu0 0.0
        %849 = vmatpush1.xpose.msra.mxu0 0.0
        %850 = vmatprep.subr.mxu0 0.0
        %851 = vmatpush1.xpose.msra.mxu0 0.0
        %852 = vmatprep.subr.mxu0 0.0
        %853 = vmatpush1.xpose.msra.mxu0 0.0
        %854 = vmatprep.subr.mxu0 0.0
        %855 = vmatpush1.xpose.msra.mxu0 0.0
        %856 = vmatprep.subr.mxu0 0.0
        %857 = vmatpush1.xpose.msra.mxu0 0.0
        %858 = vmatprep.subr.mxu0 0.0
        %859 = vmatpush1.xpose.msra.mxu0 0.0
        %860 = vmatprep.subr.mxu0 0.0
        %861 = vmatpush1.xpose.msra.mxu0 0.0
        %862 = vmatprep.subr.mxu0 0.0
        %863 = vmatpush1.xpose.msra.mxu0 0.0
        %864 = vmatprep.subr.mxu0 0.0
        %865 = vmatpush1.xpose.msra.mxu0 0.0
        %866 = vmatprep.subr.mxu0 0.0
        %867 = vmatpush1.xpose.msra.mxu0 0.0
        %868 = vmatprep.subr.mxu0 0.0
        %869 = vmatpush1.xpose.msra.mxu0 0.0
        %870 = vmatprep.subr.mxu0 0.0
        %871 = vmatpush1.xpose.msra.mxu0 0.0
        %872 = vmatprep.subr.mxu0 0.0
        %873 = vmatpush1.xpose.msra.mxu0 0.0
        %874 = vmatprep.subr.mxu0 0.0
        %875 = vmatpush1.xpose.msra.mxu0 0.0
        %876 = vmatprep.subr.mxu0 0.0
        %877 = vmatpush1.xpose.msra.mxu0 0.0
        %878 = vmatprep.subr.mxu0 0.0
        %879 = vmatpush1.xpose.msra.mxu0 %v846
        %880 = vmatprep.subr.mxu0 0.0
        %881 = vmatpush2.xpose.msra.mxu0 0.0
        %882 = vmatprep.subr.mxu0 0.0
        %883 = vmatpush2.xpose.msra.mxu0 0.0
        %884 = vmatprep.subr.mxu0 0.0
        %885 = vmatpush2.xpose.msra.mxu0 0.0
        %886 = vmatprep.subr.mxu0 0.0
        %887 = vmatpush2.xpose.msra.mxu0 0.0
        %888 = vmatprep.subr.mxu0 0.0
        %889 = vmatpush2.xpose.msra.mxu0 0.0
        %890 = vmatprep.subr.mxu0 0.0
        %891 = vmatpush2.xpose.msra.mxu0 0.0
        %892 = vmatprep.subr.mxu0 0.0
        %893 = vmatpush2.xpose.msra.mxu0 0.0
        %894 = vmatprep.subr.mxu0 0.0
        %895 = vmatpush2.xpose.msra.mxu0 0.0
        %896 = vmatprep.subr.mxu0 0.0
        %897 = vmatpush2.xpose.msra.mxu0 0.0
        %898 = vmatprep.subr.mxu0 0.0
        %899 = vmatpush2.xpose.msra.mxu0 0.0
        %900 = vmatprep.subr.mxu0 0.0
        %901 = vmatpush2.xpose.msra.mxu0 0.0
        %902 = vmatprep.subr.mxu0 0.0
        %903 = vmatpush2.xpose.msra.mxu0 0.0
        %904 = vmatprep.subr.mxu0 0.0
        %905 = vmatpush2.xpose.msra.mxu0 0.0
        %906 = vmatprep.subr.mxu0 0.0
        %907 = vmatpush2.xpose.msra.mxu0 0.0
        %908 = vmatprep.subr.mxu0 0.0
        %909 = vmatpush2.xpose.msra.mxu0 0.0
        %910 = vmatprep.subr.mxu0 0.0
        %911 = vmatpush2.xpose.msra.mxu0 0.0
        %912 = vmatprep.mubr.f32.mxu0 0.0
        %913 = vmatmul.mubr.f32.gmra.mxu0 %v844
        %v914 = vpop.f32.mrf.mxu0
        %v915 = vadd.f32 0.0, %v914
        %v916 = vpop.f32.mrf.mxu0
        %917 = vdwg.mxu0
        %v918 = vsel %vm695, %v687, 0
        %v920 = vsel %vm695, %v694, 0
        %922 = vmatprep.subr.mxu0 0.0
        %923 = vmatpush1.xpose.msra.mxu0 0.0
        %924 = vmatprep.subr.mxu0 0.0
        %925 = vmatpush1.xpose.msra.mxu0 0.0
        %926 = vmatprep.subr.mxu0 0.0
        %927 = vmatpush1.xpose.msra.mxu0 0.0
        %928 = vmatprep.subr.mxu0 0.0
        %929 = vmatpush1.xpose.msra.mxu0 0.0
        %930 = vmatprep.subr.mxu0 0.0
        %931 = vmatpush1.xpose.msra.mxu0 0.0
        %932 = vmatprep.subr.mxu0 0.0
        %933 = vmatpush1.xpose.msra.mxu0 0.0
        %934 = vmatprep.subr.mxu0 0.0
        %935 = vmatpush1.xpose.msra.mxu0 0.0
        %936 = vmatprep.subr.mxu0 0.0
        %937 = vmatpush1.xpose.msra.mxu0 0.0
        %938 = vmatprep.subr.mxu0 0.0
        %939 = vmatpush1.xpose.msra.mxu0 0.0
        %940 = vmatprep.subr.mxu0 0.0
        %941 = vmatpush1.xpose.msra.mxu0 0.0
        %942 = vmatprep.subr.mxu0 0.0
        %943 = vmatpush1.xpose.msra.mxu0 0.0
        %944 = vmatprep.subr.mxu0 0.0
        %945 = vmatpush1.xpose.msra.mxu0 0.0
        %946 = vmatprep.subr.mxu0 0.0
        %947 = vmatpush1.xpose.msra.mxu0 0.0
        %948 = vmatprep.subr.mxu0 0.0
        %949 = vmatpush1.xpose.msra.mxu0 0.0
        %950 = vmatprep.subr.mxu0 0.0
        %951 = vmatpush1.xpose.msra.mxu0 0.0
        %952 = vmatprep.subr.mxu0 0.0
        %953 = vmatpush1.xpose.msra.mxu0 %v920
        %954 = vmatprep.subr.mxu0 0.0
        %955 = vmatpush2.xpose.msra.mxu0 0.0
        %956 = vmatprep.subr.mxu0 0.0
        %957 = vmatpush2.xpose.msra.mxu0 0.0
        %958 = vmatprep.subr.mxu0 0.0
        %959 = vmatpush2.xpose.msra.mxu0 0.0
        %960 = vmatprep.subr.mxu0 0.0
        %961 = vmatpush2.xpose.msra.mxu0 0.0
        %962 = vmatprep.subr.mxu0 0.0
        %963 = vmatpush2.xpose.msra.mxu0 0.0
        %964 = vmatprep.subr.mxu0 0.0
        %965 = vmatpush2.xpose.msra.mxu0 0.0
        %966 = vmatprep.subr.mxu0 0.0
        %967 = vmatpush2.xpose.msra.mxu0 0.0
        %968 = vmatprep.subr.mxu0 0.0
        %969 = vmatpush2.xpose.msra.mxu0 0.0
        %970 = vmatprep.subr.mxu0 0.0
        %971 = vmatpush2.xpose.msra.mxu0 0.0
        %972 = vmatprep.subr.mxu0 0.0
        %973 = vmatpush2.xpose.msra.mxu0 0.0
        %974 = vmatprep.subr.mxu0 0.0
        %975 = vmatpush2.xpose.msra.mxu0 0.0
        %976 = vmatprep.subr.mxu0 0.0
        %977 = vmatpush2.xpose.msra.mxu0 0.0
        %978 = vmatprep.subr.mxu0 0.0
        %979 = vmatpush2.xpose.msra.mxu0 0.0
        %980 = vmatprep.subr.mxu0 0.0
        %981 = vmatpush2.xpose.msra.mxu0 0.0
        %982 = vmatprep.subr.mxu0 0.0
        %983 = vmatpush2.xpose.msra.mxu0 0.0
        %984 = vmatprep.subr.mxu0 0.0
        %985 = vmatpush2.xpose.msra.mxu0 0.0
        %986 = vmatprep.mubr.f32.mxu0 0.0
        %987 = vmatmul.mubr.f32.gmra.mxu0 %v918
        %v988 = vpop.f32.mrf.mxu0
        %v989 = vadd.f32 0.0, %v988
        %v990 = vpop.f32.mrf.mxu0
        %991 = vdwg.mxu0
        %v992 = vmul.f32 %v767, 0.35355338
        %v993 = vmul.f32 %v841, 0.35355338
        %v994 = vmul.f32 %v915, 0.35355338
        %v995 = vmul.f32 %v989, 0.35355338
        %v996 = vsel %vm695, %v992, -inf
        %997 = vmax.xlane.f32.xlu0 %v996
        %v998 = vpop.xlane.xlu0 %997
        %v999 = vsel %vm695, %v993, -inf
        %1000 = vmax.xlane.f32.xlu0 %v999
        %v1001 = vpop.xlane.xlu0 %1000
        %v1002 = vsel %vm695, %v994, -inf
        %1003 = vmax.xlane.f32.xlu0 %v1002
        %v1004 = vpop.xlane.xlu0 %1003
        %v1005 = vsel %vm695, %v995, -inf
        %1006 = vmax.xlane.f32.xlu0 %v1005
        %v1007 = vpop.xlane.xlu0 %1006
        %v1008 = vsub.f32 %v992, %v998
        %v1009 = vsub.f32 %v993, %v1001
        %v1010 = vsub.f32 %v994, %v1004
        %v1011 = vsub.f32 %v995, %v1007
        %v1012 = vmul.f32 %v1008, 1.442695
        %v1013 = vpow.pop %v1012
        %v1014 = vmul.f32 %v1009, 1.442695
        %v1015 = vpow.pop %v1014
        %v1016 = vmul.f32 %v1010, 1.442695
        %v1017 = vpow.pop %v1016
        %v1018 = vmul.f32 %v1011, 1.442695
        %v1019 = vpow.pop %v1018
        %v1020 = vsel %vm695, %v1013, 0.0
        %1021 = vadd.xlane.f32.xlu0 %v1020
        %v1022 = vpop.xlane.xlu0 %1021
        %v1023 = vsel %vm695, %v1015, 0.0
        %1024 = vadd.xlane.f32.xlu0 %v1023
        %v1025 = vpop.xlane.xlu0 %1024
        %v1026 = vsel %vm695, %v1017, 0.0
        %1027 = vadd.xlane.f32.xlu0 %v1026
        %v1028 = vpop.xlane.xlu0 %1027
        %v1029 = vsel %vm695, %v1019, 0.0
        %1030 = vadd.xlane.f32.xlu0 %v1029
        %v1031 = vpop.xlane.xlu0 %1030
        %v1032 = vrcp.pop %v1022
        %v1033 = vrcp.pop %v1025
        %v1034 = vrcp.pop %v1028
        %v1035 = vrcp.pop %v1031
        %v1036 = vmul.f32 %v1013, %v1032
        %v1037 = vmul.f32 %v1015, %v1033
        %v1038 = vmul.f32 %v1017, %v1034
        %v1039 = vmul.f32 %v1019, %v1035
        %1040 = vrot.lane.b32.xlu0 %v678, 96
        %v1041 = vpop.permute.xlu0 %1040
        %v1044 = vsel %vm695, %v1036, 0
        %1046 = vmatprep.subr.mxu0 0.0
        %1047 = vmatpush1.msra.mxu0 0.0
        %1048 = vmatprep.subr.mxu0 0.0
        %1049 = vmatpush1.msra.mxu0 0.0
        %1050 = vmatprep.subr.mxu0 0.0
        %1051 = vmatpush1.msra.mxu0 0.0
        %1052 = vmatprep.subr.mxu0 0.0
        %1053 = vmatpush1.msra.mxu0 0.0
        %1054 = vmatprep.subr.mxu0 0.0
        %1055 = vmatpush1.msra.mxu0 0.0
        %1056 = vmatprep.subr.mxu0 0.0
        %1057 = vmatpush1.msra.mxu0 0.0
        %1058 = vmatprep.subr.mxu0 0.0
        %1059 = vmatpush1.msra.mxu0 0.0
        %1060 = vmatprep.subr.mxu0 0.0
        %1061 = vmatpush1.msra.mxu0 0.0
        %1062 = vmatprep.subr.mxu0 0.0
        %1063 = vmatpush1.msra.mxu0 0.0
        %1064 = vmatprep.subr.mxu0 0.0
        %1065 = vmatpush1.msra.mxu0 0.0
        %1066 = vmatprep.subr.mxu0 0.0
        %1067 = vmatpush1.msra.mxu0 0.0
        %1068 = vmatprep.subr.mxu0 0.0
        %1069 = vmatpush1.msra.mxu0 0.0
        %1070 = vmatprep.subr.mxu0 0.0
        %1071 = vmatpush1.msra.mxu0 0.0
        %1072 = vmatprep.subr.mxu0 0.0
        %1073 = vmatpush1.msra.mxu0 0.0
        %1074 = vmatprep.subr.mxu0 0.0
        %1075 = vmatpush1.msra.mxu0 0.0
        %1076 = vmatprep.subr.mxu0 0.0
        %1077 = vmatpush1.msra.mxu0 %v1041
        %1078 = vmatprep.subr.mxu0 0.0
        %1079 = vmatpush2.msra.mxu0 0.0
        %1080 = vmatprep.subr.mxu0 0.0
        %1081 = vmatpush2.msra.mxu0 0.0
        %1082 = vmatprep.subr.mxu0 0.0
        %1083 = vmatpush2.msra.mxu0 0.0
        %1084 = vmatprep.subr.mxu0 0.0
        %1085 = vmatpush2.msra.mxu0 0.0
        %1086 = vmatprep.subr.mxu0 0.0
        %1087 = vmatpush2.msra.mxu0 0.0
        %1088 = vmatprep.subr.mxu0 0.0
        %1089 = vmatpush2.msra.mxu0 0.0
        %1090 = vmatprep.subr.mxu0 0.0
        %1091 = vmatpush2.msra.mxu0 0.0
        %1092 = vmatprep.subr.mxu0 0.0
        %1093 = vmatpush2.msra.mxu0 0.0
        %1094 = vmatprep.subr.mxu0 0.0
        %1095 = vmatpush2.msra.mxu0 0.0
        %1096 = vmatprep.subr.mxu0 0.0
        %1097 = vmatpush2.msra.mxu0 0.0
        %1098 = vmatprep.subr.mxu0 0.0
        %1099 = vmatpush2.msra.mxu0 0.0
        %1100 = vmatprep.subr.mxu0 0.0
        %1101 = vmatpush2.msra.mxu0 0.0
        %1102 = vmatprep.subr.mxu0 0.0
        %1103 = vmatpush2.msra.mxu0 0.0
        %1104 = vmatprep.subr.mxu0 0.0
        %1105 = vmatpush2.msra.mxu0 0.0
        %1106 = vmatprep.subr.mxu0 0.0
        %1107 = vmatpush2.msra.mxu0 0.0
        %1108 = vmatprep.subr.mxu0 0.0
        %1109 = vmatpush2.msra.mxu0 0.0
        %1110 = vmatprep.mubr.f32.mxu0 0.0
        %1111 = vmatmul.mubr.f32.gmra.mxu0 %v1044
        %v1112 = vpop.f32.mrf.mxu0
        %v1113 = vadd.f32 0.0, %v1112
        %v1114 = vpop.f32.mrf.mxu0
        %1115 = vdwg.mxu0
        %1116 = vrot.lane.b32.xlu0 %v690, 96
        %v1117 = vpop.permute.xlu0 %1116
        %v1120 = vsel %vm695, %v1037, 0
        %1122 = vmatprep.subr.mxu0 0.0
        %1123 = vmatpush1.msra.mxu0 0.0
        %1124 = vmatprep.subr.mxu0 0.0
        %1125 = vmatpush1.msra.mxu0 0.0
        %1126 = vmatprep.subr.mxu0 0.0
        %1127 = vmatpush1.msra.mxu0 0.0
        %1128 = vmatprep.subr.mxu0 0.0
        %1129 = vmatpush1.msra.mxu0 0.0
        %1130 = vmatprep.subr.mxu0 0.0
        %1131 = vmatpush1.msra.mxu0 0.0
        %1132 = vmatprep.subr.mxu0 0.0
        %1133 = vmatpush1.msra.mxu0 0.0
        %1134 = vmatprep.subr.mxu0 0.0
        %1135 = vmatpush1.msra.mxu0 0.0
        %1136 = vmatprep.subr.mxu0 0.0
        %1137 = vmatpush1.msra.mxu0 0.0
        %1138 = vmatprep.subr.mxu0 0.0
        %1139 = vmatpush1.msra.mxu0 0.0
        %1140 = vmatprep.subr.mxu0 0.0
        %1141 = vmatpush1.msra.mxu0 0.0
        %1142 = vmatprep.subr.mxu0 0.0
        %1143 = vmatpush1.msra.mxu0 0.0
        %1144 = vmatprep.subr.mxu0 0.0
        %1145 = vmatpush1.msra.mxu0 0.0
        %1146 = vmatprep.subr.mxu0 0.0
        %1147 = vmatpush1.msra.mxu0 0.0
        %1148 = vmatprep.subr.mxu0 0.0
        %1149 = vmatpush1.msra.mxu0 0.0
        %1150 = vmatprep.subr.mxu0 0.0
        %1151 = vmatpush1.msra.mxu0 0.0
        %1152 = vmatprep.subr.mxu0 0.0
        %1153 = vmatpush1.msra.mxu0 %v1117
        %1154 = vmatprep.subr.mxu0 0.0
        %1155 = vmatpush2.msra.mxu0 0.0
        %1156 = vmatprep.subr.mxu0 0.0
        %1157 = vmatpush2.msra.mxu0 0.0
        %1158 = vmatprep.subr.mxu0 0.0
        %1159 = vmatpush2.msra.mxu0 0.0
        %1160 = vmatprep.subr.mxu0 0.0
        %1161 = vmatpush2.msra.mxu0 0.0
        %1162 = vmatprep.subr.mxu0 0.0
        %1163 = vmatpush2.msra.mxu0 0.0
        %1164 = vmatprep.subr.mxu0 0.0
        %1165 = vmatpush2.msra.mxu0 0.0
        %1166 = vmatprep.subr.mxu0 0.0
        %1167 = vmatpush2.msra.mxu0 0.0
        %1168 = vmatprep.subr.mxu0 0.0
        %1169 = vmatpush2.msra.mxu0 0.0
        %1170 = vmatprep.subr.mxu0 0.0
        %1171 = vmatpush2.msra.mxu0 0.0
        %1172 = vmatprep.subr.mxu0 0.0
        %1173 = vmatpush2.msra.mxu0 0.0
        %1174 = vmatprep.subr.mxu0 0.0
        %1175 = vmatpush2.msra.mxu0 0.0
        %1176 = vmatprep.subr.mxu0 0.0
        %1177 = vmatpush2.msra.mxu0 0.0
        %1178 = vmatprep.subr.mxu0 0.0
        %1179 = vmatpush2.msra.mxu0 0.0
        %1180 = vmatprep.subr.mxu0 0.0
        %1181 = vmatpush2.msra.mxu0 0.0
        %1182 = vmatprep.subr.mxu0 0.0
        %1183 = vmatpush2.msra.mxu0 0.0
        %1184 = vmatprep.subr.mxu0 0.0
        %1185 = vmatpush2.msra.mxu0 0.0
        %1186 = vmatprep.mubr.f32.mxu0 0.0
        %1187 = vmatmul.mubr.f32.gmra.mxu0 %v1120
        %v1188 = vpop.f32.mrf.mxu0
        %v1189 = vadd.f32 0.0, %v1188
        %v1190 = vpop.f32.mrf.mxu0
        %1191 = vdwg.mxu0
        %1192 = vrot.lane.b32.xlu0 %v692, 96
        %v1193 = vpop.permute.xlu0 %1192
        %v1196 = vsel %vm695, %v1038, 0
        %1198 = vmatprep.subr.mxu0 0.0
        %1199 = vmatpush1.msra.mxu0 0.0
        %1200 = vmatprep.subr.mxu0 0.0
        %1201 = vmatpush1.msra.mxu0 0.0
        %1202 = vmatprep.subr.mxu0 0.0
        %1203 = vmatpush1.msra.mxu0 0.0
        %1204 = vmatprep.subr.mxu0 0.0
        %1205 = vmatpush1.msra.mxu0 0.0
        %1206 = vmatprep.subr.mxu0 0.0
        %1207 = vmatpush1.msra.mxu0 0.0
        %1208 = vmatprep.subr.mxu0 0.0
        %1209 = vmatpush1.msra.mxu0 0.0
        %1210 = vmatprep.subr.mxu0 0.0
        %1211 = vmatpush1.msra.mxu0 0.0
        %1212 = vmatprep.subr.mxu0 0.0
        %1213 = vmatpush1.msra.mxu0 0.0
        %1214 = vmatprep.subr.mxu0 0.0
        %1215 = vmatpush1.msra.mxu0 0.0
        %1216 = vmatprep.subr.mxu0 0.0
        %1217 = vmatpush1.msra.mxu0 0.0
        %1218 = vmatprep.subr.mxu0 0.0
        %1219 = vmatpush1.msra.mxu0 0.0
        %1220 = vmatprep.subr.mxu0 0.0
        %1221 = vmatpush1.msra.mxu0 0.0
        %1222 = vmatprep.subr.mxu0 0.0
        %1223 = vmatpush1.msra.mxu0 0.0
        %1224 = vmatprep.subr.mxu0 0.0
        %1225 = vmatpush1.msra.mxu0 0.0
        %1226 = vmatprep.subr.mxu0 0.0
        %1227 = vmatpush1.msra.mxu0 0.0
        %1228 = vmatprep.subr.mxu0 0.0
        %1229 = vmatpush1.msra.mxu0 %v1193
        %1230 = vmatprep.subr.mxu0 0.0
        %1231 = vmatpush2.msra.mxu0 0.0
        %1232 = vmatprep.subr.mxu0 0.0
        %1233 = vmatpush2.msra.mxu0 0.0
        %1234 = vmatprep.subr.mxu0 0.0
        %1235 = vmatpush2.msra.mxu0 0.0
        %1236 = vmatprep.subr.mxu0 0.0
        %1237 = vmatpush2.msra.mxu0 0.0
        %1238 = vmatprep.subr.mxu0 0.0
        %1239 = vmatpush2.msra.mxu0 0.0
        %1240 = vmatprep.subr.mxu0 0.0
        %1241 = vmatpush2.msra.mxu0 0.0
        %1242 = vmatprep.subr.mxu0 0.0
        %1243 = vmatpush2.msra.mxu0 0.0
        %1244 = vmatprep.subr.mxu0 0.0
        %1245 = vmatpush2.msra.mxu0 0.0
        %1246 = vmatprep.subr.mxu0 0.0
        %1247 = vmatpush2.msra.mxu0 0.0
        %1248 = vmatprep.subr.mxu0 0.0
        %1249 = vmatpush2.msra.mxu0 0.0
        %1250 = vmatprep.subr.mxu0 0.0
        %1251 = vmatpush2.msra.mxu0 0.0
        %1252 = vmatprep.subr.mxu0 0.0
        %1253 = vmatpush2.msra.mxu0 0.0
        %1254 = vmatprep.subr.mxu0 0.0
        %1255 = vmatpush2.msra.mxu0 0.0
        %1256 = vmatprep.subr.mxu0 0.0
        %1257 = vmatpush2.msra.mxu0 0.0
        %1258 = vmatprep.subr.mxu0 0.0
        %1259 = vmatpush2.msra.mxu0 0.0
        %1260 = vmatprep.subr.mxu0 0.0
        %1261 = vmatpush2.msra.mxu0 0.0
        %1262 = vmatprep.mubr.f32.mxu0 0.0
        %1263 = vmatmul.mubr.f32.gmra.mxu0 %v1196
        %v1264 = vpop.f32.mrf.mxu0
        %v1265 = vadd.f32 0.0, %v1264
        %v1266 = vpop.f32.mrf.mxu0
        %1267 = vdwg.mxu0
        %1268 = vrot.lane.b32.xlu0 %v694, 96
        %v1269 = vpop.permute.xlu0 %1268
        %v1272 = vsel %vm695, %v1039, 0
        %1274 = vmatprep.subr.mxu0 0.0
        %1275 = vmatpush1.msra.mxu0 0.0
        %1276 = vmatprep.subr.mxu0 0.0
        %1277 = vmatpush1.msra.mxu0 0.0
        %1278 = vmatprep.subr.mxu0 0.0
        %1279 = vmatpush1.msra.mxu0 0.0
        %1280 = vmatprep.subr.mxu0 0.0
        %1281 = vmatpush1.msra.mxu0 0.0
        %1282 = vmatprep.subr.mxu0 0.0
        %1283 = vmatpush1.msra.mxu0 0.0
        %1284 = vmatprep.subr.mxu0 0.0
        %1285 = vmatpush1.msra.mxu0 0.0
        %1286 = vmatprep.subr.mxu0 0.0
        %1287 = vmatpush1.msra.mxu0 0.0
        %1288 = vmatprep.subr.mxu0 0.0
        %1289 = vmatpush1.msra.mxu0 0.0
        %1290 = vmatprep.subr.mxu0 0.0
        %1291 = vmatpush1.msra.mxu0 0.0
        %1292 = vmatprep.subr.mxu0 0.0
        %1293 = vmatpush1.msra.mxu0 0.0
        %1294 = vmatprep.subr.mxu0 0.0
        %1295 = vmatpush1.msra.mxu0 0.0
        %1296 = vmatprep.subr.mxu0 0.0
        %1297 = vmatpush1.msra.mxu0 0.0
        %1298 = vmatprep.subr.mxu0 0.0
        %1299 = vmatpush1.msra.mxu0 0.0
        %1300 = vmatprep.subr.mxu0 0.0
        %1301 = vmatpush1.msra.mxu0 0.0
        %1302 = vmatprep.subr.mxu0 0.0
        %1303 = vmatpush1.msra.mxu0 0.0
        %1304 = vmatprep.subr.mxu0 0.0
        %1305 = vmatpush1.msra.mxu0 %v1269
        %1306 = vmatprep.subr.mxu0 0.0
        %1307 = vmatpush2.msra.mxu0 0.0
        %1308 = vmatprep.subr.mxu0 0.0
        %1309 = vmatpush2.msra.mxu0 0.0
        %1310 = vmatprep.subr.mxu0 0.0
        %1311 = vmatpush2.msra.mxu0 0.0
        %1312 = vmatprep.subr.mxu0 0.0
        %1313 = vmatpush2.msra.mxu0 0.0
        %1314 = vmatprep.subr.mxu0 0.0
        %1315 = vmatpush2.msra.mxu0 0.0
        %1316 = vmatprep.subr.mxu0 0.0
        %1317 = vmatpush2.msra.mxu0 0.0
        %1318 = vmatprep.subr.mxu0 0.0
        %1319 = vmatpush2.msra.mxu0 0.0
        %1320 = vmatprep.subr.mxu0 0.0
        %1321 = vmatpush2.msra.mxu0 0.0
        %1322 = vmatprep.subr.mxu0 0.0
        %1323 = vmatpush2.msra.mxu0 0.0
        %1324 = vmatprep.subr.mxu0 0.0
        %1325 = vmatpush2.msra.mxu0 0.0
        %1326 = vmatprep.subr.mxu0 0.0
        %1327 = vmatpush2.msra.mxu0 0.0
        %1328 = vmatprep.subr.mxu0 0.0
        %1329 = vmatpush2.msra.mxu0 0.0
        %1330 = vmatprep.subr.mxu0 0.0
        %1331 = vmatpush2.msra.mxu0 0.0
        %1332 = vmatprep.subr.mxu0 0.0
        %1333 = vmatpush2.msra.mxu0 0.0
        %1334 = vmatprep.subr.mxu0 0.0
        %1335 = vmatpush2.msra.mxu0 0.0
        %1336 = vmatprep.subr.mxu0 0.0
        %1337 = vmatpush2.msra.mxu0 0.0
        %1338 = vmatprep.mubr.f32.mxu0 0.0
        %1339 = vmatmul.mubr.f32.gmra.mxu0 %v1272
        %v1340 = vpop.f32.mrf.mxu0
        %v1341 = vadd.f32 0.0, %v1340
        %v1342 = vpop.f32.mrf.mxu0
        %1343 = vdwg.mxu0
        %1345 = vrot.lane.b32.xlu0 %v1189, 8
        %v1346 = vpop.permute.xlu0 %1345
        %1349 = vrot.lane.b32.xlu0 %v1265, 16
        %v1350 = vpop.permute.xlu0 %1349
        %1353 = vrot.lane.b32.xlu0 %v1341, 24
        %v1354 = vpop.permute.xlu0 %1353
        %v1356 = vsel %vm695, %v1113, %v1346
        %vm1357 = vcmask 130048
        %v1358 = vsel %vm1357, %v1356, %v1350
        %vm1359 = vcmask 195584
        %v1360 = vsel %vm1359, %v1358, %v1354
        %v1361 = vld [vmem:[%s7] sm:$0xff]
        %v1362 = vld [vmem:[%s7 + $0x8] sm:$0xff]
        %v1363 = vld [vmem:[%s7 + $0x10] sm:$0xff]
        %v1364 = vld [vmem:[%s7 + $0x18] sm:$0xff]
        %v1365 = vlaneseq
        %v1366 = vshrl.u32 %v1365, 7
        %v1367 = vsub.s32 0, %v1366
        %v1368 = vrot.slane %v511, %v1367
        %v1370 = vsel %vm523, %v1360, 0
        %1372 = vmatprep.subr.mxu0 0.0
        %1373 = vmatpush1.msra.mxu0 0.0
        %1374 = vmatprep.subr.mxu0 0.0
        %1375 = vmatpush1.msra.mxu0 0.0
        %1376 = vmatprep.subr.mxu0 0.0
        %1377 = vmatpush1.msra.mxu0 0.0
        %1378 = vmatprep.subr.mxu0 0.0
        %1379 = vmatpush1.msra.mxu0 0.0
        %1380 = vmatprep.subr.mxu0 0.0
        %1381 = vmatpush1.msra.mxu0 0.0
        %1382 = vmatprep.subr.mxu0 0.0
        %1383 = vmatpush1.msra.mxu0 0.0
        %1384 = vmatprep.subr.mxu0 0.0
        %1385 = vmatpush1.msra.mxu0 0.0
        %1386 = vmatprep.subr.mxu0 0.0
        %1387 = vmatpush1.msra.mxu0 0.0
        %1388 = vmatprep.subr.mxu0 0.0
        %1389 = vmatpush1.msra.mxu0 0.0
        %1390 = vmatprep.subr.mxu0 0.0
        %1391 = vmatpush1.msra.mxu0 0.0
        %1392 = vmatprep.subr.mxu0 0.0
        %1393 = vmatpush1.msra.mxu0 0.0
        %1394 = vmatprep.subr.mxu0 0.0
        %1395 = vmatpush1.msra.mxu0 0.0
        %1396 = vmatprep.subr.mxu0 0.0
        %1397 = vmatpush1.msra.mxu0 %v1364
        %1398 = vmatprep.subr.mxu0 0.0
        %1399 = vmatpush1.msra.mxu0 %v1363
        %1400 = vmatprep.subr.mxu0 0.0
        %1401 = vmatpush1.msra.mxu0 %v1362
        %1402 = vmatprep.subr.mxu0 0.0
        %1403 = vmatpush1.msra.mxu0 %v1361
        %1404 = vmatprep.subr.mxu0 0.0
        %1405 = vmatpush2.msra.mxu0 0.0
        %1406 = vmatprep.subr.mxu0 0.0
        %1407 = vmatpush2.msra.mxu0 0.0
        %1408 = vmatprep.subr.mxu0 0.0
        %1409 = vmatpush2.msra.mxu0 0.0
        %1410 = vmatprep.subr.mxu0 0.0
        %1411 = vmatpush2.msra.mxu0 0.0
        %1412 = vmatprep.subr.mxu0 0.0
        %1413 = vmatpush2.msra.mxu0 0.0
        %1414 = vmatprep.subr.mxu0 0.0
        %1415 = vmatpush2.msra.mxu0 0.0
        %1416 = vmatprep.subr.mxu0 0.0
        %1417 = vmatpush2.msra.mxu0 0.0
        %1418 = vmatprep.subr.mxu0 0.0
        %1419 = vmatpush2.msra.mxu0 0.0
        %1420 = vmatprep.subr.mxu0 0.0
        %1421 = vmatpush2.msra.mxu0 0.0
        %1422 = vmatprep.subr.mxu0 0.0
        %1423 = vmatpush2.msra.mxu0 0.0
        %1424 = vmatprep.subr.mxu0 0.0
        %1425 = vmatpush2.msra.mxu0 0.0
        %1426 = vmatprep.subr.mxu0 0.0
        %1427 = vmatpush2.msra.mxu0 0.0
        %1428 = vmatprep.subr.mxu0 0.0
        %1429 = vmatpush2.msra.mxu0 0.0
        %1430 = vmatprep.subr.mxu0 0.0
        %1431 = vmatpush2.msra.mxu0 0.0
        %1432 = vmatprep.subr.mxu0 0.0
        %1433 = vmatpush2.msra.mxu0 0.0
        %1434 = vmatprep.subr.mxu0 0.0
        %1435 = vmatpush2.msra.mxu0 0.0
        %1436 = vmatprep.mubr.f32.mxu0 0.0
        %1437 = vmatmul.mubr.f32.gmra.mxu0 %v1370
        %v1438 = vpop.f32.mrf.mxu0
        %v1439 = vadd.f32 %v1368, %v1438
        %v1440 = vpop.f32.mrf.mxu0
        %1441 = vdwg.mxu0
        %v1442 = vadd.f32 %v510, %v1439
        %v1443 = vsel %vm523, %v1442, 0.0
        %1444 = vadd.xlane.f32.xlu0 %v1443
        %v1445 = vpop.xlane.xlu0 %1444
        %v1446 = vrcp.pop 32.0
        %v1447 = vmul.f32 %v1445, %v1446
        %v1448 = vsub.f32 %v1442, %v1447
        %v1449 = vmul.f32 %v1448, %v1448
        %v1450 = vsel %vm523, %v1449, 0.0
        %1451 = vadd.xlane.f32.xlu0 %v1450
        %v1452 = vpop.xlane.xlu0 %1451
        %v1453 = vmul.f32 %v1452, %v1446
        %v1454 = vadd.f32 %v1453, 1e-05
        %v1455 = vrsqrt.pop %v1454
        %v1456 = vmul.f32 %v1448, %v1455
        %v1457 = vlaneseq
        %v1458 = vshrl.u32 %v1457, 7
        %v1459 = vsub.s32 3, %v1458
        %v1460 = vrot.slane %v511, %v1459
        %v1461 = vmul.f32 %v1456, %v1460
        %v1462 = vlaneseq
        %v1463 = vshrl.u32 %v1462, 7
        %v1464 = vsub.s32 4, %v1463
        %v1465 = vrot.slane %v511, %v1464
        %v1466 = vadd.f32 %v1461, %v1465
        %s1467 = scalar_lea.vmem %s3, 32
        %v1468 = vld [vmem:[%s1467] sm:$0xff]
        %v1469 = vld [vmem:[%s1467 + $0x8] sm:$0xff]
        %v1470 = vld [vmem:[%s1467 + $0x10] sm:$0xff]
        %v1471 = vld [vmem:[%s1467 + $0x18] sm:$0xff]
        %s1472 = scalar_lea.vmem %s4, 1
        %v1473 = vld [vmem:[%s1472] sm:$0x1]
        %v1475 = vlaneseq
        %v1476 = vshrl.u32 %v1475, 7
        %v1477 = vsub.s32 0, %v1476
        %v1478 = vrot.slane %v1473, %v1477
        %v1481 = vsel %vm523, %v1466, 0
        %1483 = vmatprep.subr.mxu0 0.0
        %1484 = vmatpush1.msra.mxu0 0.0
        %1485 = vmatprep.subr.mxu0 0.0
        %1486 = vmatpush1.msra.mxu0 0.0
        %1487 = vmatprep.subr.mxu0 0.0
        %1488 = vmatpush1.msra.mxu0 0.0
        %1489 = vmatprep.subr.mxu0 0.0
        %1490 = vmatpush1.msra.mxu0 0.0
        %1491 = vmatprep.subr.mxu0 0.0
        %1492 = vmatpush1.msra.mxu0 0.0
        %1493 = vmatprep.subr.mxu0 0.0
        %1494 = vmatpush1.msra.mxu0 0.0
        %1495 = vmatprep.subr.mxu0 0.0
        %1496 = vmatpush1.msra.mxu0 0.0
        %1497 = vmatprep.subr.mxu0 0.0
        %1498 = vmatpush1.msra.mxu0 0.0
        %1499 = vmatprep.subr.mxu0 0.0
        %1500 = vmatpush1.msra.mxu0 0.0
        %1501 = vmatprep.subr.mxu0 0.0
        %1502 = vmatpush1.msra.mxu0 0.0
        %1503 = vmatprep.subr.mxu0 0.0
        %1504 = vmatpush1.msra.mxu0 0.0
        %1505 = vmatprep.subr.mxu0 0.0
        %1506 = vmatpush1.msra.mxu0 0.0
        %1507 = vmatprep.subr.mxu0 0.0
        %1508 = vmatpush1.msra.mxu0 %v1471
        %1509 = vmatprep.subr.mxu0 0.0
        %1510 = vmatpush1.msra.mxu0 %v1470
        %1511 = vmatprep.subr.mxu0 0.0
        %1512 = vmatpush1.msra.mxu0 %v1469
        %1513 = vmatprep.subr.mxu0 0.0
        %1514 = vmatpush1.msra.mxu0 %v1468
        %1515 = vmatprep.subr.mxu0 0.0
        %1516 = vmatpush2.msra.mxu0 0.0
        %1517 = vmatprep.subr.mxu0 0.0
        %1518 = vmatpush2.msra.mxu0 0.0
        %1519 = vmatprep.subr.mxu0 0.0
        %1520 = vmatpush2.msra.mxu0 0.0
        %1521 = vmatprep.subr.mxu0 0.0
        %1522 = vmatpush2.msra.mxu0 0.0
        %1523 = vmatprep.subr.mxu0 0.0
        %1524 = vmatpush2.msra.mxu0 0.0
        %1525 = vmatprep.subr.mxu0 0.0
        %1526 = vmatpush2.msra.mxu0 0.0
        %1527 = vmatprep.subr.mxu0 0.0
        %1528 = vmatpush2.msra.mxu0 0.0
        %1529 = vmatprep.subr.mxu0 0.0
        %1530 = vmatpush2.msra.mxu0 0.0
        %1531 = vmatprep.subr.mxu0 0.0
        %1532 = vmatpush2.msra.mxu0 0.0
        %1533 = vmatprep.subr.mxu0 0.0
        %1534 = vmatpush2.msra.mxu0 0.0
        %1535 = vmatprep.subr.mxu0 0.0
        %1536 = vmatpush2.msra.mxu0 0.0
        %1537 = vmatprep.subr.mxu0 0.0
        %1538 = vmatpush2.msra.mxu0 0.0
        %1539 = vmatprep.subr.mxu0 0.0
        %1540 = vmatpush2.msra.mxu0 0.0
        %1541 = vmatprep.subr.mxu0 0.0
        %1542 = vmatpush2.msra.mxu0 0.0
        %1543 = vmatprep.subr.mxu0 0.0
        %1544 = vmatpush2.msra.mxu0 0.0
        %1545 = vmatprep.subr.mxu0 0.0
        %1546 = vmatpush2.msra.mxu0 0.0
        %1547 = vmatprep.mubr.f32.mxu0 0.0
        %1548 = vmatmul.mubr.f32.gmra.mxu0 %v1481
        %v1549 = vpop.f32.mrf.mxu0
        %v1550 = vadd.f32 %v1478, %v1549
        %v1551 = vpop.f32.mrf.mxu0
        %1552 = vdwg.mxu0
        %s1553 = scalar_lea.vmem %s5, 32
        %v1554 = vld [vmem:[%s1553] sm:$0xff]
        %v1555 = vld [vmem:[%s1553 + $0x8] sm:$0xff]
        %v1556 = vld [vmem:[%s1553 + $0x10] sm:$0xff]
        %v1557 = vld [vmem:[%s1553 + $0x18] sm:$0xff]
        %s1558 = scalar_lea.vmem %s6, 1
        %v1559 = vld [vmem:[%s1558] sm:$0x1]
        %v1561 = vlaneseq
        %v1562 = vshrl.u32 %v1561, 7
        %v1563 = vsub.s32 0, %v1562
        %v1564 = vrot.slane %v1559, %v1563
        %v1567 = vsel %vm523, %v508, 0
        %1569 = vmatprep.subr.mxu0 0.0
        %1570 = vmatpush1.msra.mxu0 0.0
        %1571 = vmatprep.subr.mxu0 0.0
        %1572 = vmatpush1.msra.mxu0 0.0
        %1573 = vmatprep.subr.mxu0 0.0
        %1574 = vmatpush1.msra.mxu0 0.0
        %1575 = vmatprep.subr.mxu0 0.0
        %1576 = vmatpush1.msra.mxu0 0.0
        %1577 = vmatprep.subr.mxu0 0.0
        %1578 = vmatpush1.msra.mxu0 0.0
        %1579 = vmatprep.subr.mxu0 0.0
        %1580 = vmatpush1.msra.mxu0 0.0
        %1581 = vmatprep.subr.mxu0 0.0
        %1582 = vmatpush1.msra.mxu0 0.0
        %1583 = vmatprep.subr.mxu0 0.0
        %1584 = vmatpush1.msra.mxu0 0.0
        %1585 = vmatprep.subr.mxu0 0.0
        %1586 = vmatpush1.msra.mxu0 0.0
        %1587 = vmatprep.subr.mxu0 0.0
        %1588 = vmatpush1.msra.mxu0 0.0
        %1589 = vmatprep.subr.mxu0 0.0
        %1590 = vmatpush1.msra.mxu0 0.0
        %1591 = vmatprep.subr.mxu0 0.0
        %1592 = vmatpush1.msra.mxu0 0.0
        %1593 = vmatprep.subr.mxu0 0.0
        %1594 = vmatpush1.msra.mxu0 %v1557
        %1595 = vmatprep.subr.mxu0 0.0
        %1596 = vmatpush1.msra.mxu0 %v1556
        %1597 = vmatprep.subr.mxu0 0.0
        %1598 = vmatpush1.msra.mxu0 %v1555
        %1599 = vmatprep.subr.mxu0 0.0
        %1600 = vmatpush1.msra.mxu0 %v1554
        %1601 = vmatprep.subr.mxu0 0.0
        %1602 = vmatpush2.msra.mxu0 0.0
        %1603 = vmatprep.subr.mxu0 0.0
        %1604 = vmatpush2.msra.mxu0 0.0
        %1605 = vmatprep.subr.mxu0 0.0
        %1606 = vmatpush2.msra.mxu0 0.0
        %1607 = vmatprep.subr.mxu0 0.0
        %1608 = vmatpush2.msra.mxu0 0.0
        %1609 = vmatprep.subr.mxu0 0.0
        %1610 = vmatpush2.msra.mxu0 0.0
        %1611 = vmatprep.subr.mxu0 0.0
        %1612 = vmatpush2.msra.mxu0 0.0
        %1613 = vmatprep.subr.mxu0 0.0
        %1614 = vmatpush2.msra.mxu0 0.0
        %1615 = vmatprep.subr.mxu0 0.0
        %1616 = vmatpush2.msra.mxu0 0.0
        %1617 = vmatprep.subr.mxu0 0.0
        %1618 = vmatpush2.msra.mxu0 0.0
        %1619 = vmatprep.subr.mxu0 0.0
        %1620 = vmatpush2.msra.mxu0 0.0
        %1621 = vmatprep.subr.mxu0 0.0
        %1622 = vmatpush2.msra.mxu0 0.0
        %1623 = vmatprep.subr.mxu0 0.0
        %1624 = vmatpush2.msra.mxu0 0.0
        %1625 = vmatprep.subr.mxu0 0.0
        %1626 = vmatpush2.msra.mxu0 0.0
        %1627 = vmatprep.subr.mxu0 0.0
        %1628 = vmatpush2.msra.mxu0 0.0
        %1629 = vmatprep.subr.mxu0 0.0
        %1630 = vmatpush2.msra.mxu0 0.0
        %1631 = vmatprep.subr.mxu0 0.0
        %1632 = vmatpush2.msra.mxu0 0.0
        %1633 = vmatprep.mubr.f32.mxu0 0.0
        %1634 = vmatmul.mubr.f32.gmra.mxu0 %v1567
        %v1635 = vpop.f32.mrf.mxu0
        %v1636 = vadd.f32 %v1564, %v1635
        %v1637 = vpop.f32.mrf.mxu0
        %1638 = vdwg.mxu0
        %1640 = vrot.lane.b32.xlu0 %v1550, 120
        %v1641 = vpop.permute.xlu0 %1640
        %1642 = vrot.lane.b32.xlu0 %v1550, 112
        %v1643 = vpop.permute.xlu0 %1642
        %1644 = vrot.lane.b32.xlu0 %v1550, 104
        %v1645 = vpop.permute.xlu0 %1644
        %1647 = vrot.lane.b32.xlu0 %v1636, 120
        %v1648 = vpop.permute.xlu0 %1647
        %1649 = vrot.lane.b32.xlu0 %v1636, 112
        %v1650 = vpop.permute.xlu0 %1649
        %1651 = vrot.lane.b32.xlu0 %v1636, 104
        %v1652 = vpop.permute.xlu0 %1651
        %v1653 = vsel %vm695, %v1550, 0
        %v1655 = vsel %vm695, %v1636, 0
        %1657 = vmatprep.subr.mxu0 0.0
        %1658 = vmatpush1.xpose.msra.mxu0 0.0
        %1659 = vmatprep.subr.mxu0 0.0
        %1660 = vmatpush1.xpose.msra.mxu0 0.0
        %1661 = vmatprep.subr.mxu0 0.0
        %1662 = vmatpush1.xpose.msra.mxu0 0.0
        %1663 = vmatprep.subr.mxu0 0.0
        %1664 = vmatpush1.xpose.msra.mxu0 0.0
        %1665 = vmatprep.subr.mxu0 0.0
        %1666 = vmatpush1.xpose.msra.mxu0 0.0
        %1667 = vmatprep.subr.mxu0 0.0
        %1668 = vmatpush1.xpose.msra.mxu0 0.0
        %1669 = vmatprep.subr.mxu0 0.0
        %1670 = vmatpush1.xpose.msra.mxu0 0.0
        %1671 = vmatprep.subr.mxu0 0.0
        %1672 = vmatpush1.xpose.msra.mxu0 0.0
        %1673 = vmatprep.subr.mxu0 0.0
        %1674 = vmatpush1.xpose.msra.mxu0 0.0
        %1675 = vmatprep.subr.mxu0 0.0
        %1676 = vmatpush1.xpose.msra.mxu0 0.0
        %1677 = vmatprep.subr.mxu0 0.0
        %1678 = vmatpush1.xpose.msra.mxu0 0.0
        %1679 = vmatprep.subr.mxu0 0.0
        %1680 = vmatpush1.xpose.msra.mxu0 0.0
        %1681 = vmatprep.subr.mxu0 0.0
        %1682 = vmatpush1.xpose.msra.mxu0 0.0
        %1683 = vmatprep.subr.mxu0 0.0
        %1684 = vmatpush1.xpose.msra.mxu0 0.0
        %1685 = vmatprep.subr.mxu0 0.0
        %1686 = vmatpush1.xpose.msra.mxu0 0.0
        %1687 = vmatprep.subr.mxu0 0.0
        %1688 = vmatpush1.xpose.msra.mxu0 %v1655
        %1689 = vmatprep.subr.mxu0 0.0
        %1690 = vmatpush2.xpose.msra.mxu0 0.0
        %1691 = vmatprep.subr.mxu0 0.0
        %1692 = vmatpush2.xpose.msra.mxu0 0.0
        %1693 = vmatprep.subr.mxu0 0.0
        %1694 = vmatpush2.xpose.msra.mxu0 0.0
        %1695 = vmatprep.subr.mxu0 0.0
        %1696 = vmatpush2.xpose.msra.mxu0 0.0
        %1697 = vmatprep.subr.mxu0 0.0
        %1698 = vmatpush2.xpose.msra.mxu0 0.0
        %1699 = vmatprep.subr.mxu0 0.0
        %1700 = vmatpush2.xpose.msra.mxu0 0.0
        %1701 = vmatprep.subr.mxu0 0.0
        %1702 = vmatpush2.xpose.msra.mxu0 0.0
        %1703 = vmatprep.subr.mxu0 0.0
        %1704 = vmatpush2.xpose.msra.mxu0 0.0
        %1705 = vmatprep.subr.mxu0 0.0
        %1706 = vmatpush2.xpose.msra.mxu0 0.0
        %1707 = vmatprep.subr.mxu0 0.0
        %1708 = vmatpush2.xpose.msra.mxu0 0.0
        %1709 = vmatprep.subr.mxu0 0.0
        %1710 = vmatpush2.xpose.msra.mxu0 0.0
        %1711 = vmatprep.subr.mxu0 0.0
        %1712 = vmatpush2.xpose.msra.mxu0 0.0
        %1713 = vmatprep.subr.mxu0 0.0
        %1714 = vmatpush2.xpose.msra.mxu0 0.0
        %1715 = vmatprep.subr.mxu0 0.0
        %1716 = vmatpush2.xpose.msra.mxu0 0.0
        %1717 = vmatprep.subr.mxu0 0.0
        %1718 = vmatpush2.xpose.msra.mxu0 0.0
        %1719 = vmatprep.subr.mxu0 0.0
        %1720 = vmatpush2.xpose.msra.mxu0 0.0
        %1721 = vmatprep.mubr.f32.mxu0 0.0
        %1722 = vmatmul.mubr.f32.gmra.mxu0 %v1653
        %v1723 = vpop.f32.mrf.mxu0
        %v1724 = vadd.f32 0.0, %v1723
        %v1725 = vpop.f32.mrf.mxu0
        %1726 = vdwg.mxu0
        %v1727 = vsel %vm695, %v1641, 0
        %v1729 = vsel %vm695, %v1648, 0
        %1731 = vmatprep.subr.mxu0 0.0
        %1732 = vmatpush1.xpose.msra.mxu0 0.0
        %1733 = vmatprep.subr.mxu0 0.0
        %1734 = vmatpush1.xpose.msra.mxu0 0.0
        %1735 = vmatprep.subr.mxu0 0.0
        %1736 = vmatpush1.xpose.msra.mxu0 0.0
        %1737 = vmatprep.subr.mxu0 0.0
        %1738 = vmatpush1.xpose.msra.mxu0 0.0
        %1739 = vmatprep.subr.mxu0 0.0
        %1740 = vmatpush1.xpose.msra.mxu0 0.0
        %1741 = vmatprep.subr.mxu0 0.0
        %1742 = vmatpush1.xpose.msra.mxu0 0.0
        %1743 = vmatprep.subr.mxu0 0.0
        %1744 = vmatpush1.xpose.msra.mxu0 0.0
        %1745 = vmatprep.subr.mxu0 0.0
        %1746 = vmatpush1.xpose.msra.mxu0 0.0
        %1747 = vmatprep.subr.mxu0 0.0
        %1748 = vmatpush1.xpose.msra.mxu0 0.0
        %1749 = vmatprep.subr.mxu0 0.0
        %1750 = vmatpush1.xpose.msra.mxu0 0.0
        %1751 = vmatprep.subr.mxu0 0.0
        %1752 = vmatpush1.xpose.msra.mxu0 0.0
        %1753 = vmatprep.subr.mxu0 0.0
        %1754 = vmatpush1.xpose.msra.mxu0 0.0
        %1755 = vmatprep.subr.mxu0 0.0
        %1756 = vmatpush1.xpose.msra.mxu0 0.0
        %1757 = vmatprep.subr.mxu0 0.0
        %1758 = vmatpush1.xpose.msra.mxu0 0.0
        %1759 = vmatprep.subr.mxu0 0.0
        %1760 = vmatpush1.xpose.msra.mxu0 0.0
        %1761 = vmatprep.subr.mxu0 0.0
        %1762 = vmatpush1.xpose.msra.mxu0 %v1729
        %1763 = vmatprep.subr.mxu0 0.0
        %1764 = vmatpush2.xpose.msra.mxu0 0.0
        %1765 = vmatprep.subr.mxu0 0.0
        %1766 = vmatpush2.xpose.msra.mxu0 0.0
        %1767 = vmatprep.subr.mxu0 0.0
        %1768 = vmatpush2.xpose.msra.mxu0 0.0
        %1769 = vmatprep.subr.mxu0 0.0
        %1770 = vmatpush2.xpose.msra.mxu0 0.0
        %1771 = vmatprep.subr.mxu0 0.0
        %1772 = vmatpush2.xpose.msra.mxu0 0.0
        %1773 = vmatprep.subr.mxu0 0.0
        %1774 = vmatpush2.xpose.msra.mxu0 0.0
        %1775 = vmatprep.subr.mxu0 0.0
        %1776 = vmatpush2.xpose.msra.mxu0 0.0
        %1777 = vmatprep.subr.mxu0 0.0
        %1778 = vmatpush2.xpose.msra.mxu0 0.0
        %1779 = vmatprep.subr.mxu0 0.0
        %1780 = vmatpush2.xpose.msra.mxu0 0.0
        %1781 = vmatprep.subr.mxu0 0.0
        %1782 = vmatpush2.xpose.msra.mxu0 0.0
        %1783 = vmatprep.subr.mxu0 0.0
        %1784 = vmatpush2.xpose.msra.mxu0 0.0
        %1785 = vmatprep.subr.mxu0 0.0
        %1786 = vmatpush2.xpose.msra.mxu0 0.0
        %1787 = vmatprep.subr.mxu0 0.0
        %1788 = vmatpush2.xpose.msra.mxu0 0.0
        %1789 = vmatprep.subr.mxu0 0.0
        %1790 = vmatpush2.xpose.msra.mxu0 0.0
        %1791 = vmatprep.subr.mxu0 0.0
        %1792 = vmatpush2.xpose.msra.mxu0 0.0
        %1793 = vmatprep.subr.mxu0 0.0
        %1794 = vmatpush2.xpose.msra.mxu0 0.0
        %1795 = vmatprep.mubr.f32.mxu0 0.0
        %1796 = vmatmul.mubr.f32.gmra.mxu0 %v1727
        %v1797 = vpop.f32.mrf.mxu0
        %v1798 = vadd.f32 0.0, %v1797
        %v1799 = vpop.f32.mrf.mxu0
        %1800 = vdwg.mxu0
        %v1801 = vsel %vm695, %v1643, 0
        %v1803 = vsel %vm695, %v1650, 0
        %1805 = vmatprep.subr.mxu0 0.0
        %1806 = vmatpush1.xpose.msra.mxu0 0.0
        %1807 = vmatprep.subr.mxu0 0.0
        %1808 = vmatpush1.xpose.msra.mxu0 0.0
        %1809 = vmatprep.subr.mxu0 0.0
        %1810 = vmatpush1.xpose.msra.mxu0 0.0
        %1811 = vmatprep.subr.mxu0 0.0
        %1812 = vmatpush1.xpose.msra.mxu0 0.0
        %1813 = vmatprep.subr.mxu0 0.0
        %1814 = vmatpush1.xpose.msra.mxu0 0.0
        %1815 = vmatprep.subr.mxu0 0.0
        %1816 = vmatpush1.xpose.msra.mxu0 0.0
        %1817 = vmatprep.subr.mxu0 0.0
        %1818 = vmatpush1.xpose.msra.mxu0 0.0
        %1819 = vmatprep.subr.mxu0 0.0
        %1820 = vmatpush1.xpose.msra.mxu0 0.0
        %1821 = vmatprep.subr.mxu0 0.0
        %1822 = vmatpush1.xpose.msra.mxu0 0.0
        %1823 = vmatprep.subr.mxu0 0.0
        %1824 = vmatpush1.xpose.msra.mxu0 0.0
        %1825 = vmatprep.subr.mxu0 0.0
        %1826 = vmatpush1.xpose.msra.mxu0 0.0
        %1827 = vmatprep.subr.mxu0 0.0
        %1828 = vmatpush1.xpose.msra.mxu0 0.0
        %1829 = vmatprep.subr.mxu0 0.0
        %1830 = vmatpush1.xpose.msra.mxu0 0.0
        %1831 = vmatprep.subr.mxu0 0.0
        %1832 = vmatpush1.xpose.msra.mxu0 0.0
        %1833 = vmatprep.subr.mxu0 0.0
        %1834 = vmatpush1.xpose.msra.mxu0 0.0
        %1835 = vmatprep.subr.mxu0 0.0
        %1836 = vmatpush1.xpose.msra.mxu0 %v1803
        %1837 = vmatprep.subr.mxu0 0.0
        %1838 = vmatpush2.xpose.msra.mxu0 0.0
        %1839 = vmatprep.subr.mxu0 0.0
        %1840 = vmatpush2.xpose.msra.mxu0 0.0
        %1841 = vmatprep.subr.mxu0 0.0
        %1842 = vmatpush2.xpose.msra.mxu0 0.0
        %1843 = vmatprep.subr.mxu0 0.0
        %1844 = vmatpush2.xpose.msra.mxu0 0.0
        %1845 = vmatprep.subr.mxu0 0.0
        %1846 = vmatpush2.xpose.msra.mxu0 0.0
        %1847 = vmatprep.subr.mxu0 0.0
        %1848 = vmatpush2.xpose.msra.mxu0 0.0
        %1849 = vmatprep.subr.mxu0 0.0
        %1850 = vmatpush2.xpose.msra.mxu0 0.0
        %1851 = vmatprep.subr.mxu0 0.0
        %1852 = vmatpush2.xpose.msra.mxu0 0.0
        %1853 = vmatprep.subr.mxu0 0.0
        %1854 = vmatpush2.xpose.msra.mxu0 0.0
        %1855 = vmatprep.subr.mxu0 0.0
        %1856 = vmatpush2.xpose.msra.mxu0 0.0
        %1857 = vmatprep.subr.mxu0 0.0
        %1858 = vmatpush2.xpose.msra.mxu0 0.0
        %1859 = vmatprep.subr.mxu0 0.0
        %1860 = vmatpush2.xpose.msra.mxu0 0.0
        %1861 = vmatprep.subr.mxu0 0.0
        %1862 = vmatpush2.xpose.msra.mxu0 0.0
        %1863 = vmatprep.subr.mxu0 0.0
        %1864 = vmatpush2.xpose.msra.mxu0 0.0
        %1865 = vmatprep.subr.mxu0 0.0
        %1866 = vmatpush2.xpose.msra.mxu0 0.0
        %1867 = vmatprep.subr.mxu0 0.0
        %1868 = vmatpush2.xpose.msra.mxu0 0.0
        %1869 = vmatprep.mubr.f32.mxu0 0.0
        %1870 = vmatmul.mubr.f32.gmra.mxu0 %v1801
        %v1871 = vpop.f32.mrf.mxu0
        %v1872 = vadd.f32 0.0, %v1871
        %v1873 = vpop.f32.mrf.mxu0
        %1874 = vdwg.mxu0
        %v1875 = vsel %vm695, %v1645, 0
        %v1877 = vsel %vm695, %v1652, 0
        %1879 = vmatprep.subr.mxu0 0.0
        %1880 = vmatpush1.xpose.msra.mxu0 0.0
        %1881 = vmatprep.subr.mxu0 0.0
        %1882 = vmatpush1.xpose.msra.mxu0 0.0
        %1883 = vmatprep.subr.mxu0 0.0
        %1884 = vmatpush1.xpose.msra.mxu0 0.0
        %1885 = vmatprep.subr.mxu0 0.0
        %1886 = vmatpush1.xpose.msra.mxu0 0.0
        %1887 = vmatprep.subr.mxu0 0.0
        %1888 = vmatpush1.xpose.msra.mxu0 0.0
        %1889 = vmatprep.subr.mxu0 0.0
        %1890 = vmatpush1.xpose.msra.mxu0 0.0
        %1891 = vmatprep.subr.mxu0 0.0
        %1892 = vmatpush1.xpose.msra.mxu0 0.0
        %1893 = vmatprep.subr.mxu0 0.0
        %1894 = vmatpush1.xpose.msra.mxu0 0.0
        %1895 = vmatprep.subr.mxu0 0.0
        %1896 = vmatpush1.xpose.msra.mxu0 0.0
        %1897 = vmatprep.subr.mxu0 0.0
        %1898 = vmatpush1.xpose.msra.mxu0 0.0
        %1899 = vmatprep.subr.mxu0 0.0
        %1900 = vmatpush1.xpose.msra.mxu0 0.0
        %1901 = vmatprep.subr.mxu0 0.0
        %1902 = vmatpush1.xpose.msra.mxu0 0.0
        %1903 = vmatprep.subr.mxu0 0.0
        %1904 = vmatpush1.xpose.msra.mxu0 0.0
        %1905 = vmatprep.subr.mxu0 0.0
        %1906 = vmatpush1.xpose.msra.mxu0 0.0
        %1907 = vmatprep.subr.mxu0 0.0
        %1908 = vmatpush1.xpose.msra.mxu0 0.0
        %1909 = vmatprep.subr.mxu0 0.0
        %1910 = vmatpush1.xpose.msra.mxu0 %v1877
        %1911 = vmatprep.subr.mxu0 0.0
        %1912 = vmatpush2.xpose.msra.mxu0 0.0
        %1913 = vmatprep.subr.mxu0 0.0
        %1914 = vmatpush2.xpose.msra.mxu0 0.0
        %1915 = vmatprep.subr.mxu0 0.0
        %1916 = vmatpush2.xpose.msra.mxu0 0.0
        %1917 = vmatprep.subr.mxu0 0.0
        %1918 = vmatpush2.xpose.msra.mxu0 0.0
        %1919 = vmatprep.subr.mxu0 0.0
        %1920 = vmatpush2.xpose.msra.mxu0 0.0
        %1921 = vmatprep.subr.mxu0 0.0
        %1922 = vmatpush2.xpose.msra.mxu0 0.0
        %1923 = vmatprep.subr.mxu0 0.0
        %1924 = vmatpush2.xpose.msra.mxu0 0.0
        %1925 = vmatprep.subr.mxu0 0.0
        %1926 = vmatpush2.xpose.msra.mxu0 0.0
        %1927 = vmatprep.subr.mxu0 0.0
        %1928 = vmatpush2.xpose.msra.mxu0 0.0
        %1929 = vmatprep.subr.mxu0 0.0
        %1930 = vmatpush2.xpose.msra.mxu0 0.0
        %1931 = vmatprep.subr.mxu0 0.0
        %1932 = vmatpush2.xpose.msra.mxu0 0.0
        %1933 = vmatprep.subr.mxu0 0.0
        %1934 = vmatpush2.xpose.msra.mxu0 0.0
        %1935 = vmatprep.subr.mxu0 0.0
        %1936 = vmatpush2.xpose.msra.mxu0 0.0
        %1937 = vmatprep.subr.mxu0 0.0
        %1938 = vmatpush2.xpose.msra.mxu0 0.0
        %1939 = vmatprep.subr.mxu0 0.0
        %1940 = vmatpush2.xpose.msra.mxu0 0.0
        %1941 = vmatprep.subr.mxu0 0.0
        %1942 = vmatpush2.xpose.msra.mxu0 0.0
        %1943 = vmatprep.mubr.f32.mxu0 0.0
        %1944 = vmatmul.mubr.f32.gmra.mxu0 %v1875
        %v1945 = vpop.f32.mrf.mxu0
        %v1946 = vadd.f32 0.0, %v1945
        %v1947 = vpop.f32.mrf.mxu0
        %1948 = vdwg.mxu0
        %v1949 = vmul.f32 %v1724, 0.35355338
        %v1950 = vmul.f32 %v1798, 0.35355338
        %v1951 = vmul.f32 %v1872, 0.35355338
        %v1952 = vmul.f32 %v1946, 0.35355338
        %v1953 = vsel %vm695, %v1949, -inf
        %1954 = vmax.xlane.f32.xlu0 %v1953
        %v1955 = vpop.xlane.xlu0 %1954
        %v1956 = vsel %vm695, %v1950, -inf
        %1957 = vmax.xlane.f32.xlu0 %v1956
        %v1958 = vpop.xlane.xlu0 %1957
        %v1959 = vsel %vm695, %v1951, -inf
        %1960 = vmax.xlane.f32.xlu0 %v1959
        %v1961 = vpop.xlane.xlu0 %1960
        %v1962 = vsel %vm695, %v1952, -inf
        %1963 = vmax.xlane.f32.xlu0 %v1962
        %v1964 = vpop.xlane.xlu0 %1963
        %v1965 = vsub.f32 %v1949, %v1955
        %v1966 = vsub.f32 %v1950, %v1958
        %v1967 = vsub.f32 %v1951, %v1961
        %v1968 = vsub.f32 %v1952, %v1964
        %v1969 = vmul.f32 %v1965, 1.442695
        %v1970 = vpow.pop %v1969
        %v1971 = vmul.f32 %v1966, 1.442695
        %v1972 = vpow.pop %v1971
        %v1973 = vmul.f32 %v1967, 1.442695
        %v1974 = vpow.pop %v1973
        %v1975 = vmul.f32 %v1968, 1.442695
        %v1976 = vpow.pop %v1975
        %v1977 = vsel %vm695, %v1970, 0.0
        %1978 = vadd.xlane.f32.xlu0 %v1977
        %v1979 = vpop.xlane.xlu0 %1978
        %v1980 = vsel %vm695, %v1972, 0.0
        %1981 = vadd.xlane.f32.xlu0 %v1980
        %v1982 = vpop.xlane.xlu0 %1981
        %v1983 = vsel %vm695, %v1974, 0.0
        %1984 = vadd.xlane.f32.xlu0 %v1983
        %v1985 = vpop.xlane.xlu0 %1984
        %v1986 = vsel %vm695, %v1976, 0.0
        %1987 = vadd.xlane.f32.xlu0 %v1986
        %v1988 = vpop.xlane.xlu0 %1987
        %v1989 = vrcp.pop %v1979
        %v1990 = vrcp.pop %v1982
        %v1991 = vrcp.pop %v1985
        %v1992 = vrcp.pop %v1988
        %v1993 = vmul.f32 %v1970, %v1989
        %v1994 = vmul.f32 %v1972, %v1990
        %v1995 = vmul.f32 %v1974, %v1991
        %v1996 = vmul.f32 %v1976, %v1992
        %1997 = vrot.lane.b32.xlu0 %v1636, 96
        %v1998 = vpop.permute.xlu0 %1997
        %v2001 = vsel %vm695, %v1993, 0
        %2003 = vmatprep.subr.mxu0 0.0
        %2004 = vmatpush1.msra.mxu0 0.0
        %2005 = vmatprep.subr.mxu0 0.0
        %2006 = vmatpush1.msra.mxu0 0.0
        %2007 = vmatprep.subr.mxu0 0.0
        %2008 = vmatpush1.msra.mxu0 0.0
        %2009 = vmatprep.subr.mxu0 0.0
        %2010 = vmatpush1.msra.mxu0 0.0
        %2011 = vmatprep.subr.mxu0 0.0
        %2012 = vmatpush1.msra.mxu0 0.0
        %2013 = vmatprep.subr.mxu0 0.0
        %2014 = vmatpush1.msra.mxu0 0.0
        %2015 = vmatprep.subr.mxu0 0.0
        %2016 = vmatpush1.msra.mxu0 0.0
        %2017 = vmatprep.subr.mxu0 0.0
        %2018 = vmatpush1.msra.mxu0 0.0
        %2019 = vmatprep.subr.mxu0 0.0
        %2020 = vmatpush1.msra.mxu0 0.0
        %2021 = vmatprep.subr.mxu0 0.0
        %2022 = vmatpush1.msra.mxu0 0.0
        %2023 = vmatprep.subr.mxu0 0.0
        %2024 = vmatpush1.msra.mxu0 0.0
        %2025 = vmatprep.subr.mxu0 0.0
        %2026 = vmatpush1.msra.mxu0 0.0
        %2027 = vmatprep.subr.mxu0 0.0
        %2028 = vmatpush1.msra.mxu0 0.0
        %2029 = vmatprep.subr.mxu0 0.0
        %2030 = vmatpush1.msra.mxu0 0.0
        %2031 = vmatprep.subr.mxu0 0.0
        %2032 = vmatpush1.msra.mxu0 0.0
        %2033 = vmatprep.subr.mxu0 0.0
        %2034 = vmatpush1.msra.mxu0 %v1998
        %2035 = vmatprep.subr.mxu0 0.0
        %2036 = vmatpush2.msra.mxu0 0.0
        %2037 = vmatprep.subr.mxu0 0.0
        %2038 = vmatpush2.msra.mxu0 0.0
        %2039 = vmatprep.subr.mxu0 0.0
        %2040 = vmatpush2.msra.mxu0 0.0
        %2041 = vmatprep.subr.mxu0 0.0
        %2042 = vmatpush2.msra.mxu0 0.0
        %2043 = vmatprep.subr.mxu0 0.0
        %2044 = vmatpush2.msra.mxu0 0.0
        %2045 = vmatprep.subr.mxu0 0.0
        %2046 = vmatpush2.msra.mxu0 0.0
        %2047 = vmatprep.subr.mxu0 0.0
        %2048 = vmatpush2.msra.mxu0 0.0
        %2049 = vmatprep.subr.mxu0 0.0
        %2050 = vmatpush2.msra.mxu0 0.0
        %2051 = vmatprep.subr.mxu0 0.0
        %2052 = vmatpush2.msra.mxu0 0.0
        %2053 = vmatprep.subr.mxu0 0.0
        %2054 = vmatpush2.msra.mxu0 0.0
        %2055 = vmatprep.subr.mxu0 0.0
        %2056 = vmatpush2.msra.mxu0 0.0
        %2057 = vmatprep.subr.mxu0 0.0
        %2058 = vmatpush2.msra.mxu0 0.0
        %2059 = vmatprep.subr.mxu0 0.0
        %2060 = vmatpush2.msra.mxu0 0.0
        %2061 = vmatprep.subr.mxu0 0.0
        %2062 = vmatpush2.msra.mxu0 0.0
        %2063 = vmatprep.subr.mxu0 0.0
        %2064 = vmatpush2.msra.mxu0 0.0
        %2065 = vmatprep.subr.mxu0 0.0
        %2066 = vmatpush2.msra.mxu0 0.0
        %2067 = vmatprep.mubr.f32.mxu0 0.0
        %2068 = vmatmul.mubr.f32.gmra.mxu0 %v2001
        %v2069 = vpop.f32.mrf.mxu0
        %v2070 = vadd.f32 0.0, %v2069
        %v2071 = vpop.f32.mrf.mxu0
        %2072 = vdwg.mxu0
        %2073 = vrot.lane.b32.xlu0 %v1648, 96
        %v2074 = vpop.permute.xlu0 %2073
        %v2077 = vsel %vm695, %v1994, 0
        %2079 = vmatprep.subr.mxu0 0.0
        %2080 = vmatpush1.msra.mxu0 0.0
        %2081 = vmatprep.subr.mxu0 0.0
        %2082 = vmatpush1.msra.mxu0 0.0
        %2083 = vmatprep.subr.mxu0 0.0
        %2084 = vmatpush1.msra.mxu0 0.0
        %2085 = vmatprep.subr.mxu0 0.0
        %2086 = vmatpush1.msra.mxu0 0.0
        %2087 = vmatprep.subr.mxu0 0.0
        %2088 = vmatpush1.msra.mxu0 0.0
        %2089 = vmatprep.subr.mxu0 0.0
        %2090 = vmatpush1.msra.mxu0 0.0
        %2091 = vmatprep.subr.mxu0 0.0
        %2092 = vmatpush1.msra.mxu0 0.0
        %2093 = vmatprep.subr.mxu0 0.0
        %2094 = vmatpush1.msra.mxu0 0.0
        %2095 = vmatprep.subr.mxu0 0.0
        %2096 = vmatpush1.msra.mxu0 0.0
        %2097 = vmatprep.subr.mxu0 0.0
        %2098 = vmatpush1.msra.mxu0 0.0
        %2099 = vmatprep.subr.mxu0 0.0
        %2100 = vmatpush1.msra.mxu0 0.0
        %2101 = vmatprep.subr.mxu0 0.0
        %2102 = vmatpush1.msra.mxu0 0.0
        %2103 = vmatprep.subr.mxu0 0.0
        %2104 = vmatpush1.msra.mxu0 0.0
        %2105 = vmatprep.subr.mxu0 0.0
        %2106 = vmatpush1.msra.mxu0 0.0
        %2107 = vmatprep.subr.mxu0 0.0
        %2108 = vmatpush1.msra.mxu0 0.0
        %2109 = vmatprep.subr.mxu0 0.0
        %2110 = vmatpush1.msra.mxu0 %v2074
        %2111 = vmatprep.subr.mxu0 0.0
        %2112 = vmatpush2.msra.mxu0 0.0
        %2113 = vmatprep.subr.mxu0 0.0
        %2114 = vmatpush2.msra.mxu0 0.0
        %2115 = vmatprep.subr.mxu0 0.0
        %2116 = vmatpush2.msra.mxu0 0.0
        %2117 = vmatprep.subr.mxu0 0.0
        %2118 = vmatpush2.msra.mxu0 0.0
        %2119 = vmatprep.subr.mxu0 0.0
        %2120 = vmatpush2.msra.mxu0 0.0
        %2121 = vmatprep.subr.mxu0 0.0
        %2122 = vmatpush2.msra.mxu0 0.0
        %2123 = vmatprep.subr.mxu0 0.0
        %2124 = vmatpush2.msra.mxu0 0.0
        %2125 = vmatprep.subr.mxu0 0.0
        %2126 = vmatpush2.msra.mxu0 0.0
        %2127 = vmatprep.subr.mxu0 0.0
        %2128 = vmatpush2.msra.mxu0 0.0
        %2129 = vmatprep.subr.mxu0 0.0
        %2130 = vmatpush2.msra.mxu0 0.0
        %2131 = vmatprep.subr.mxu0 0.0
        %2132 = vmatpush2.msra.mxu0 0.0
        %2133 = vmatprep.subr.mxu0 0.0
        %2134 = vmatpush2.msra.mxu0 0.0
        %2135 = vmatprep.subr.mxu0 0.0
        %2136 = vmatpush2.msra.mxu0 0.0
        %2137 = vmatprep.subr.mxu0 0.0
        %2138 = vmatpush2.msra.mxu0 0.0
        %2139 = vmatprep.subr.mxu0 0.0
        %2140 = vmatpush2.msra.mxu0 0.0
        %2141 = vmatprep.subr.mxu0 0.0
        %2142 = vmatpush2.msra.mxu0 0.0
        %2143 = vmatprep.mubr.f32.mxu0 0.0
        %2144 = vmatmul.mubr.f32.gmra.mxu0 %v2077
        %v2145 = vpop.f32.mrf.mxu0
        %v2146 = vadd.f32 0.0, %v2145
        %v2147 = vpop.f32.mrf.mxu0
        %2148 = vdwg.mxu0
        %2149 = vrot.lane.b32.xlu0 %v1650, 96
        %v2150 = vpop.permute.xlu0 %2149
        %v2153 = vsel %vm695, %v1995, 0
        %2155 = vmatprep.subr.mxu0 0.0
        %2156 = vmatpush1.msra.mxu0 0.0
        %2157 = vmatprep.subr.mxu0 0.0
        %2158 = vmatpush1.msra.mxu0 0.0
        %2159 = vmatprep.subr.mxu0 0.0
        %2160 = vmatpush1.msra.mxu0 0.0
        %2161 = vmatprep.subr.mxu0 0.0
        %2162 = vmatpush1.msra.mxu0 0.0
        %2163 = vmatprep.subr.mxu0 0.0
        %2164 = vmatpush1.msra.mxu0 0.0
        %2165 = vmatprep.subr.mxu0 0.0
        %2166 = vmatpush1.msra.mxu0 0.0
        %2167 = vmatprep.subr.mxu0 0.0
        %2168 = vmatpush1.msra.mxu0 0.0
        %2169 = vmatprep.subr.mxu0 0.0
        %2170 = vmatpush1.msra.mxu0 0.0
        %2171 = vmatprep.subr.mxu0 0.0
        %2172 = vmatpush1.msra.mxu0 0.0
        %2173 = vmatprep.subr.mxu0 0.0
        %2174 = vmatpush1.msra.mxu0 0.0
        %2175 = vmatprep.subr.mxu0 0.0
        %2176 = vmatpush1.msra.mxu0 0.0
        %2177 = vmatprep.subr.mxu0 0.0
        %2178 = vmatpush1.msra.mxu0 0.0
        %2179 = vmatprep.subr.mxu0 0.0
        %2180 = vmatpush1.msra.mxu0 0.0
        %2181 = vmatprep.subr.mxu0 0.0
        %2182 = vmatpush1.msra.mxu0 0.0
        %2183 = vmatprep.subr.mxu0 0.0
        %2184 = vmatpush1.msra.mxu0 0.0
        %2185 = vmatprep.subr.mxu0 0.0
        %2186 = vmatpush1.msra.mxu0 %v2150
        %2187 = vmatprep.subr.mxu0 0.0
        %2188 = vmatpush2.msra.mxu0 0.0
        %2189 = vmatprep.subr.mxu0 0.0
        %2190 = vmatpush2.msra.mxu0 0.0
        %2191 = vmatprep.subr.mxu0 0.0
        %2192 = vmatpush2.msra.mxu0 0.0
        %2193 = vmatprep.subr.mxu0 0.0
        %2194 = vmatpush2.msra.mxu0 0.0
        %2195 = vmatprep.subr.mxu0 0.0
        %2196 = vmatpush2.msra.mxu0 0.0
        %2197 = vmatprep.subr.mxu0 0.0
        %2198 = vmatpush2.msra.mxu0 0.0
        %2199 = vmatprep.subr.mxu0 0.0
        %2200 = vmatpush2.msra.mxu0 0.0
        %2201 = vmatprep.subr.mxu0 0.0
        %2202 = vmatpush2.msra.mxu0 0.0
        %2203 = vmatprep.subr.mxu0 0.0
        %2204 = vmatpush2.msra.mxu0 0.0
        %2205 = vmatprep.subr.mxu0 0.0
        %2206 = vmatpush2.msra.mxu0 0.0
        %2207 = vmatprep.subr.mxu0 0.0
        %2208 = vmatpush2.msra.mxu0 0.0
        %2209 = vmatprep.subr.mxu0 0.0
        %2210 = vmatpush2.msra.mxu0 0.0
        %2211 = vmatprep.subr.mxu0 0.0
        %2212 = vmatpush2.msra.mxu0 0.0
        %2213 = vmatprep.subr.mxu0 0.0
        %2214 = vmatpush2.msra.mxu0 0.0
        %2215 = vmatprep.subr.mxu0 0.0
        %2216 = vmatpush2.msra.mxu0 0.0
        %2217 = vmatprep.subr.mxu0 0.0
        %2218 = vmatpush2.msra.mxu0 0.0
        %2219 = vmatprep.mubr.f32.mxu0 0.0
        %2220 = vmatmul.mubr.f32.gmra.mxu0 %v2153
        %v2221 = vpop.f32.mrf.mxu0
        %v2222 = vadd.f32 0.0, %v2221
        %v2223 = vpop.f32.mrf.mxu0
        %2224 = vdwg.mxu0
        %2225 = vrot.lane.b32.xlu0 %v1652, 96
        %v2226 = vpop.permute.xlu0 %2225
        %v2229 = vsel %vm695, %v1996, 0
        %2231 = vmatprep.subr.mxu0 0.0
        %2232 = vmatpush1.msra.mxu0 0.0
        %2233 = vmatprep.subr.mxu0 0.0
        %2234 = vmatpush1.msra.mxu0 0.0
        %2235 = vmatprep.subr.mxu0 0.0
        %2236 = vmatpush1.msra.mxu0 0.0
        %2237 = vmatprep.subr.mxu0 0.0
        %2238 = vmatpush1.msra.mxu0 0.0
        %2239 = vmatprep.subr.mxu0 0.0
        %2240 = vmatpush1.msra.mxu0 0.0
        %2241 = vmatprep.subr.mxu0 0.0
        %2242 = vmatpush1.msra.mxu0 0.0
        %2243 = vmatprep.subr.mxu0 0.0
        %2244 = vmatpush1.msra.mxu0 0.0
        %2245 = vmatprep.subr.mxu0 0.0
        %2246 = vmatpush1.msra.mxu0 0.0
        %2247 = vmatprep.subr.mxu0 0.0
        %2248 = vmatpush1.msra.mxu0 0.0
        %2249 = vmatprep.subr.mxu0 0.0
        %2250 = vmatpush1.msra.mxu0 0.0
        %2251 = vmatprep.subr.mxu0 0.0
        %2252 = vmatpush1.msra.mxu0 0.0
        %2253 = vmatprep.subr.mxu0 0.0
        %2254 = vmatpush1.msra.mxu0 0.0
        %2255 = vmatprep.subr.mxu0 0.0
        %2256 = vmatpush1.msra.mxu0 0.0
        %2257 = vmatprep.subr.mxu0 0.0
        %2258 = vmatpush1.msra.mxu0 0.0
        %2259 = vmatprep.subr.mxu0 0.0
        %2260 = vmatpush1.msra.mxu0 0.0
        %2261 = vmatprep.subr.mxu0 0.0
        %2262 = vmatpush1.msra.mxu0 %v2226
        %2263 = vmatprep.subr.mxu0 0.0
        %2264 = vmatpush2.msra.mxu0 0.0
        %2265 = vmatprep.subr.mxu0 0.0
        %2266 = vmatpush2.msra.mxu0 0.0
        %2267 = vmatprep.subr.mxu0 0.0
        %2268 = vmatpush2.msra.mxu0 0.0
        %2269 = vmatprep.subr.mxu0 0.0
        %2270 = vmatpush2.msra.mxu0 0.0
        %2271 = vmatprep.subr.mxu0 0.0
        %2272 = vmatpush2.msra.mxu0 0.0
        %2273 = vmatprep.subr.mxu0 0.0
        %2274 = vmatpush2.msra.mxu0 0.0
        %2275 = vmatprep.subr.mxu0 0.0
        %2276 = vmatpush2.msra.mxu0 0.0
        %2277 = vmatprep.subr.mxu0 0.0
        %2278 = vmatpush2.msra.mxu0 0.0
        %2279 = vmatprep.subr.mxu0 0.0
        %2280 = vmatpush2.msra.mxu0 0.0
        %2281 = vmatprep.subr.mxu0 0.0
        %2282 = vmatpush2.msra.mxu0 0.0
        %2283 = vmatprep.subr.mxu0 0.0
        %2284 = vmatpush2.msra.mxu0 0.0
        %2285 = vmatprep.subr.mxu0 0.0
        %2286 = vmatpush2.msra.mxu0 0.0
        %2287 = vmatprep.subr.mxu0 0.0
        %2288 = vmatpush2.msra.mxu0 0.0
        %2289 = vmatprep.subr.mxu0 0.0
        %2290 = vmatpush2.msra.mxu0 0.0
        %2291 = vmatprep.subr.mxu0 0.0
        %2292 = vmatpush2.msra.mxu0 0.0
        %2293 = vmatprep.subr.mxu0 0.0
        %2294 = vmatpush2.msra.mxu0 0.0
        %2295 = vmatprep.mubr.f32.mxu0 0.0
        %2296 = vmatmul.mubr.f32.gmra.mxu0 %v2229
        %v2297 = vpop.f32.mrf.mxu0
        %v2298 = vadd.f32 0.0, %v2297
        %v2299 = vpop.f32.mrf.mxu0
        %2300 = vdwg.mxu0
        %2302 = vrot.lane.b32.xlu0 %v2146, 8
        %v2303 = vpop.permute.xlu0 %2302
        %2306 = vrot.lane.b32.xlu0 %v2222, 16
        %v2307 = vpop.permute.xlu0 %2306
        %2310 = vrot.lane.b32.xlu0 %v2298, 24
        %v2311 = vpop.permute.xlu0 %2310
        %v2313 = vsel %vm695, %v2070, %v2303
        %v2314 = vsel %vm1357, %v2313, %v2307
        %v2315 = vsel %vm1359, %v2314, %v2311
        %s2316 = scalar_lea.vmem %s7, 32
        %v2317 = vld [vmem:[%s2316] sm:$0xff]
        %v2318 = vld [vmem:[%s2316 + $0x8] sm:$0xff]
        %v2319 = vld [vmem:[%s2316 + $0x10] sm:$0xff]
        %v2320 = vld [vmem:[%s2316 + $0x18] sm:$0xff]
        %v2321 = vlaneseq
        %v2322 = vshrl.u32 %v2321, 7
        %v2323 = vsub.s32 1, %v2322
        %v2324 = vrot.slane %v511, %v2323
        %v2326 = vsel %vm523, %v2315, 0
        %2328 = vmatprep.subr.mxu0 0.0
        %2329 = vmatpush1.msra.mxu0 0.0
        %2330 = vmatprep.subr.mxu0 0.0
        %2331 = vmatpush1.msra.mxu0 0.0
        %2332 = vmatprep.subr.mxu0 0.0
        %2333 = vmatpush1.msra.mxu0 0.0
        %2334 = vmatprep.subr.mxu0 0.0
        %2335 = vmatpush1.msra.mxu0 0.0
        %2336 = vmatprep.subr.mxu0 0.0
        %2337 = vmatpush1.msra.mxu0 0.0
        %2338 = vmatprep.subr.mxu0 0.0
        %2339 = vmatpush1.msra.mxu0 0.0
        %2340 = vmatprep.subr.mxu0 0.0
        %2341 = vmatpush1.msra.mxu0 0.0
        %2342 = vmatprep.subr.mxu0 0.0
        %2343 = vmatpush1.msra.mxu0 0.0
        %2344 = vmatprep.subr.mxu0 0.0
        %2345 = vmatpush1.msra.mxu0 0.0
        %2346 = vmatprep.subr.mxu0 0.0
        %2347 = vmatpush1.msra.mxu0 0.0
        %2348 = vmatprep.subr.mxu0 0.0
        %2349 = vmatpush1.msra.mxu0 0.0
        %2350 = vmatprep.subr.mxu0 0.0
        %2351 = vmatpush1.msra.mxu0 0.0
        %2352 = vmatprep.subr.mxu0 0.0
        %2353 = vmatpush1.msra.mxu0 %v2320
        %2354 = vmatprep.subr.mxu0 0.0
        %2355 = vmatpush1.msra.mxu0 %v2319
        %2356 = vmatprep.subr.mxu0 0.0
        %2357 = vmatpush1.msra.mxu0 %v2318
        %2358 = vmatprep.subr.mxu0 0.0
        %2359 = vmatpush1.msra.mxu0 %v2317
        %2360 = vmatprep.subr.mxu0 0.0
        %2361 = vmatpush2.msra.mxu0 0.0
        %2362 = vmatprep.subr.mxu0 0.0
        %2363 = vmatpush2.msra.mxu0 0.0
        %2364 = vmatprep.subr.mxu0 0.0
        %2365 = vmatpush2.msra.mxu0 0.0
        %2366 = vmatprep.subr.mxu0 0.0
        %2367 = vmatpush2.msra.mxu0 0.0
        %2368 = vmatprep.subr.mxu0 0.0
        %2369 = vmatpush2.msra.mxu0 0.0
        %2370 = vmatprep.subr.mxu0 0.0
        %2371 = vmatpush2.msra.mxu0 0.0
        %2372 = vmatprep.subr.mxu0 0.0
        %2373 = vmatpush2.msra.mxu0 0.0
        %2374 = vmatprep.subr.mxu0 0.0
        %2375 = vmatpush2.msra.mxu0 0.0
        %2376 = vmatprep.subr.mxu0 0.0
        %2377 = vmatpush2.msra.mxu0 0.0
        %2378 = vmatprep.subr.mxu0 0.0
        %2379 = vmatpush2.msra.mxu0 0.0
        %2380 = vmatprep.subr.mxu0 0.0
        %2381 = vmatpush2.msra.mxu0 0.0
        %2382 = vmatprep.subr.mxu0 0.0
        %2383 = vmatpush2.msra.mxu0 0.0
        %2384 = vmatprep.subr.mxu0 0.0
        %2385 = vmatpush2.msra.mxu0 0.0
        %2386 = vmatprep.subr.mxu0 0.0
        %2387 = vmatpush2.msra.mxu0 0.0
        %2388 = vmatprep.subr.mxu0 0.0
        %2389 = vmatpush2.msra.mxu0 0.0
        %2390 = vmatprep.subr.mxu0 0.0
        %2391 = vmatpush2.msra.mxu0 0.0
        %2392 = vmatprep.mubr.f32.mxu0 0.0
        %2393 = vmatmul.mubr.f32.gmra.mxu0 %v2326
        %v2394 = vpop.f32.mrf.mxu0
        %v2395 = vadd.f32 %v2324, %v2394
        %v2396 = vpop.f32.mrf.mxu0
        %2397 = vdwg.mxu0
        %v2398 = vadd.f32 %v1466, %v2395
        %v2399 = vsel %vm523, %v2398, 0.0
        %2400 = vadd.xlane.f32.xlu0 %v2399
        %v2401 = vpop.xlane.xlu0 %2400
        %v2402 = vmul.f32 %v2401, %v1446
        %v2403 = vsub.f32 %v2398, %v2402
        %v2404 = vmul.f32 %v2403, %v2403
        %v2405 = vsel %vm523, %v2404, 0.0
        %2406 = vadd.xlane.f32.xlu0 %v2405
        %v2407 = vpop.xlane.xlu0 %2406
        %v2408 = vmul.f32 %v2407, %v1446
        %v2409 = vadd.f32 %v2408, 1e-05
        %v2410 = vrsqrt.pop %v2409
        %v2411 = vmul.f32 %v2403, %v2410
        %v2412 = vmul.f32 %v2411, %v1460
        %v2413 = vadd.f32 %v2412, %v1465
        %v2414 = vld [vmem:[%s8] sm:$0xff]
        %v2415 = vld [vmem:[%s8 + $0x8] sm:$0xff]
        %v2416 = vld [vmem:[%s8 + $0x10] sm:$0xff]
        %v2417 = vld [vmem:[%s8 + $0x18] sm:$0xff]
        %v2418 = vld [vmem:[%s9] sm:$0x1]
        %v2420 = vlaneseq
        %v2421 = vshrl.u32 %v2420, 7
        %v2422 = vsub.s32 0, %v2421
        %v2423 = vrot.slane %v2418, %v2422
        %v2426 = vsel %vm523, %v2413, 0
        %2428 = vmatprep.subr.mxu0 0.0
        %2429 = vmatpush1.msra.mxu0 0.0
        %2430 = vmatprep.subr.mxu0 0.0
        %2431 = vmatpush1.msra.mxu0 0.0
        %2432 = vmatprep.subr.mxu0 0.0
        %2433 = vmatpush1.msra.mxu0 0.0
        %2434 = vmatprep.subr.mxu0 0.0
        %2435 = vmatpush1.msra.mxu0 0.0
        %2436 = vmatprep.subr.mxu0 0.0
        %2437 = vmatpush1.msra.mxu0 0.0
        %2438 = vmatprep.subr.mxu0 0.0
        %2439 = vmatpush1.msra.mxu0 0.0
        %2440 = vmatprep.subr.mxu0 0.0
        %2441 = vmatpush1.msra.mxu0 0.0
        %2442 = vmatprep.subr.mxu0 0.0
        %2443 = vmatpush1.msra.mxu0 0.0
        %2444 = vmatprep.subr.mxu0 0.0
        %2445 = vmatpush1.msra.mxu0 0.0
        %2446 = vmatprep.subr.mxu0 0.0
        %2447 = vmatpush1.msra.mxu0 0.0
        %2448 = vmatprep.subr.mxu0 0.0
        %2449 = vmatpush1.msra.mxu0 0.0
        %2450 = vmatprep.subr.mxu0 0.0
        %2451 = vmatpush1.msra.mxu0 0.0
        %2452 = vmatprep.subr.mxu0 0.0
        %2453 = vmatpush1.msra.mxu0 %v2417
        %2454 = vmatprep.subr.mxu0 0.0
        %2455 = vmatpush1.msra.mxu0 %v2416
        %2456 = vmatprep.subr.mxu0 0.0
        %2457 = vmatpush1.msra.mxu0 %v2415
        %2458 = vmatprep.subr.mxu0 0.0
        %2459 = vmatpush1.msra.mxu0 %v2414
        %2460 = vmatprep.subr.mxu0 0.0
        %2461 = vmatpush2.msra.mxu0 0.0
        %2462 = vmatprep.subr.mxu0 0.0
        %2463 = vmatpush2.msra.mxu0 0.0
        %2464 = vmatprep.subr.mxu0 0.0
        %2465 = vmatpush2.msra.mxu0 0.0
        %2466 = vmatprep.subr.mxu0 0.0
        %2467 = vmatpush2.msra.mxu0 0.0
        %2468 = vmatprep.subr.mxu0 0.0
        %2469 = vmatpush2.msra.mxu0 0.0
        %2470 = vmatprep.subr.mxu0 0.0
        %2471 = vmatpush2.msra.mxu0 0.0
        %2472 = vmatprep.subr.mxu0 0.0
        %2473 = vmatpush2.msra.mxu0 0.0
        %2474 = vmatprep.subr.mxu0 0.0
        %2475 = vmatpush2.msra.mxu0 0.0
        %2476 = vmatprep.subr.mxu0 0.0
        %2477 = vmatpush2.msra.mxu0 0.0
        %2478 = vmatprep.subr.mxu0 0.0
        %2479 = vmatpush2.msra.mxu0 0.0
        %2480 = vmatprep.subr.mxu0 0.0
        %2481 = vmatpush2.msra.mxu0 0.0
        %2482 = vmatprep.subr.mxu0 0.0
        %2483 = vmatpush2.msra.mxu0 0.0
        %2484 = vmatprep.subr.mxu0 0.0
        %2485 = vmatpush2.msra.mxu0 0.0
        %2486 = vmatprep.subr.mxu0 0.0
        %2487 = vmatpush2.msra.mxu0 0.0
        %2488 = vmatprep.subr.mxu0 0.0
        %2489 = vmatpush2.msra.mxu0 0.0
        %2490 = vmatprep.subr.mxu0 0.0
        %2491 = vmatpush2.msra.mxu0 0.0
        %2492 = vmatprep.mubr.f32.mxu0 0.0
        %2493 = vmatmul.mubr.f32.gmra.mxu0 %v2426
        %v2494 = vpop.f32.mrf.mxu0
        %v2495 = vadd.f32 %v2423, %v2494
        %v2496 = vpop.f32.mrf.mxu0
        %2497 = vdwg.mxu0
        %v2498 = vmax.f32 %v2495, 0.0
        %v2499 = vld [vmem:[%s10] sm:$0xff]
        %v2500 = vld [vmem:[%s10 + $0x8] sm:$0xff]
        %v2501 = vld [vmem:[%s10 + $0x10] sm:$0xff]
        %v2502 = vld [vmem:[%s10 + $0x18] sm:$0xff]
        %v2503 = vld [vmem:[%s10 + $0x20] sm:$0xff]
        %v2504 = vld [vmem:[%s10 + $0x28] sm:$0xff]
        %v2505 = vld [vmem:[%s10 + $0x30] sm:$0xff]
        %v2506 = vld [vmem:[%s10 + $0x38] sm:$0xff]
        %v2507 = vlaneseq
        %v2508 = vshrl.u32 %v2507, 7
        %v2509 = vsub.s32 2, %v2508
        %v2510 = vrot.slane %v511, %v2509
        %vm2511 = vcmask 523264
        %v2513 = vsel %vm2511, %v2498, 0
        %2515 = vmatprep.subr.mxu0 0.0
        %2516 = vmatpush1.msra.mxu0 0.0
        %2517 = vmatprep.subr.mxu0 0.0
        %2518 = vmatpush1.msra.mxu0 0.0
        %2519 = vmatprep.subr.mxu0 0.0
        %2520 = vmatpush1.msra.mxu0 0.0
        %2521 = vmatprep.subr.mxu0 0.0
        %2522 = vmatpush1.msra.mxu0 0.0
        %2523 = vmatprep.subr.mxu0 0.0
        %2524 = vmatpush1.msra.mxu0 0.0
        %2525 = vmatprep.subr.mxu0 0.0
        %2526 = vmatpush1.msra.mxu0 0.0
        %2527 = vmatprep.subr.mxu0 0.0
        %2528 = vmatpush1.msra.mxu0 0.0
        %2529 = vmatprep.subr.mxu0 0.0
        %2530 = vmatpush1.msra.mxu0 0.0
        %2531 = vmatprep.subr.mxu0 0.0
        %2532 = vmatpush1.msra.mxu0 %v2506
        %2533 = vmatprep.subr.mxu0 0.0
        %2534 = vmatpush1.msra.mxu0 %v2505
        %2535 = vmatprep.subr.mxu0 0.0
        %2536 = vmatpush1.msra.mxu0 %v2504
        %2537 = vmatprep.subr.mxu0 0.0
        %2538 = vmatpush1.msra.mxu0 %v2503
        %2539 = vmatprep.subr.mxu0 0.0
        %2540 = vmatpush1.msra.mxu0 %v2502
        %2541 = vmatprep.subr.mxu0 0.0
        %2542 = vmatpush1.msra.mxu0 %v2501
        %2543 = vmatprep.subr.mxu0 0.0
        %2544 = vmatpush1.msra.mxu0 %v2500
        %2545 = vmatprep.subr.mxu0 0.0
        %2546 = vmatpush1.msra.mxu0 %v2499
        %2547 = vmatprep.subr.mxu0 0.0
        %2548 = vmatpush2.msra.mxu0 0.0
        %2549 = vmatprep.subr.mxu0 0.0
        %2550 = vmatpush2.msra.mxu0 0.0
        %2551 = vmatprep.subr.mxu0 0.0
        %2552 = vmatpush2.msra.mxu0 0.0
        %2553 = vmatprep.subr.mxu0 0.0
        %2554 = vmatpush2.msra.mxu0 0.0
        %2555 = vmatprep.subr.mxu0 0.0
        %2556 = vmatpush2.msra.mxu0 0.0
        %2557 = vmatprep.subr.mxu0 0.0
        %2558 = vmatpush2.msra.mxu0 0.0
        %2559 = vmatprep.subr.mxu0 0.0
        %2560 = vmatpush2.msra.mxu0 0.0
        %2561 = vmatprep.subr.mxu0 0.0
        %2562 = vmatpush2.msra.mxu0 0.0
        %2563 = vmatprep.subr.mxu0 0.0
        %2564 = vmatpush2.msra.mxu0 0.0
        %2565 = vmatprep.subr.mxu0 0.0
        %2566 = vmatpush2.msra.mxu0 0.0
        %2567 = vmatprep.subr.mxu0 0.0
        %2568 = vmatpush2.msra.mxu0 0.0
        %2569 = vmatprep.subr.mxu0 0.0
        %2570 = vmatpush2.msra.mxu0 0.0
        %2571 = vmatprep.subr.mxu0 0.0
        %2572 = vmatpush2.msra.mxu0 0.0
        %2573 = vmatprep.subr.mxu0 0.0
        %2574 = vmatpush2.msra.mxu0 0.0
        %2575 = vmatprep.subr.mxu0 0.0
        %2576 = vmatpush2.msra.mxu0 0.0
        %2577 = vmatprep.subr.mxu0 0.0
        %2578 = vmatpush2.msra.mxu0 0.0
        %2579 = vmatprep.mubr.f32.mxu0 0.0
        %2580 = vmatmul.mubr.f32.gmra.mxu0 %v2513
        %v2581 = vpop.f32.mrf.mxu0
        %v2582 = vadd.f32 %v2510, %v2581
        %v2583 = vpop.f32.mrf.mxu0
        %2584 = vdwg.mxu0
        %v2585 = vadd.f32 %v2413, %v2582
        %v2586 = vsel %vm523, %v2585, 0.0
        %2587 = vadd.xlane.f32.xlu0 %v2586
        %v2588 = vpop.xlane.xlu0 %2587
        %v2589 = vmul.f32 %v2588, %v1446
        %v2590 = vsub.f32 %v2585, %v2589
        %v2591 = vmul.f32 %v2590, %v2590
        %v2592 = vsel %vm523, %v2591, 0.0
        %2593 = vadd.xlane.f32.xlu0 %v2592
        %v2594 = vpop.xlane.xlu0 %2593
        %v2595 = vmul.f32 %v2594, %v1446
        %v2596 = vadd.f32 %v2595, 1e-05
        %v2597 = vrsqrt.pop %v2596
        %v2598 = vmul.f32 %v2590, %v2597
        %v2599 = vmul.f32 %v2598, %v1460
        %v2600 = vadd.f32 %v2599, %v1465
        %2601 = vst.msk [vmem:[%s485] sm:$0xff] %vm523, %v2600
        %2602 = vst.msk [vmem:[%s492] sm:$0xff] %vm695, %v1993
        %2603 = vst.msk [vmem:[%s492 + $0x8] sm:$0xff] %vm695, %v1994
        %2604 = vst.msk [vmem:[%s492 + $0x10] sm:$0xff] %vm695, %v1995
        %2605 = vst.msk [vmem:[%s492 + $0x18] sm:$0xff] %vm695, %v1996
        %s2606 = sand.u32 %s322, 1
        %s2607 = scalar_lea.sflag [#allocation3], %s2606
        %s2608 = sand.u32 %s322, 1
        %s2609 = smul.addr %s2608, 8
        %s2610 = scalar_lea.vmem [#allocation2], %s2609
        %s2611 = sand.u32 %s350, 1
        %s2612 = scalar_lea.sflag [#allocation5], %s2611
        %s2613 = sand.u32 %s350, 1
        %s2614 = smul.addr %s2613, 32
        %s2615 = scalar_lea.vmem [#allocation4], %s2614
        // Predicated region
        $region69: #{decoder_layer.1} parent=67 // pred_check
          %p2616 = pneg %p332
        $region70: #{decoder_layer.1} parent=67 // pred_check_branch
          %2618 = sbr.rel (%p2616) target = $region72
        $region71: #{decoder_layer.1} parent=67 // pred_region
          %s2620 = ssub.s32 128, 128
          %2621 = vsyncadd %s2607, %s2620
          %s2622 = sadd.s32 %s36, %s35
          %s2623 = smul.addr %s2622, 128
          %s2624 = scalar_lea.hbm %s12, %s2623
          %s2626 = sshll.u32 %s2610, 4
          %s2627 = int_to_ptr.vmem [resolvable:$true] %s2626
          %2629 = dma.vmem_to_hbm [thread:$0]  %s2627, 128, %s2624, %s2607
        $region72: #{decoder_layer.1} parent=67 // pred_fallthru
          _
        // Predicated region
        $region73: #{decoder_layer.1} parent=67 // pred_check
          %p2630 = pneg %p360
        $region74: #{decoder_layer.1} parent=67 // pred_check_branch
          %2632 = sbr.rel (%p2630) target = $region76
        $region75: #{decoder_layer.1} parent=67 // pred_region
          %s2634 = ssub.s32 512, 512
          %2635 = vsyncadd %s2612, %s2634
          %s2636 = smul.addr %s35, 4
          %s2637 = sadd.s32 %s36, %s2636
          %s2638 = smul.addr %s2637, 128
          %s2639 = scalar_lea.hbm %s13, %s2638
          %s2640 = sshll.u32 %s2615, 4
          %s2641 = int_to_ptr.vmem [resolvable:$true] %s2640
          %2646 = dma.vmem_to_hbm [thread:$0]  %s2641, 512, %s2639, %s2612, 128, 128, 8
        $region76: #{decoder_layer.1} parent=67 // pred_fallthru
          _
      $region68: #{decoder_layer.1} parent=5 // pred_fallthru
        _
      %p2647 = scmp.le.s32.totalorder 2, %s26
      // Predicated region
      $region77: #{decoder_layer.1} parent=5 // pred_check
        %p2648 = pneg %p2647
      $region78: #{decoder_layer.1} parent=5 // pred_check_branch
        %2650 = sbr.rel (%p2648) target = $region80
      $region79: #{decoder_layer.1} parent=5 // pred_region
        %s2651 = ssub.s32 %s26, 2
        // Predicated region
        $region81: #{decoder_layer.1} parent=79 // pred_check
          %p2652 = pneg %p338
        $region82: #{decoder_layer.1} parent=79 // pred_check_branch
          %2654 = sbr.rel (%p2652) target = $region84
        $region83: #{decoder_layer.1} parent=79 // pred_region
          %s2655 = sand.u32 %s323, 1
          %s2656 = scalar_lea.sflag [#allocation3], %s2655
          %s2657 = sand.u32 %s323, 1
          %s2658 = smul.addr %s2657, 8
          %s2659 = scalar_lea.vmem [#allocation2], %s2658
          %2660 = dma.done %s2656, 128
        $region84: #{decoder_layer.1} parent=79 // pred_fallthru
          _
        // Predicated region
        $region85: #{decoder_layer.1} parent=79 // pred_check
          %p2661 = pneg %p366
        $region86: #{decoder_layer.1} parent=79 // pred_check_branch
          %2663 = sbr.rel (%p2661) target = $region88
        $region87: #{decoder_layer.1} parent=79 // pred_region
          %s2664 = sand.u32 %s351, 1
          %s2665 = scalar_lea.sflag [#allocation5], %s2664
          %s2666 = sand.u32 %s351, 1
          %s2667 = smul.addr %s2666, 32
          %s2668 = scalar_lea.vmem [#allocation4], %s2667
          %2669 = dma.done %s2665, 512
        $region88: #{decoder_layer.1} parent=79 // pred_fallthru
          _
      $region80: #{decoder_layer.1} parent=5 // pred_fallthru
        _
    $region6: #{decoder_layer.1} parent=1 // loop_footer
      %s30 = sadd.s32 1, %s26
    $region7: #{decoder_layer.1} parent=1 // loop_footer_branch
      %25 = sbr.rel target = $region3
    $region8: #{decoder_layer.1} parent=1 // loop_exit
      _
    %2670 = vsyncpa [#allocation3], 1
    %s2671 = scalar_lea.sflag [#allocation3], 1
    %2672 = vsyncpa %s2671, 1
    %2673 = vsyncpa [#allocation5], 1
    %s2674 = scalar_lea.sflag [#allocation5], 1
    %2675 = vsyncpa %s2674, 1

</llo_original>
